<compile_context>
chip_gen: v6e
topology: v6e:2x2x1
jax: 0.10.0
libtpu: 0.0.40
codegen_flags: <defaults>
</compile_context>

<pallas_src>
import math
from functools import partial

import jax
import jax.numpy as jnp
from jax.experimental import pallas as pl
from jax.experimental.pallas import tpu as pltpu


# vec row layout (packed per layer, all width-D vectors):
#   0-3  self-attn biases  (Q*scale, K, V, O)
#   4-7  cross-attn biases (Q*scale, K, V, O)
#   8    FFN second bias
#   9-11 LayerNorm gammas (LN1, LN2, LN3)
#   12-14 LayerNorm betas  (LN1, LN2, LN3)
_B_FF2, _LN_G, _LN_B = 8, 9, 12


def _decoder_kernel(num_heads, block_b, S, Se, num_layers, f_tile, compute_dtype,
                    x_ref, enc_ref, bias_ref, wqkv_ref, wo_ref,
                    w1_ref, w2_ref, b1_ref, vec_ref, o_ref, xres_ref):
    D = x_ref.shape[-1]
    H = num_heads
    d_k = D // H
    cdt = compute_dtype
    layer = pl.program_id(1)

    # Layer 0 of each batch block: load the activation slab into the resident
    # VMEM carry; later layers reuse it (no HBM round-trip between layers).
    @pl.when(layer == 0)
    def _():
        xres_ref[...] = x_ref[...]

    def mm(a, w):
        # MXU matmul: activations cast to compute dtype, weights pre-cast on
        # the host, f32 accumulation.
        return jnp.dot(a.astype(cdt), w, preferred_element_type=jnp.float32)

    def layer_norm(v, i):
        g = vec_ref[_LN_G + i:_LN_G + i + 1, :]
        b = vec_ref[_LN_B + i:_LN_B + i + 1, :]
        mu = jnp.mean(v, axis=-1, keepdims=True)
        var = jnp.mean(jnp.square(v - mu), axis=-1, keepdims=True)
        return (v - mu) * jax.lax.rsqrt(var + 1e-5) * g + b

    def mha(q_in, kv_in, Sq, Sk, a_idx, bias3):
        w_off, b_off = 3 * a_idx, 4 * a_idx
        # Full-width projections over all block rows at once (big MXU M/N).
        # 1/sqrt(d_k) is already folded into the Q weights + bias.
        Q = mm(q_in, wqkv_ref[w_off + 0]) + vec_ref[b_off + 0:b_off + 1, :]
        K = mm(kv_in, wqkv_ref[w_off + 1]) + vec_ref[b_off + 1:b_off + 2, :]
        V = mm(kv_in, wqkv_ref[w_off + 2]) + vec_ref[b_off + 2:b_off + 3, :]
        Wo = wo_ref[a_idx]                          # (H, d_k, D) head-blocked

        outs = []
        for b in range(block_b):                    # small static batch loop
            Qb = Q[b * Sq:(b + 1) * Sq]
            Kb = K[b * Sk:(b + 1) * Sk]
            Vb = V[b * Sk:(b + 1) * Sk]
            # TODO(synk): replace the per-head lane slices with a single
            #             pltpu.einshape("q(hd)->hqd") gather once validated.
            Qh = jnp.stack([Qb[:, h * d_k:(h + 1) * d_k] for h in range(H)], 0)
            Kh = jnp.stack([Kb[:, h * d_k:(h + 1) * d_k] for h in range(H)], 0)
            Vh = jnp.stack([Vb[:, h * d_k:(h + 1) * d_k] for h in range(H)], 0)

            s = jnp.einsum("hqd,hkd->hqk", Qh.astype(cdt), Kh.astype(cdt),
                           preferred_element_type=jnp.float32)      # (H,Sq,Sk)
            if bias3 is not None:
                s = s + bias3                       # additive mask (hoisted)
            m = jnp.max(s, axis=-1, keepdims=True)
            p = jnp.exp(s - m)
            inv = pl.reciprocal(jnp.sum(p, axis=-1, keepdims=True), approx=True)
            ctxh = jnp.einsum("hqk,hkd->hqd", (p * inv).astype(cdt),
                              Vh.astype(cdt),
                              preferred_element_type=jnp.float32)   # (H,Sq,d_k)

            # Head-blocked output projection: contract each head's context with
            # its (d_k, D) row-block of W_O and accumulate -> one lane-dense
            # (Sq, D) result; no narrow column scatter stores, no ctx scratch.
            ob = jnp.dot(ctxh[0].astype(cdt), Wo[0],
                         preferred_element_type=jnp.float32)
            for h in range(1, H):
                ob = ob + jnp.dot(ctxh[h].astype(cdt), Wo[h],
                                  preferred_element_type=jnp.float32)
            outs.append(ob)

        attn = outs[0] if block_b == 1 else jnp.concatenate(outs, axis=0)
        return attn + vec_ref[b_off + 3:b_off + 4, :]

    x = xres_ref[...]                               # (block_b*S, D) carried slab
    bias3 = bias_ref[...][None, :, :]               # hoisted out of the b loop

    # masked self-attention + residual + LN1
    x1 = layer_norm(mha(x, x, S, S, 0, bias3) + x, 0)
    # cross-attention (no mask) + residual + LN2
    x2 = layer_norm(mha(x1, enc_ref[...], S, Se, 1, None) + x1, 1)

    # FFN (Linear -> ReLU -> Linear), chunked over F to bound the h1 footprint.
    F = w1_ref.shape[-1]
    ff = None
    for f0 in range(0, F, f_tile):
        h1 = jnp.maximum(mm(x2, w1_ref[:, f0:f0 + f_tile])
                         + b1_ref[:, f0:f0 + f_tile], 0.0)
        part = mm(h1, w2_ref[f0:f0 + f_tile, :])
        ff = part if ff is None else ff + part
    x3 = layer_norm(ff + vec_ref[_B_FF2:_B_FF2 + 1, :] + x2, 2)

    xres_ref[...] = x3                              # carry to the next layer

    @pl.when(layer == num_layers - 1)
    def _():
        o_ref[...] = x3


def _pick_block_b(B, S, Se, target_rows=256):
    """Batch rows folded per grid step: feed the MXU ~256 rows (v6e/v7x MXU is
    256 wide) while keeping >=2 batch grid steps for megacore when that still
    leaves a reasonable M tile."""
    divs = [d for d in range(1, B + 1) if B % d == 0]
    aligned = [d for d in divs if (d * S) % 8 == 0 and (d * Se) % 8 == 0]
    if not aligned:
        # TODO(synk): pad S/Se up to a multiple of 8 on the host instead of
        #             collapsing to one grid step (leaves TC1 idle on v7x).
        return B
    cands = [d for d in aligned if d * S <= target_rows] or aligned[:1]
    block_b = cands[-1]
    for d in reversed(cands):
        if B // d >= 2 and d * S >= min(128, (B * S) // 2):
            block_b = d
            break
    return block_b


def _pick_f_tile(F, max_tile=512):
    """FFN hidden-dim chunk: full F when small, else a lane-aligned divisor."""
    if F <= max_tile:
        return F
    for t in range(max_tile, 127, -128):
        if F % t == 0:
            return t
    return F


def _vmem_limit_bytes(block_b, S, Se, D, F, H, weight_itemsize):
    """Scoped-VMEM request derived from the actual block sizes (+headroom),
    clamped below the chip's physical per-core capacity instead of hardcoding
    64 MiB (which is the *entire* v7x per-TC VMEM)."""
    d_k = D // H
    act = 4 * (2 * block_b * S * D          # x slab (double-buffered)
               + 2 * block_b * Se * D       # encoder slab (double-buffered)
               + 2 * block_b * S * D        # output slab (double-buffered)
               + block_b * S * D)           # resident layer-carry scratch
    w_layer = (6 * D * D + 2 * H * d_k * D + 2 * D * F) * weight_itemsize \
              + 4 * (F + 15 * D)
    need = act + 2 * w_layer + 2 * 4 * S * S   # dbl-buffered weights + mask
    try:
        cap = int(pltpu.get_tpu_info().vmem_capacity_bytes)
    except Exception:
        cap = 64 * 1024 * 1024                 # conservative default (v7x per-TC)
    limit = max(32 * 1024 * 1024, int(need * 1.5) + (4 << 20))
    return max(16 * 1024 * 1024, min(limit, int(cap * 0.85)))


def decoder_forward(x, encoder_output, tgt_mask, params, num_heads,
                    compute_dtype=jnp.float32):
    """Whole decoder stack in one fused pallas_call over a (batch-block, layer)
    grid; activations stay resident in VMEM across the layer axis."""
    B, S, D = x.shape
    Se = encoder_output.shape[1]
    L = len(params)
    H = num_heads
    d_k = D // H
    scale = 1.0 / math.sqrt(d_k)
    cdt = compute_dtype

    if tgt_mask is None:
        mask_bias = jnp.zeros((S, S), jnp.float32)
    else:
        mask_bias = jnp.where(tgt_mask == 0, jnp.float32(-1e30), jnp.float32(0.0))

    # ---- host-side param packing (per layer, stacked over L) ----
    wqkv_l, wo_l, w1_l, w2_l, b1_l, vec_l = [], [], [], [], [], []
    for p in params:
        ws, wc, bs, bc = p["w_self"], p["w_cross"], p["b_self"], p["b_cross"]
        # fold 1/sqrt(d_k) into the Q projection (weights + bias)
        wqkv = jnp.stack([ws[0] * scale, ws[1], ws[2],
                          wc[0] * scale, wc[1], wc[2]], axis=0)        # (6,D,D)
        wo = jnp.stack([ws[3].reshape(H, d_k, D),
                        wc[3].reshape(H, d_k, D)], axis=0)             # (2,H,dk,D)
        vec = jnp.concatenate([
            jnp.stack([bs[0] * scale, bs[1], bs[2], bs[3]], axis=0),
            jnp.stack([bc[0] * scale, bc[1], bc[2], bc[3]], axis=0),
            p["b2"], p["ln_g"], p["ln_b"]], axis=0)                    # (15,D)
        wqkv_l.append(wqkv.astype(cdt))            # matmul weights in compute dtype
        wo_l.append(wo.astype(cdt))
        w1_l.append(p["w1"].astype(cdt))
        w2_l.append(p["w2"].astype(cdt))
        b1_l.append(p["b1"].astype(jnp.float32))   # biases / LN params stay f32
        vec_l.append(vec.astype(jnp.float32))
    wqkv_all = jnp.stack(wqkv_l, 0)   # (L, 6, D, D)
    wo_all = jnp.stack(wo_l, 0)       # (L, 2, H, d_k, D)
    w1_all = jnp.stack(w1_l, 0)       # (L, D, F)
    w2_all = jnp.stack(w2_l, 0)       # (L, F, D)
    b1_all = jnp.stack(b1_l, 0)       # (L, 1, F)
    vec_all = jnp.stack(vec_l, 0)     # (L, 15, D)
    F = w1_all.shape[-1]

    block_b = _pick_block_b(B, S, Se)
    f_tile = _pick_f_tile(F)
    vmem_limit = _vmem_limit_bytes(block_b, S, Se, D, F, H,
                                   jnp.dtype(cdt).itemsize)

    x2d = x.reshape(B * S, D)
    enc2d = encoder_output.reshape(B * Se, D)

    kernel = partial(_decoder_kernel, H, block_b, S, Se, L, f_tile, cdt)

    in_specs = [
        pl.BlockSpec((block_b * S, D), lambda i, l: (i, 0)),      # x slab
        pl.BlockSpec((block_b * Se, D), lambda i, l: (i, 0)),     # encoder slab
        # TODO(synk): single-buffer this grid-invariant block with
        #             pipeline_mode=pl.Buffered(1) (or build the causal bias
        #             in-kernel with broadcasted_iota) for large S.
        pl.BlockSpec((S, S), lambda i, l: (0, 0)),                # mask bias
        pl.BlockSpec((None, 6, D, D), lambda i, l: (l, 0, 0, 0)),          # QKV W
        pl.BlockSpec((None, 2, H, d_k, D), lambda i, l: (l, 0, 0, 0, 0)),  # W_O
        pl.BlockSpec((None, D, F), lambda i, l: (l, 0, 0)),                # FFN W1
        pl.BlockSpec((None, F, D), lambda i, l: (l, 0, 0)),                # FFN W2
        pl.BlockSpec((None, 1, F), lambda i, l: (l, 0, 0)),                # FFN b1
        pl.BlockSpec((None, 15, D), lambda i, l: (l, 0, 0)),               # vec
    ]
    out_specs = pl.BlockSpec((block_b * S, D), lambda i, l: (i, 0))

    out = pl.pallas_call(
        kernel,
        out_shape=jax.ShapeDtypeStruct((B * S, D), jnp.float32),
        grid=(B // block_b, L),
        in_specs=in_specs,
        out_specs=out_specs,
        scratch_shapes=[pltpu.VMEM((block_b * S, D), jnp.float32)],  # layer carry
        compiler_params=pltpu.CompilerParams(
            dimension_semantics=("parallel", "arbitrary"),
            vmem_limit_bytes=vmem_limit),
    )(x2d, enc2d, mask_bias, wqkv_all, wo_all, w1_all, w2_all, b1_all, vec_all)
    return out.reshape(B, S, D)


def init_decoder_params(key, num_layers, model_dim, ff_dim):
    params = []
    for l in range(num_layers):
        keys = jax.random.split(jax.random.fold_in(key, l), 8)
        s = 0.05
        params.append(dict(
            w_self=jax.random.normal(keys[0], (4, model_dim, model_dim), jnp.float32) * s,
            b_self=jax.random.normal(keys[1], (4, model_dim), jnp.float32) * s,
            w_cross=jax.random.normal(keys[2], (4, model_dim, model_dim), jnp.float32) * s,
            b_cross=jax.random.normal(keys[3], (4, model_dim), jnp.float32) * s,
            w1=jax.random.normal(keys[4], (model_dim, ff_dim), jnp.float32) * s,
            b1=jax.random.normal(keys[5], (1, ff_dim), jnp.float32) * s,
            w2=jax.random.normal(keys[6], (ff_dim, model_dim), jnp.float32) * s,
            b2=jax.random.normal(keys[7], (1, model_dim), jnp.float32) * s,
            ln_g=jnp.ones((3, model_dim), jnp.float32),
            ln_b=jnp.zeros((3, model_dim), jnp.float32),
        ))
    return params


# ---------------- pure-JAX reference (same param layout) ----------------
def _ref_layer(x, enc, mask, p, num_heads):
    D = x.shape[-1]
    d_k = D // num_heads

    def ln(v, g, b):
        mu = v.mean(-1, keepdims=True)
        var = ((v - mu) ** 2).mean(-1, keepdims=True)
        return (v - mu) / jnp.sqrt(var + 1e-5) * g + b

    def mha(q_in, kv_in, W, b, use_mask):
        Q = q_in @ W[0] + b[0]
        K = kv_in @ W[1] + b[1]
        V = kv_in @ W[2] + b[2]
        B_, Sq, _ = Q.shape
        Sk = K.shape[1]
        Qh = Q.reshape(B_, Sq, num_heads, d_k).transpose(0, 2, 1, 3)
        Kh = K.reshape(B_, Sk, num_heads, d_k).transpose(0, 2, 1, 3)
        Vh = V.reshape(B_, Sk, num_heads, d_k).transpose(0, 2, 1, 3)
        s = jnp.einsum("bhqd,bhkd->bhqk", Qh, Kh) / math.sqrt(d_k)
        if use_mask:
            s = jnp.where(mask[None, None] == 0.0, -1e30, s)
        a = jax.nn.softmax(s, axis=-1)
        o = jnp.einsum("bhqk,bhkd->bhqd", a, Vh).transpose(0, 2, 1, 3).reshape(B_, Sq, D)
        return o @ W[3] + b[3]

    x1 = ln(mha(x, x, p["w_self"], p["b_self"], True) + x, p["ln_g"][0], p["ln_b"][0])
    x2 = ln(mha(x1, enc, p["w_cross"], p["b_cross"], False) + x1, p["ln_g"][1], p["ln_b"][1])
    ff = jnp.maximum(x2 @ p["w1"] + p["b1"], 0.0) @ p["w2"] + p["b2"]
    return ln(ff + x2, p["ln_g"][2], p["ln_b"][2])


def _ref_decoder(x, enc, mask, params, num_heads):
    for p in params:
        x = _ref_layer(x, enc, mask, p, num_heads)
    return x


if __name__ == "__main__":
    B, S, Se, D, H, F, L = 2, 8, 8, 32, 4, 64, 2

    key = jax.random.PRNGKey(0)
    kx, ke = jax.random.split(key)
    x = jax.random.normal(kx, (B, S, D), jnp.float32)
    enc_out = jax.random.normal(ke, (B, Se, D), jnp.float32)
    tgt_mask = jnp.tril(jnp.ones((S, S), jnp.float32))   # causal mask (1 = keep)

    params = init_decoder_params(jax.random.PRNGKey(42), L, D, F)

    out = decoder_forward(x, enc_out, tgt_mask, params, H)
    out = jax.block_until_ready(out)

    ref = _ref_decoder(x, enc_out, tgt_mask, params, H)
    assert out.shape == (B, S, D)
    # tolerance accounts for the EUP approximate reciprocal in the softmax
    assert jnp.allclose(out, ref, atol=1e-2, rtol=1e-2), "mismatch vs JAX reference"

    print("KERNEL_OK")
</pallas_src>

<mosaic_0001>
module attributes {stable_mosaic.version = 11 : i64} {
  func.func @_decoder_kernel(%arg0: i32, %arg1: i32, %arg2: memref<8x32xf32, #tpu.memory_space<vmem>>, %arg3: memref<8x32xf32, #tpu.memory_space<vmem>>, %arg4: memref<8x8xf32, #tpu.memory_space<vmem>>, %arg5: memref<1x6x32x32xf32, #tpu.memory_space<vmem>>, %arg6: memref<1x2x4x8x32xf32, #tpu.memory_space<vmem>>, %arg7: memref<1x32x64xf32, #tpu.memory_space<vmem>>, %arg8: memref<1x64x32xf32, #tpu.memory_space<vmem>>, %arg9: memref<1x1x64xf32, #tpu.memory_space<vmem>>, %arg10: memref<1x15x32xf32, #tpu.memory_space<vmem>>, %arg11: memref<8x32xf32, #tpu.memory_space<vmem>>, %arg12: memref<8x32xf32, #tpu.memory_space<vmem>>) attributes {dimension_semantics = [#tpu.dimension_semantics<parallel>, #tpu.dimension_semantics<arbitrary>], iteration_bounds = array<i64: 2, 2>, scalar_prefetch = 0 : i64, scratch_operands = 1 : i64, tpu.core_type = #tpu.core_type<tc>, window_params = [{transform_indices = @transform_0, window_bounds = array<i64: 8, 32>}, {transform_indices = @transform_1, window_bounds = array<i64: 8, 32>}, {pipeline_mode = #tpu.pipeline_mode<synchronous>, transform_indices = @transform_2, window_bounds = array<i64: 8, 8>}, {transform_indices = @transform_3, window_bounds = array<i64: 1, 6, 32, 32>}, {transform_indices = @transform_4, window_bounds = array<i64: 1, 2, 4, 8, 32>}, {transform_indices = @transform_5, window_bounds = array<i64: 1, 32, 64>}, {transform_indices = @transform_6, window_bounds = array<i64: 1, 64, 32>}, {transform_indices = @transform_7, window_bounds = array<i64: 1, 1, 64>}, {transform_indices = @transform_8, window_bounds = array<i64: 1, 15, 32>}, {transform_indices = @transform_9, window_bounds = array<i64: 8, 32>}]} {
    %c0_i32 = arith.constant 0 : i32
    %0 = arith.cmpi eq, %arg1, %c0_i32 : i32
    %1 = arith.extui %0 : i1 to i32
    %c0_i32_0 = arith.constant 0 : i32
    %2 = arith.cmpi ne, %1, %c0_i32_0 : i32
    scf.if %2 {
      %c0_122 = arith.constant 0 : index
      %c0_123 = arith.constant 0 : index
      %288 = vector.load %arg2[%c0_122, %c0_123] : memref<8x32xf32, #tpu.memory_space<vmem>>, vector<8x32xf32>
      %c0_124 = arith.constant 0 : index
      %c0_125 = arith.constant 0 : index
      %289 = vector.load %arg12[%c0_124, %c0_125] : memref<8x32xf32, #tpu.memory_space<vmem>>, vector<8x32xf32>
      tpu.vector_store %arg12[%c0_124, %c0_125], %288 {strides = array<i32>} : memref<8x32xf32, #tpu.memory_space<vmem>>, vector<8x32xf32>,
    } else {
    }
    %c0 = arith.constant 0 : index
    %c0_1 = arith.constant 0 : index
    %3 = vector.load %arg12[%c0, %c0_1] : memref<8x32xf32, #tpu.memory_space<vmem>>, vector<8x32xf32>
    %c0_2 = arith.constant 0 : index
    %c0_3 = arith.constant 0 : index
    %4 = vector.load %arg4[%c0_2, %c0_3] : memref<8x8xf32, #tpu.memory_space<vmem>>, vector<8x8xf32>
    %5 = vector.shape_cast %4 : vector<8x8xf32> to vector<1x8x8xf32>
    %c0_4 = arith.constant 0 : index
    %c0_5 = arith.constant 0 : index
    %c0_6 = arith.constant 0 : index
    %c0_7 = arith.constant 0 : index
    %6 = vector.load %arg5[%c0_4, %c0_5, %c0_6, %c0_7] : memref<1x6x32x32xf32, #tpu.memory_space<vmem>>, vector<1x1x32x32xf32>
    %7 = vector.shape_cast %6 : vector<1x1x32x32xf32> to vector<32x32xf32>
    %cst = arith.constant dense<0.000000e+00> : vector<8x32xf32>
    %8 = tpu.matmul %3, %7, %cst {dimension_numbers = #tpu.dot_dimension_numbers<[1], [0], [0], [1], [0, 0, 1, 1], [], []>} : vector<8x32xf32>, vector<32x32xf32>, vector<8x32xf32> -> vector<8x32xf32>
    %c0_8 = arith.constant 0 : index
    %c0_9 = arith.constant 0 : index
    %c0_10 = arith.constant 0 : index
    %9 = vector.load %arg10[%c0_8, %c0_9, %c0_10] : memref<1x15x32xf32, #tpu.memory_space<vmem>>, vector<1x1x32xf32>
    %10 = vector.shape_cast %9 : vector<1x1x32xf32> to vector<1x32xf32>
    %11 = vector.broadcast %10 : vector<1x32xf32> to vector<8x32xf32>
    %12 = arith.addf %8, %11 : vector<8x32xf32>
    %c0_11 = arith.constant 0 : index
    %c1 = arith.constant 1 : index
    %c0_12 = arith.constant 0 : index
    %c0_13 = arith.constant 0 : index
    %13 = vector.load %arg5[%c0_11, %c1, %c0_12, %c0_13] : memref<1x6x32x32xf32, #tpu.memory_space<vmem>>, vector<1x1x32x32xf32>
    %14 = vector.shape_cast %13 : vector<1x1x32x32xf32> to vector<32x32xf32>
    %cst_14 = arith.constant dense<0.000000e+00> : vector<8x32xf32>
    %15 = tpu.matmul %3, %14, %cst_14 {dimension_numbers = #tpu.dot_dimension_numbers<[1], [0], [0], [1], [0, 0, 1, 1], [], []>} : vector<8x32xf32>, vector<32x32xf32>, vector<8x32xf32> -> vector<8x32xf32>
    %c0_15 = arith.constant 0 : index
    %c1_16 = arith.constant 1 : index
    %c0_17 = arith.constant 0 : index
    %16 = vector.load %arg10[%c0_15, %c1_16, %c0_17] : memref<1x15x32xf32, #tpu.memory_space<vmem>>, vector<1x1x32xf32>
    %17 = vector.shape_cast %16 : vector<1x1x32xf32> to vector<1x32xf32>
    %18 = vector.broadcast %17 : vector<1x32xf32> to vector<8x32xf32>
    %19 = arith.addf %15, %18 : vector<8x32xf32>
    %c0_18 = arith.constant 0 : index
    %c2 = arith.constant 2 : index
    %c0_19 = arith.constant 0 : index
    %c0_20 = arith.constant 0 : index
    %20 = vector.load %arg5[%c0_18, %c2, %c0_19, %c0_20] : memref<1x6x32x32xf32, #tpu.memory_space<vmem>>, vector<1x1x32x32xf32>
    %21 = vector.shape_cast %20 : vector<1x1x32x32xf32> to vector<32x32xf32>
    %cst_21 = arith.constant dense<0.000000e+00> : vector<8x32xf32>
    %22 = tpu.matmul %3, %21, %cst_21 {dimension_numbers = #tpu.dot_dimension_numbers<[1], [0], [0], [1], [0, 0, 1, 1], [], []>} : vector<8x32xf32>, vector<32x32xf32>, vector<8x32xf32> -> vector<8x32xf32>
    %c0_22 = arith.constant 0 : index
    %c2_23 = arith.constant 2 : index
    %c0_24 = arith.constant 0 : index
    %23 = vector.load %arg10[%c0_22, %c2_23, %c0_24] : memref<1x15x32xf32, #tpu.memory_space<vmem>>, vector<1x1x32xf32>
    %24 = vector.shape_cast %23 : vector<1x1x32xf32> to vector<1x32xf32>
    %25 = vector.broadcast %24 : vector<1x32xf32> to vector<8x32xf32>
    %26 = arith.addf %22, %25 : vector<8x32xf32>
    %c0_25 = arith.constant 0 : index
    %c0_26 = arith.constant 0 : index
    %c0_27 = arith.constant 0 : index
    %c0_28 = arith.constant 0 : index
    %c0_29 = arith.constant 0 : index
    %27 = vector.load %arg6[%c0_25, %c0_26, %c0_27, %c0_28, %c0_29] : memref<1x2x4x8x32xf32, #tpu.memory_space<vmem>>, vector<1x1x4x8x32xf32>
    %28 = vector.shape_cast %27 : vector<1x1x4x8x32xf32> to vector<4x8x32xf32>
    %29 = vector.extract_strided_slice %12 {offsets = [0, 0], sizes = [8, 8], strides = [1, 1]} : vector<8x32xf32> to vector<8x8xf32>
    %30 = vector.extract_strided_slice %12 {offsets = [0, 8], sizes = [8, 8], strides = [1, 1]} : vector<8x32xf32> to vector<8x8xf32>
    %31 = vector.extract_strided_slice %12 {offsets = [0, 16], sizes = [8, 8], strides = [1, 1]} : vector<8x32xf32> to vector<8x8xf32>
    %32 = vector.extract_strided_slice %12 {offsets = [0, 24], sizes = [8, 8], strides = [1, 1]} : vector<8x32xf32> to vector<8x8xf32>
    %33 = vector.shape_cast %29 : vector<8x8xf32> to vector<1x8x8xf32>
    %34 = vector.shape_cast %30 : vector<8x8xf32> to vector<1x8x8xf32>
    %35 = vector.shape_cast %31 : vector<8x8xf32> to vector<1x8x8xf32>
    %36 = vector.shape_cast %32 : vector<8x8xf32> to vector<1x8x8xf32>
    %37 = tpu.concatenate %33, %34, %35, %36 in 0 : vector<1x8x8xf32>, vector<1x8x8xf32>, vector<1x8x8xf32>, vector<1x8x8xf32> -> vector<4x8x8xf32>
    %38 = vector.extract_strided_slice %19 {offsets = [0, 0], sizes = [8, 8], strides = [1, 1]} : vector<8x32xf32> to vector<8x8xf32>
    %39 = vector.extract_strided_slice %19 {offsets = [0, 8], sizes = [8, 8], strides = [1, 1]} : vector<8x32xf32> to vector<8x8xf32>
    %40 = vector.extract_strided_slice %19 {offsets = [0, 16], sizes = [8, 8], strides = [1, 1]} : vector<8x32xf32> to vector<8x8xf32>
    %41 = vector.extract_strided_slice %19 {offsets = [0, 24], sizes = [8, 8], strides = [1, 1]} : vector<8x32xf32> to vector<8x8xf32>
    %42 = vector.shape_cast %38 : vector<8x8xf32> to vector<1x8x8xf32>
    %43 = vector.shape_cast %39 : vector<8x8xf32> to vector<1x8x8xf32>
    %44 = vector.shape_cast %40 : vector<8x8xf32> to vector<1x8x8xf32>
    %45 = vector.shape_cast %41 : vector<8x8xf32> to vector<1x8x8xf32>
    %46 = tpu.concatenate %42, %43, %44, %45 in 0 : vector<1x8x8xf32>, vector<1x8x8xf32>, vector<1x8x8xf32>, vector<1x8x8xf32> -> vector<4x8x8xf32>
    %47 = vector.extract_strided_slice %26 {offsets = [0, 0], sizes = [8, 8], strides = [1, 1]} : vector<8x32xf32> to vector<8x8xf32>
    %48 = vector.extract_strided_slice %26 {offsets = [0, 8], sizes = [8, 8], strides = [1, 1]} : vector<8x32xf32> to vector<8x8xf32>
    %49 = vector.extract_strided_slice %26 {offsets = [0, 16], sizes = [8, 8], strides = [1, 1]} : vector<8x32xf32> to vector<8x8xf32>
    %50 = vector.extract_strided_slice %26 {offsets = [0, 24], sizes = [8, 8], strides = [1, 1]} : vector<8x32xf32> to vector<8x8xf32>
    %51 = vector.shape_cast %47 : vector<8x8xf32> to vector<1x8x8xf32>
    %52 = vector.shape_cast %48 : vector<8x8xf32> to vector<1x8x8xf32>
    %53 = vector.shape_cast %49 : vector<8x8xf32> to vector<1x8x8xf32>
    %54 = vector.shape_cast %50 : vector<8x8xf32> to vector<1x8x8xf32>
    %55 = tpu.concatenate %51, %52, %53, %54 in 0 : vector<1x8x8xf32>, vector<1x8x8xf32>, vector<1x8x8xf32>, vector<1x8x8xf32> -> vector<4x8x8xf32>
    "tpu.trace_start"() <{level = 10 : i32, message = "hqd,hkd->hqk"}> : () -> ()
    %cst_30 = arith.constant dense<0.000000e+00> : vector<4x8x8xf32>
    %56 = tpu.matmul %37, %46, %cst_30 {dimension_numbers = #tpu.dot_dimension_numbers<[2], [2], [1], [1], [0, 0, 0, 1, 1, 1], [0], [0]>} : vector<4x8x8xf32>, vector<4x8x8xf32>, vector<4x8x8xf32> -> vector<4x8x8xf32>
    "tpu.trace_stop"() : () -> ()
    %57 = vector.broadcast %5 : vector<1x8x8xf32> to vector<4x8x8xf32>
    %58 = arith.addf %56, %57 : vector<4x8x8xf32>
    %cst_31 = arith.constant dense<0xFF800000> : vector<4x8xf32>
    %59 = vector.multi_reduction <maximumf>, %58, %cst_31 [2] : vector<4x8x8xf32> to vector<4x8xf32>
    %60 = vector.shape_cast %59 : vector<4x8xf32> to vector<4x8x1xf32>
    %61 = vector.broadcast %60 : vector<4x8x1xf32> to vector<4x8x8xf32>
    %62 = arith.subf %58, %61 : vector<4x8x8xf32>
    %63 = math.exp %62 : vector<4x8x8xf32>
    %cst_32 = arith.constant dense<0.000000e+00> : vector<4x8xf32>
    %64 = vector.multi_reduction <add>, %63, %cst_32 [2] : vector<4x8x8xf32> to vector<4x8xf32>
    %65 = vector.shape_cast %64 : vector<4x8xf32> to vector<4x8x1xf32>
    %66 = tpu.reciprocal %65 {approx = true} : vector<4x8x1xf32> -> vector<4x8x1xf32>
    %67 = vector.broadcast %66 : vector<4x8x1xf32> to vector<4x8x8xf32>
    %68 = arith.mulf %63, %67 : vector<4x8x8xf32>
    "tpu.trace_start"() <{level = 10 : i32, message = "hqk,hkd->hqd"}> : () -> ()
    %cst_33 = arith.constant dense<0.000000e+00> : vector<4x8x8xf32>
    %69 = tpu.matmul %68, %55, %cst_33 {dimension_numbers = #tpu.dot_dimension_numbers<[2], [1], [1], [2], [0, 0, 0, 1, 1, 2], [0], [0]>} : vector<4x8x8xf32>, vector<4x8x8xf32>, vector<4x8x8xf32> -> vector<4x8x8xf32>
    "tpu.trace_stop"() : () -> ()
    %70 = vector.extract_strided_slice %69 {offsets = [0, 0, 0], sizes = [1, 8, 8], strides = [1, 1, 1]} : vector<4x8x8xf32> to vector<1x8x8xf32>
    %71 = vector.shape_cast %70 : vector<1x8x8xf32> to vector<8x8xf32>
    %72 = vector.extract_strided_slice %28 {offsets = [0, 0, 0], sizes = [1, 8, 32], strides = [1, 1, 1]} : vector<4x8x32xf32> to vector<1x8x32xf32>
    %73 = vector.shape_cast %72 : vector<1x8x32xf32> to vector<8x32xf32>
    %cst_34 = arith.constant dense<0.000000e+00> : vector<8x32xf32>
    %74 = tpu.matmul %71, %73, %cst_34 {dimension_numbers = #tpu.dot_dimension_numbers<[1], [0], [0], [1], [0, 0, 1, 1], [], []>} : vector<8x8xf32>, vector<8x32xf32>, vector<8x32xf32> -> vector<8x32xf32>
    %75 = vector.extract_strided_slice %69 {offsets = [1, 0, 0], sizes = [1, 8, 8], strides = [1, 1, 1]} : vector<4x8x8xf32> to vector<1x8x8xf32>
    %76 = vector.shape_cast %75 : vector<1x8x8xf32> to vector<8x8xf32>
    %77 = vector.extract_strided_slice %28 {offsets = [1, 0, 0], sizes = [1, 8, 32], strides = [1, 1, 1]} : vector<4x8x32xf32> to vector<1x8x32xf32>
    %78 = vector.shape_cast %77 : vector<1x8x32xf32> to vector<8x32xf32>
    %cst_35 = arith.constant dense<0.000000e+00> : vector<8x32xf32>
    %79 = tpu.matmul %76, %78, %cst_35 {dimension_numbers = #tpu.dot_dimension_numbers<[1], [0], [0], [1], [0, 0, 1, 1], [], []>} : vector<8x8xf32>, vector<8x32xf32>, vector<8x32xf32> -> vector<8x32xf32>
    %80 = arith.addf %74, %79 : vector<8x32xf32>
    %81 = vector.extract_strided_slice %69 {offsets = [2, 0, 0], sizes = [1, 8, 8], strides = [1, 1, 1]} : vector<4x8x8xf32> to vector<1x8x8xf32>
    %82 = vector.shape_cast %81 : vector<1x8x8xf32> to vector<8x8xf32>
    %83 = vector.extract_strided_slice %28 {offsets = [2, 0, 0], sizes = [1, 8, 32], strides = [1, 1, 1]} : vector<4x8x32xf32> to vector<1x8x32xf32>
    %84 = vector.shape_cast %83 : vector<1x8x32xf32> to vector<8x32xf32>
    %cst_36 = arith.constant dense<0.000000e+00> : vector<8x32xf32>
    %85 = tpu.matmul %82, %84, %cst_36 {dimension_numbers = #tpu.dot_dimension_numbers<[1], [0], [0], [1], [0, 0, 1, 1], [], []>} : vector<8x8xf32>, vector<8x32xf32>, vector<8x32xf32> -> vector<8x32xf32>
    %86 = arith.addf %80, %85 : vector<8x32xf32>
    %87 = vector.extract_strided_slice %69 {offsets = [3, 0, 0], sizes = [1, 8, 8], strides = [1, 1, 1]} : vector<4x8x8xf32> to vector<1x8x8xf32>
    %88 = vector.shape_cast %87 : vector<1x8x8xf32> to vector<8x8xf32>
    %89 = vector.extract_strided_slice %28 {offsets = [3, 0, 0], sizes = [1, 8, 32], strides = [1, 1, 1]} : vector<4x8x32xf32> to vector<1x8x32xf32>
    %90 = vector.shape_cast %89 : vector<1x8x32xf32> to vector<8x32xf32>
    %cst_37 = arith.constant dense<0.000000e+00> : vector<8x32xf32>
    %91 = tpu.matmul %88, %90, %cst_37 {dimension_numbers = #tpu.dot_dimension_numbers<[1], [0], [0], [1], [0, 0, 1, 1], [], []>} : vector<8x8xf32>, vector<8x32xf32>, vector<8x32xf32> -> vector<8x32xf32>
    %92 = arith.addf %86, %91 : vector<8x32xf32>
    %c0_38 = arith.constant 0 : index
    %c3 = arith.constant 3 : index
    %c0_39 = arith.constant 0 : index
    %93 = vector.load %arg10[%c0_38, %c3, %c0_39] : memref<1x15x32xf32, #tpu.memory_space<vmem>>, vector<1x1x32xf32>
    %94 = vector.shape_cast %93 : vector<1x1x32xf32> to vector<1x32xf32>
    %95 = vector.broadcast %94 : vector<1x32xf32> to vector<8x32xf32>
    %96 = arith.addf %92, %95 : vector<8x32xf32>
    %97 = arith.addf %96, %3 : vector<8x32xf32>
    %c0_40 = arith.constant 0 : index
    %c9 = arith.constant 9 : index
    %c0_41 = arith.constant 0 : index
    %98 = vector.load %arg10[%c0_40, %c9, %c0_41] : memref<1x15x32xf32, #tpu.memory_space<vmem>>, vector<1x1x32xf32>
    %99 = vector.shape_cast %98 : vector<1x1x32xf32> to vector<1x32xf32>
    %c0_42 = arith.constant 0 : index
    %c12 = arith.constant 12 : index
    %c0_43 = arith.constant 0 : index
    %100 = vector.load %arg10[%c0_42, %c12, %c0_43] : memref<1x15x32xf32, #tpu.memory_space<vmem>>, vector<1x1x32xf32>
    %101 = vector.shape_cast %100 : vector<1x1x32xf32> to vector<1x32xf32>
    %cst_44 = arith.constant dense<0.000000e+00> : vector<8xf32>
    %102 = vector.multi_reduction <add>, %97, %cst_44 [1] : vector<8x32xf32> to vector<8xf32>
    %103 = vector.shape_cast %102 : vector<8xf32> to vector<8x1xf32>
    %cst_45 = arith.constant 3.200000e+01 : f32
    %104 = vector.broadcast %cst_45 : f32 to vector<8x1xf32>
    %105 = arith.divf %103, %104 : vector<8x1xf32>
    %106 = vector.broadcast %105 : vector<8x1xf32> to vector<8x32xf32>
    %107 = arith.subf %97, %106 : vector<8x32xf32>
    %108 = arith.mulf %107, %107 : vector<8x32xf32>
    %cst_46 = arith.constant dense<0.000000e+00> : vector<8xf32>
    %109 = vector.multi_reduction <add>, %108, %cst_46 [1] : vector<8x32xf32> to vector<8xf32>
    %110 = vector.shape_cast %109 : vector<8xf32> to vector<8x1xf32>
    %cst_47 = arith.constant 3.200000e+01 : f32
    %111 = vector.broadcast %cst_47 : f32 to vector<8x1xf32>
    %112 = arith.divf %110, %111 : vector<8x1xf32>
    %113 = vector.broadcast %105 : vector<8x1xf32> to vector<8x32xf32>
    %114 = arith.subf %97, %113 : vector<8x32xf32>
    %cst_48 = arith.constant 9.99999974E-6 : f32
    %115 = vector.broadcast %cst_48 : f32 to vector<8x1xf32>
    %116 = arith.addf %112, %115 : vector<8x1xf32>
    %117 = math.rsqrt %116 : vector<8x1xf32>
    %118 = vector.broadcast %117 : vector<8x1xf32> to vector<8x32xf32>
    %119 = arith.mulf %114, %118 : vector<8x32xf32>
    %120 = vector.broadcast %99 : vector<1x32xf32> to vector<8x32xf32>
    %121 = arith.mulf %119, %120 : vector<8x32xf32>
    %122 = vector.broadcast %101 : vector<1x32xf32> to vector<8x32xf32>
    %123 = arith.addf %121, %122 : vector<8x32xf32>
    %c0_49 = arith.constant 0 : index
    %c0_50 = arith.constant 0 : index
    %124 = vector.load %arg3[%c0_49, %c0_50] : memref<8x32xf32, #tpu.memory_space<vmem>>, vector<8x32xf32>
    %c0_51 = arith.constant 0 : index
    %c3_52 = arith.constant 3 : index
    %c0_53 = arith.constant 0 : index
    %c0_54 = arith.constant 0 : index
    %125 = vector.load %arg5[%c0_51, %c3_52, %c0_53, %c0_54] : memref<1x6x32x32xf32, #tpu.memory_space<vmem>>, vector<1x1x32x32xf32>
    %126 = vector.shape_cast %125 : vector<1x1x32x32xf32> to vector<32x32xf32>
    %cst_55 = arith.constant dense<0.000000e+00> : vector<8x32xf32>
    %127 = tpu.matmul %123, %126, %cst_55 {dimension_numbers = #tpu.dot_dimension_numbers<[1], [0], [0], [1], [0, 0, 1, 1], [], []>} : vector<8x32xf32>, vector<32x32xf32>, vector<8x32xf32> -> vector<8x32xf32>
    %c0_56 = arith.constant 0 : index
    %c4 = arith.constant 4 : index
    %c0_57 = arith.constant 0 : index
    %128 = vector.load %arg10[%c0_56, %c4, %c0_57] : memref<1x15x32xf32, #tpu.memory_space<vmem>>, vector<1x1x32xf32>
    %129 = vector.shape_cast %128 : vector<1x1x32xf32> to vector<1x32xf32>
    %130 = vector.broadcast %129 : vector<1x32xf32> to vector<8x32xf32>
    %131 = arith.addf %127, %130 : vector<8x32xf32>
    %c0_58 = arith.constant 0 : index
    %c4_59 = arith.constant 4 : index
    %c0_60 = arith.constant 0 : index
    %c0_61 = arith.constant 0 : index
    %132 = vector.load %arg5[%c0_58, %c4_59, %c0_60, %c0_61] : memref<1x6x32x32xf32, #tpu.memory_space<vmem>>, vector<1x1x32x32xf32>
    %133 = vector.shape_cast %132 : vector<1x1x32x32xf32> to vector<32x32xf32>
    %cst_62 = arith.constant dense<0.000000e+00> : vector<8x32xf32>
    %134 = tpu.matmul %124, %133, %cst_62 {dimension_numbers = #tpu.dot_dimension_numbers<[1], [0], [0], [1], [0, 0, 1, 1], [], []>} : vector<8x32xf32>, vector<32x32xf32>, vector<8x32xf32> -> vector<8x32xf32>
    %c0_63 = arith.constant 0 : index
    %c5 = arith.constant 5 : index
    %c0_64 = arith.constant 0 : index
    %135 = vector.load %arg10[%c0_63, %c5, %c0_64] : memref<1x15x32xf32, #tpu.memory_space<vmem>>, vector<1x1x32xf32>
    %136 = vector.shape_cast %135 : vector<1x1x32xf32> to vector<1x32xf32>
    %137 = vector.broadcast %136 : vector<1x32xf32> to vector<8x32xf32>
    %138 = arith.addf %134, %137 : vector<8x32xf32>
    %c0_65 = arith.constant 0 : index
    %c5_66 = arith.constant 5 : index
    %c0_67 = arith.constant 0 : index
    %c0_68 = arith.constant 0 : index
    %139 = vector.load %arg5[%c0_65, %c5_66, %c0_67, %c0_68] : memref<1x6x32x32xf32, #tpu.memory_space<vmem>>, vector<1x1x32x32xf32>
    %140 = vector.shape_cast %139 : vector<1x1x32x32xf32> to vector<32x32xf32>
    %cst_69 = arith.constant dense<0.000000e+00> : vector<8x32xf32>
    %141 = tpu.matmul %124, %140, %cst_69 {dimension_numbers = #tpu.dot_dimension_numbers<[1], [0], [0], [1], [0, 0, 1, 1], [], []>} : vector<8x32xf32>, vector<32x32xf32>, vector<8x32xf32> -> vector<8x32xf32>
    %c0_70 = arith.constant 0 : index
    %c6 = arith.constant 6 : index
    %c0_71 = arith.constant 0 : index
    %142 = vector.load %arg10[%c0_70, %c6, %c0_71] : memref<1x15x32xf32, #tpu.memory_space<vmem>>, vector<1x1x32xf32>
    %143 = vector.shape_cast %142 : vector<1x1x32xf32> to vector<1x32xf32>
    %144 = vector.broadcast %143 : vector<1x32xf32> to vector<8x32xf32>
    %145 = arith.addf %141, %144 : vector<8x32xf32>
    %c0_72 = arith.constant 0 : index
    %c1_73 = arith.constant 1 : index
    %c0_74 = arith.constant 0 : index
    %c0_75 = arith.constant 0 : index
    %c0_76 = arith.constant 0 : index
    %146 = vector.load %arg6[%c0_72, %c1_73, %c0_74, %c0_75, %c0_76] : memref<1x2x4x8x32xf32, #tpu.memory_space<vmem>>, vector<1x1x4x8x32xf32>
    %147 = vector.shape_cast %146 : vector<1x1x4x8x32xf32> to vector<4x8x32xf32>
    %148 = vector.extract_strided_slice %131 {offsets = [0, 0], sizes = [8, 8], strides = [1, 1]} : vector<8x32xf32> to vector<8x8xf32>
    %149 = vector.extract_strided_slice %131 {offsets = [0, 8], sizes = [8, 8], strides = [1, 1]} : vector<8x32xf32> to vector<8x8xf32>
    %150 = vector.extract_strided_slice %131 {offsets = [0, 16], sizes = [8, 8], strides = [1, 1]} : vector<8x32xf32> to vector<8x8xf32>
    %151 = vector.extract_strided_slice %131 {offsets = [0, 24], sizes = [8, 8], strides = [1, 1]} : vector<8x32xf32> to vector<8x8xf32>
    %152 = vector.shape_cast %148 : vector<8x8xf32> to vector<1x8x8xf32>
    %153 = vector.shape_cast %149 : vector<8x8xf32> to vector<1x8x8xf32>
    %154 = vector.shape_cast %150 : vector<8x8xf32> to vector<1x8x8xf32>
    %155 = vector.shape_cast %151 : vector<8x8xf32> to vector<1x8x8xf32>
    %156 = tpu.concatenate %152, %153, %154, %155 in 0 : vector<1x8x8xf32>, vector<1x8x8xf32>, vector<1x8x8xf32>, vector<1x8x8xf32> -> vector<4x8x8xf32>
    %157 = vector.extract_strided_slice %138 {offsets = [0, 0], sizes = [8, 8], strides = [1, 1]} : vector<8x32xf32> to vector<8x8xf32>
    %158 = vector.extract_strided_slice %138 {offsets = [0, 8], sizes = [8, 8], strides = [1, 1]} : vector<8x32xf32> to vector<8x8xf32>
    %159 = vector.extract_strided_slice %138 {offsets = [0, 16], sizes = [8, 8], strides = [1, 1]} : vector<8x32xf32> to vector<8x8xf32>
    %160 = vector.extract_strided_slice %138 {offsets = [0, 24], sizes = [8, 8], strides = [1, 1]} : vector<8x32xf32> to vector<8x8xf32>
    %161 = vector.shape_cast %157 : vector<8x8xf32> to vector<1x8x8xf32>
    %162 = vector.shape_cast %158 : vector<8x8xf32> to vector<1x8x8xf32>
    %163 = vector.shape_cast %159 : vector<8x8xf32> to vector<1x8x8xf32>
    %164 = vector.shape_cast %160 : vector<8x8xf32> to vector<1x8x8xf32>
    %165 = tpu.concatenate %161, %162, %163, %164 in 0 : vector<1x8x8xf32>, vector<1x8x8xf32>, vector<1x8x8xf32>, vector<1x8x8xf32> -> vector<4x8x8xf32>
    %166 = vector.extract_strided_slice %145 {offsets = [0, 0], sizes = [8, 8], strides = [1, 1]} : vector<8x32xf32> to vector<8x8xf32>
    %167 = vector.extract_strided_slice %145 {offsets = [0, 8], sizes = [8, 8], strides = [1, 1]} : vector<8x32xf32> to vector<8x8xf32>
    %168 = vector.extract_strided_slice %145 {offsets = [0, 16], sizes = [8, 8], strides = [1, 1]} : vector<8x32xf32> to vector<8x8xf32>
    %169 = vector.extract_strided_slice %145 {offsets = [0, 24], sizes = [8, 8], strides = [1, 1]} : vector<8x32xf32> to vector<8x8xf32>
    %170 = vector.shape_cast %166 : vector<8x8xf32> to vector<1x8x8xf32>
    %171 = vector.shape_cast %167 : vector<8x8xf32> to vector<1x8x8xf32>
    %172 = vector.shape_cast %168 : vector<8x8xf32> to vector<1x8x8xf32>
    %173 = vector.shape_cast %169 : vector<8x8xf32> to vector<1x8x8xf32>
    %174 = tpu.concatenate %170, %171, %172, %173 in 0 : vector<1x8x8xf32>, vector<1x8x8xf32>, vector<1x8x8xf32>, vector<1x8x8xf32> -> vector<4x8x8xf32>
    "tpu.trace_start"() <{level = 10 : i32, message = "hqd,hkd->hqk"}> : () -> ()
    %cst_77 = arith.constant dense<0.000000e+00> : vector<4x8x8xf32>
    %175 = tpu.matmul %156, %165, %cst_77 {dimension_numbers = #tpu.dot_dimension_numbers<[2], [2], [1], [1], [0, 0, 0, 1, 1, 1], [0], [0]>} : vector<4x8x8xf32>, vector<4x8x8xf32>, vector<4x8x8xf32> -> vector<4x8x8xf32>
    "tpu.trace_stop"() : () -> ()
    %cst_78 = arith.constant dense<0xFF800000> : vector<4x8xf32>
    %176 = vector.multi_reduction <maximumf>, %175, %cst_78 [2] : vector<4x8x8xf32> to vector<4x8xf32>
    %177 = vector.shape_cast %176 : vector<4x8xf32> to vector<4x8x1xf32>
    %178 = vector.broadcast %177 : vector<4x8x1xf32> to vector<4x8x8xf32>
    %179 = arith.subf %175, %178 : vector<4x8x8xf32>
    %180 = math.exp %179 : vector<4x8x8xf32>
    %cst_79 = arith.constant dense<0.000000e+00> : vector<4x8xf32>
    %181 = vector.multi_reduction <add>, %180, %cst_79 [2] : vector<4x8x8xf32> to vector<4x8xf32>
    %182 = vector.shape_cast %181 : vector<4x8xf32> to vector<4x8x1xf32>
    %183 = tpu.reciprocal %182 {approx = true} : vector<4x8x1xf32> -> vector<4x8x1xf32>
    %184 = vector.broadcast %183 : vector<4x8x1xf32> to vector<4x8x8xf32>
    %185 = arith.mulf %180, %184 : vector<4x8x8xf32>
    "tpu.trace_start"() <{level = 10 : i32, message = "hqk,hkd->hqd"}> : () -> ()
    %cst_80 = arith.constant dense<0.000000e+00> : vector<4x8x8xf32>
    %186 = tpu.matmul %185, %174, %cst_80 {dimension_numbers = #tpu.dot_dimension_numbers<[2], [1], [1], [2], [0, 0, 0, 1, 1, 2], [0], [0]>} : vector<4x8x8xf32>, vector<4x8x8xf32>, vector<4x8x8xf32> -> vector<4x8x8xf32>
    "tpu.trace_stop"() : () -> ()
    %187 = vector.extract_strided_slice %186 {offsets = [0, 0, 0], sizes = [1, 8, 8], strides = [1, 1, 1]} : vector<4x8x8xf32> to vector<1x8x8xf32>
    %188 = vector.shape_cast %187 : vector<1x8x8xf32> to vector<8x8xf32>
    %189 = vector.extract_strided_slice %147 {offsets = [0, 0, 0], sizes = [1, 8, 32], strides = [1, 1, 1]} : vector<4x8x32xf32> to vector<1x8x32xf32>
    %190 = vector.shape_cast %189 : vector<1x8x32xf32> to vector<8x32xf32>
    %cst_81 = arith.constant dense<0.000000e+00> : vector<8x32xf32>
    %191 = tpu.matmul %188, %190, %cst_81 {dimension_numbers = #tpu.dot_dimension_numbers<[1], [0], [0], [1], [0, 0, 1, 1], [], []>} : vector<8x8xf32>, vector<8x32xf32>, vector<8x32xf32> -> vector<8x32xf32>
    %192 = vector.extract_strided_slice %186 {offsets = [1, 0, 0], sizes = [1, 8, 8], strides = [1, 1, 1]} : vector<4x8x8xf32> to vector<1x8x8xf32>
    %193 = vector.shape_cast %192 : vector<1x8x8xf32> to vector<8x8xf32>
    %194 = vector.extract_strided_slice %147 {offsets = [1, 0, 0], sizes = [1, 8, 32], strides = [1, 1, 1]} : vector<4x8x32xf32> to vector<1x8x32xf32>
    %195 = vector.shape_cast %194 : vector<1x8x32xf32> to vector<8x32xf32>
    %cst_82 = arith.constant dense<0.000000e+00> : vector<8x32xf32>
    %196 = tpu.matmul %193, %195, %cst_82 {dimension_numbers = #tpu.dot_dimension_numbers<[1], [0], [0], [1], [0, 0, 1, 1], [], []>} : vector<8x8xf32>, vector<8x32xf32>, vector<8x32xf32> -> vector<8x32xf32>
    %197 = arith.addf %191, %196 : vector<8x32xf32>
    %198 = vector.extract_strided_slice %186 {offsets = [2, 0, 0], sizes = [1, 8, 8], strides = [1, 1, 1]} : vector<4x8x8xf32> to vector<1x8x8xf32>
    %199 = vector.shape_cast %198 : vector<1x8x8xf32> to vector<8x8xf32>
    %200 = vector.extract_strided_slice %147 {offsets = [2, 0, 0], sizes = [1, 8, 32], strides = [1, 1, 1]} : vector<4x8x32xf32> to vector<1x8x32xf32>
    %201 = vector.shape_cast %200 : vector<1x8x32xf32> to vector<8x32xf32>
    %cst_83 = arith.constant dense<0.000000e+00> : vector<8x32xf32>
    %202 = tpu.matmul %199, %201, %cst_83 {dimension_numbers = #tpu.dot_dimension_numbers<[1], [0], [0], [1], [0, 0, 1, 1], [], []>} : vector<8x8xf32>, vector<8x32xf32>, vector<8x32xf32> -> vector<8x32xf32>
    %203 = arith.addf %197, %202 : vector<8x32xf32>
    %204 = vector.extract_strided_slice %186 {offsets = [3, 0, 0], sizes = [1, 8, 8], strides = [1, 1, 1]} : vector<4x8x8xf32> to vector<1x8x8xf32>
    %205 = vector.shape_cast %204 : vector<1x8x8xf32> to vector<8x8xf32>
    %206 = vector.extract_strided_slice %147 {offsets = [3, 0, 0], sizes = [1, 8, 32], strides = [1, 1, 1]} : vector<4x8x32xf32> to vector<1x8x32xf32>
    %207 = vector.shape_cast %206 : vector<1x8x32xf32> to vector<8x32xf32>
    %cst_84 = arith.constant dense<0.000000e+00> : vector<8x32xf32>
    %208 = tpu.matmul %205, %207, %cst_84 {dimension_numbers = #tpu.dot_dimension_numbers<[1], [0], [0], [1], [0, 0, 1, 1], [], []>} : vector<8x8xf32>, vector<8x32xf32>, vector<8x32xf32> -> vector<8x32xf32>
    %209 = arith.addf %203, %208 : vector<8x32xf32>
    %c0_85 = arith.constant 0 : index
    %c7 = arith.constant 7 : index
    %c0_86 = arith.constant 0 : index
    %210 = vector.load %arg10[%c0_85, %c7, %c0_86] : memref<1x15x32xf32, #tpu.memory_space<vmem>>, vector<1x1x32xf32>
    %211 = vector.shape_cast %210 : vector<1x1x32xf32> to vector<1x32xf32>
    %212 = vector.broadcast %211 : vector<1x32xf32> to vector<8x32xf32>
    %213 = arith.addf %209, %212 : vector<8x32xf32>
    %214 = arith.addf %213, %123 : vector<8x32xf32>
    %c0_87 = arith.constant 0 : index
    %c10 = arith.constant 10 : index
    %c0_88 = arith.constant 0 : index
    %215 = vector.load %arg10[%c0_87, %c10, %c0_88] : memref<1x15x32xf32, #tpu.memory_space<vmem>>, vector<1x1x32xf32>
    %216 = vector.shape_cast %215 : vector<1x1x32xf32> to vector<1x32xf32>
    %c0_89 = arith.constant 0 : index
    %c13 = arith.constant 13 : index
    %c0_90 = arith.constant 0 : index
    %217 = vector.load %arg10[%c0_89, %c13, %c0_90] : memref<1x15x32xf32, #tpu.memory_space<vmem>>, vector<1x1x32xf32>
    %218 = vector.shape_cast %217 : vector<1x1x32xf32> to vector<1x32xf32>
    %cst_91 = arith.constant dense<0.000000e+00> : vector<8xf32>
    %219 = vector.multi_reduction <add>, %214, %cst_91 [1] : vector<8x32xf32> to vector<8xf32>
    %220 = vector.shape_cast %219 : vector<8xf32> to vector<8x1xf32>
    %cst_92 = arith.constant 3.200000e+01 : f32
    %221 = vector.broadcast %cst_92 : f32 to vector<8x1xf32>
    %222 = arith.divf %220, %221 : vector<8x1xf32>
    %223 = vector.broadcast %222 : vector<8x1xf32> to vector<8x32xf32>
    %224 = arith.subf %214, %223 : vector<8x32xf32>
    %225 = arith.mulf %224, %224 : vector<8x32xf32>
    %cst_93 = arith.constant dense<0.000000e+00> : vector<8xf32>
    %226 = vector.multi_reduction <add>, %225, %cst_93 [1] : vector<8x32xf32> to vector<8xf32>
    %227 = vector.shape_cast %226 : vector<8xf32> to vector<8x1xf32>
    %cst_94 = arith.constant 3.200000e+01 : f32
    %228 = vector.broadcast %cst_94 : f32 to vector<8x1xf32>
    %229 = arith.divf %227, %228 : vector<8x1xf32>
    %230 = vector.broadcast %222 : vector<8x1xf32> to vector<8x32xf32>
    %231 = arith.subf %214, %230 : vector<8x32xf32>
    %cst_95 = arith.constant 9.99999974E-6 : f32
    %232 = vector.broadcast %cst_95 : f32 to vector<8x1xf32>
    %233 = arith.addf %229, %232 : vector<8x1xf32>
    %234 = math.rsqrt %233 : vector<8x1xf32>
    %235 = vector.broadcast %234 : vector<8x1xf32> to vector<8x32xf32>
    %236 = arith.mulf %231, %235 : vector<8x32xf32>
    %237 = vector.broadcast %216 : vector<1x32xf32> to vector<8x32xf32>
    %238 = arith.mulf %236, %237 : vector<8x32xf32>
    %239 = vector.broadcast %218 : vector<1x32xf32> to vector<8x32xf32>
    %240 = arith.addf %238, %239 : vector<8x32xf32>
    %c0_96 = arith.constant 0 : index
    %c0_97 = arith.constant 0 : index
    %c0_98 = arith.constant 0 : index
    %241 = vector.load %arg7[%c0_96, %c0_97, %c0_98] : memref<1x32x64xf32, #tpu.memory_space<vmem>>, vector<1x32x64xf32>
    %242 = vector.shape_cast %241 : vector<1x32x64xf32> to vector<32x64xf32>
    %cst_99 = arith.constant dense<0.000000e+00> : vector<8x64xf32>
    %243 = tpu.matmul %240, %242, %cst_99 {dimension_numbers = #tpu.dot_dimension_numbers<[1], [0], [0], [1], [0, 0, 1, 1], [], []>} : vector<8x32xf32>, vector<32x64xf32>, vector<8x64xf32> -> vector<8x64xf32>
    %c0_100 = arith.constant 0 : index
    %c0_101 = arith.constant 0 : index
    %c0_102 = arith.constant 0 : index
    %244 = vector.load %arg9[%c0_100, %c0_101, %c0_102] : memref<1x1x64xf32, #tpu.memory_space<vmem>>, vector<1x1x64xf32>
    %245 = vector.shape_cast %244 : vector<1x1x64xf32> to vector<1x64xf32>
    %246 = vector.broadcast %245 : vector<1x64xf32> to vector<8x64xf32>
    %247 = arith.addf %243, %246 : vector<8x64xf32>
    %cst_103 = arith.constant 0.000000e+00 : f32
    %248 = vector.broadcast %cst_103 : f32 to vector<8x64xf32>
    %249 = arith.maximumf %247, %248 : vector<8x64xf32>
    %c0_104 = arith.constant 0 : index
    %c0_105 = arith.constant 0 : index
    %c0_106 = arith.constant 0 : index
    %250 = vector.load %arg8[%c0_104, %c0_105, %c0_106] : memref<1x64x32xf32, #tpu.memory_space<vmem>>, vector<1x64x32xf32>
    %251 = vector.shape_cast %250 : vector<1x64x32xf32> to vector<64x32xf32>
    %cst_107 = arith.constant dense<0.000000e+00> : vector<8x32xf32>
    %252 = tpu.matmul %249, %251, %cst_107 {dimension_numbers = #tpu.dot_dimension_numbers<[1], [0], [0], [1], [0, 0, 1, 1], [], []>} : vector<8x64xf32>, vector<64x32xf32>, vector<8x32xf32> -> vector<8x32xf32>
    %c0_108 = arith.constant 0 : index
    %c8 = arith.constant 8 : index
    %c0_109 = arith.constant 0 : index
    %253 = vector.load %arg10[%c0_108, %c8, %c0_109] : memref<1x15x32xf32, #tpu.memory_space<vmem>>, vector<1x1x32xf32>
    %254 = vector.shape_cast %253 : vector<1x1x32xf32> to vector<1x32xf32>
    %255 = vector.broadcast %254 : vector<1x32xf32> to vector<8x32xf32>
    %256 = arith.addf %252, %255 : vector<8x32xf32>
    %257 = arith.addf %256, %240 : vector<8x32xf32>
    %c0_110 = arith.constant 0 : index
    %c11 = arith.constant 11 : index
    %c0_111 = arith.constant 0 : index
    %258 = vector.load %arg10[%c0_110, %c11, %c0_111] : memref<1x15x32xf32, #tpu.memory_space<vmem>>, vector<1x1x32xf32>
    %259 = vector.shape_cast %258 : vector<1x1x32xf32> to vector<1x32xf32>
    %c0_112 = arith.constant 0 : index
    %c14 = arith.constant 14 : index
    %c0_113 = arith.constant 0 : index
    %260 = vector.load %arg10[%c0_112, %c14, %c0_113] : memref<1x15x32xf32, #tpu.memory_space<vmem>>, vector<1x1x32xf32>
    %261 = vector.shape_cast %260 : vector<1x1x32xf32> to vector<1x32xf32>
    %cst_114 = arith.constant dense<0.000000e+00> : vector<8xf32>
    %262 = vector.multi_reduction <add>, %257, %cst_114 [1] : vector<8x32xf32> to vector<8xf32>
    %263 = vector.shape_cast %262 : vector<8xf32> to vector<8x1xf32>
    %cst_115 = arith.constant 3.200000e+01 : f32
    %264 = vector.broadcast %cst_115 : f32 to vector<8x1xf32>
    %265 = arith.divf %263, %264 : vector<8x1xf32>
    %266 = vector.broadcast %265 : vector<8x1xf32> to vector<8x32xf32>
    %267 = arith.subf %257, %266 : vector<8x32xf32>
    %268 = arith.mulf %267, %267 : vector<8x32xf32>
    %cst_116 = arith.constant dense<0.000000e+00> : vector<8xf32>
    %269 = vector.multi_reduction <add>, %268, %cst_116 [1] : vector<8x32xf32> to vector<8xf32>
    %270 = vector.shape_cast %269 : vector<8xf32> to vector<8x1xf32>
    %cst_117 = arith.constant 3.200000e+01 : f32
    %271 = vector.broadcast %cst_117 : f32 to vector<8x1xf32>
    %272 = arith.divf %270, %271 : vector<8x1xf32>
    %273 = vector.broadcast %265 : vector<8x1xf32> to vector<8x32xf32>
    %274 = arith.subf %257, %273 : vector<8x32xf32>
    %cst_118 = arith.constant 9.99999974E-6 : f32
    %275 = vector.broadcast %cst_118 : f32 to vector<8x1xf32>
    %276 = arith.addf %272, %275 : vector<8x1xf32>
    %277 = math.rsqrt %276 : vector<8x1xf32>
    %278 = vector.broadcast %277 : vector<8x1xf32> to vector<8x32xf32>
    %279 = arith.mulf %274, %278 : vector<8x32xf32>
    %280 = vector.broadcast %259 : vector<1x32xf32> to vector<8x32xf32>
    %281 = arith.mulf %279, %280 : vector<8x32xf32>
    %282 = vector.broadcast %261 : vector<1x32xf32> to vector<8x32xf32>
    %283 = arith.addf %281, %282 : vector<8x32xf32>
    %c0_119 = arith.constant 0 : index
    %c0_120 = arith.constant 0 : index
    %284 = vector.load %arg12[%c0_119, %c0_120] : memref<8x32xf32, #tpu.memory_space<vmem>>, vector<8x32xf32>
    tpu.vector_store %arg12[%c0_119, %c0_120], %283 {strides = array<i32>} : memref<8x32xf32, #tpu.memory_space<vmem>>, vector<8x32xf32>,
    %c1_i32 = arith.constant 1 : i32
    %285 = arith.cmpi eq, %arg1, %c1_i32 : i32
    %286 = arith.extui %285 : i1 to i32
    %c0_i32_121 = arith.constant 0 : i32
    %287 = arith.cmpi ne, %286, %c0_i32_121 : i32
    scf.if %287 {
      %c0_122 = arith.constant 0 : index
      %c0_123 = arith.constant 0 : index
      %288 = vector.load %arg11[%c0_122, %c0_123] : memref<8x32xf32, #tpu.memory_space<vmem>>, vector<8x32xf32>
      tpu.vector_store %arg11[%c0_122, %c0_123], %283 {strides = array<i32>} : memref<8x32xf32, #tpu.memory_space<vmem>>, vector<8x32xf32>,
    } else {
    }
    return
  }
  func.func @transform_0(%arg0: i32, %arg1: i32) -> (i32, i32) {
    %c0_i32 = arith.constant 0 : i32
    %c0_i32_0 = arith.constant 0 : i32
    return %arg0, %c0_i32 : i32, i32
  }
  func.func @transform_1(%arg0: i32, %arg1: i32) -> (i32, i32) {
    %c0_i32 = arith.constant 0 : i32
    %c0_i32_0 = arith.constant 0 : i32
    return %arg0, %c0_i32 : i32, i32
  }
  func.func @transform_2(%arg0: i32, %arg1: i32) -> (i32, i32) {
    %c0_i32 = arith.constant 0 : i32
    %c0_i32_0 = arith.constant 0 : i32
    %c0_i32_1 = arith.constant 0 : i32
    return %c0_i32, %c0_i32_0 : i32, i32
  }
  func.func @transform_3(%arg0: i32, %arg1: i32) -> (i32, i32, i32, i32) {
    %c0_i32 = arith.constant 0 : i32
    %c0_i32_0 = arith.constant 0 : i32
    %c0_i32_1 = arith.constant 0 : i32
    %c0_i32_2 = arith.constant 0 : i32
    return %arg1, %c0_i32, %c0_i32_0, %c0_i32_1 : i32, i32, i32, i32
  }
  func.func @transform_4(%arg0: i32, %arg1: i32) -> (i32, i32, i32, i32, i32) {
    %c0_i32 = arith.constant 0 : i32
    %c0_i32_0 = arith.constant 0 : i32
    %c0_i32_1 = arith.constant 0 : i32
    %c0_i32_2 = arith.constant 0 : i32
    %c0_i32_3 = arith.constant 0 : i32
    return %arg1, %c0_i32, %c0_i32_0, %c0_i32_1, %c0_i32_2 : i32, i32, i32, i32, i32
  }
  func.func @transform_5(%arg0: i32, %arg1: i32) -> (i32, i32, i32) {
    %c0_i32 = arith.constant 0 : i32
    %c0_i32_0 = arith.constant 0 : i32
    %c0_i32_1 = arith.constant 0 : i32
    return %arg1, %c0_i32, %c0_i32_0 : i32, i32, i32
  }
  func.func @transform_6(%arg0: i32, %arg1: i32) -> (i32, i32, i32) {
    %c0_i32 = arith.constant 0 : i32
    %c0_i32_0 = arith.constant 0 : i32
    %c0_i32_1 = arith.constant 0 : i32
    return %arg1, %c0_i32, %c0_i32_0 : i32, i32, i32
  }
  func.func @transform_7(%arg0: i32, %arg1: i32) -> (i32, i32, i32) {
    %c0_i32 = arith.constant 0 : i32
    %c0_i32_0 = arith.constant 0 : i32
    %c0_i32_1 = arith.constant 0 : i32
    return %arg1, %c0_i32, %c0_i32_0 : i32, i32, i32
  }
  func.func @transform_8(%arg0: i32, %arg1: i32) -> (i32, i32, i32) {
    %c0_i32 = arith.constant 0 : i32
    %c0_i32_0 = arith.constant 0 : i32
    %c0_i32_1 = arith.constant 0 : i32
    return %arg1, %c0_i32, %c0_i32_0 : i32, i32, i32
  }
  func.func @transform_9(%arg0: i32, %arg1: i32) -> (i32, i32) {
    %c0_i32 = arith.constant 0 : i32
    %c0_i32_0 = arith.constant 0 : i32
    return %arg0, %c0_i32 : i32, i32
  }
}

</mosaic_0001>

<llo_original>
// kernel: tpu_custom_call.1
$region0: #{tpu_custom_call.1}
  #allocation0 [shape = 'u32[]', space=smem, size = 0x4, offset = 0x4, fixed_abs, tag = 'smem constant byte address 0x4 - core index']
  #allocation1 [shape = 'u32[144,128]{1,0:T(1,128)}', space=vmem, size = 0x12000, scoped, tag = 'internal scratch']
  #allocation2 [shape = 'f32[8,32]{1,0:T(8,128)}', space=vmem, size = 0x1000, scoped, tag = 'scratch operand']
  %s0 = inlined_call_operand.hbm [shape: f32[16,32], index: 0, kind: input, shape index: {}]
  %s1 = inlined_call_operand.hbm [shape: f32[16,32], index: 1, kind: input, shape index: {}]
  %s2 = inlined_call_operand.vmem [shape: f32[8,8], index: 2, kind: input, shape index: {}]
  %s3 = inlined_call_operand.hbm [shape: f32[2,6,32,32], index: 3, kind: input, shape index: {}]
  %s4 = inlined_call_operand.vmem [shape: f32[2,2,4,8,32], index: 4, kind: input, shape index: {}]
  %s5 = inlined_call_operand.vmem [shape: f32[2,32,64], index: 5, kind: input, shape index: {}]
  %s6 = inlined_call_operand.vmem [shape: f32[2,64,32], index: 6, kind: input, shape index: {}]
  %s7 = inlined_call_operand.hbm [shape: f32[2,1,64], index: 7, kind: input, shape index: {}]
  %s8 = inlined_call_operand.vmem [shape: f32[2,15,32], index: 8, kind: input, shape index: {}]
  %s9 = inlined_call_operand.hbm [shape: f32[16,32], index: 9, kind: output, shape index: {}]
  %s10 = sld [smem:[#allocation0]]
  $region93: #{tpu_custom_call.1} parent=0
    _
  %s12 = ssub.s32 1, %s10
  %s13 = scalar_select 0, %s12, %s10
  $region1: #{tpu_custom_call.1} parent=0
    #allocation3 [shape = 'u8[8192]{0}', space=vmem, size = 0x2000, scoped, tag = 'input window, operand 0']
    #allocation4 [shape = 's32[2]{0}', space=sflag, size = 0x8, scoped, tag = 'scoped memory for tpu_custom_call.1']
    #allocation5 [shape = 's32[2]{0}', space=sflag, size = 0x8, scoped, tag = 'scoped memory for tpu_custom_call.1']
    #allocation6 [shape = 'u8[8192]{0}', space=vmem, size = 0x2000, scoped, tag = 'input window, operand 1']
    #allocation7 [shape = 's32[2]{0}', space=sflag, size = 0x8, scoped, tag = 'scoped memory for tpu_custom_call.1']
    #allocation8 [shape = 'u8[196608]{0}', space=vmem, size = 0x30000, scoped, tag = 'input window, operand 3']
    #allocation9 [shape = 'u8[1024]{0}', space=vmem, size = 0x400, scoped, tag = 'input window, operand 7']
    #allocation10 [shape = 's32[2]{0}', space=sflag, size = 0x8, scoped, tag = 'scoped memory for tpu_custom_call.1']
    #allocation11 [shape = 'u8[8192]{0}', space=vmem, size = 0x2000, scoped, tag = 'output window, operand 0']
    %14 = vsyncpa [#allocation4], 0
    %s15 = scalar_lea.sflag [#allocation4], 1
    %16 = vsyncpa %s15, 0
    %17 = vsyncpa [#allocation7], 0
    %s18 = scalar_lea.sflag [#allocation7], 1
    %19 = vsyncpa %s18, 0
    %20 = vsyncpa [#allocation10], 0
    %s21 = scalar_lea.sflag [#allocation10], 1
    %22 = vsyncpa %s21, 0
    %23 = vsyncpa [#allocation5], 0
    %s24 = scalar_lea.sflag [#allocation5], 1
    %25 = vsyncpa %s24, 0
    loop: start=0, step=1, limit=6
    $region2: #{tpu_custom_call.1} parent=1 // loop_pre_header
      _
    $region3: #{tpu_custom_call.1} parent=1 // loop_header
      %s27 = sphi 0, %s31
      %p28 = scmp.ge.s32.totalorder %s27, 6
      %s34 = sphi 0, %s46
      %s35 = sphi 0, %s42
      %s36 = sphi 0, %s34
      %s37 = sphi 0, %s35
      %s38 = sphi 0, %s36
      %s39 = sphi 0, %s37
      %s49 = sphi 0, %s51
      %s52 = sphi 0, %s49
      %s53 = sphi 0, %s52
      %s69 = sphi 0, %s53
      %s75 = sphi 0, %s77
      %s78 = sphi 0, %s75
      %s79 = sphi 0, %s78
      %s95 = sphi 0, %s79
      %s99 = sphi 0, %s99
      %s101 = sphi 0, %s99
      %s102 = sphi 0, %s101
      %s116 = sphi 0, %s102
      %s122 = sphi 0, %s124
      %s125 = sphi 0, %s122
      %s126 = sphi 0, %s125
      %s142 = sphi 0, %s126
      %s148 = sphi 0, %s150
      %s151 = sphi 0, %s148
      %s152 = sphi 0, %s151
      %s168 = sphi 0, %s152
      %s174 = sphi 0, %s176
      %s177 = sphi 0, %s174
      %s178 = sphi 0, %s177
      %s194 = sphi 0, %s178
      %s200 = sphi 0, %s202
      %s203 = sphi 0, %s200
      %s204 = sphi 0, %s203
      %s220 = sphi 0, %s204
      %s226 = sphi 0, %s228
      %s229 = sphi 0, %s226
      %s230 = sphi 0, %s229
      %s246 = sphi 0, %s230
      %s252 = sphi 0, %s254
      %s255 = sphi 0, %s252
      %s256 = sphi 0, %s255
      %s272 = sphi 0, %s256
      %s278 = sphi 0, %s280
      %s281 = sphi 0, %s278
      %s282 = sphi 0, %s281
      %s298 = sphi 0, %s282
    $region4: #{tpu_custom_call.1} parent=1 // loop_header_branch
      %30 = sbr.rel (%p28) target = $region8
    $region5: #{tpu_custom_call.1} parent=1 // loop_body
      %s32 = ssub.s32 %s27, 1
      %s33 = ssub.s32 %s27, 2
      %s40 = sadd.s32 1, %s35
      %p41 = scmp.ge.s32.totalorder %s40, 2
      %s42 = scalar_select %p41, 0, %s40
      %s43 = sadd.s32 1, %s34
      %s44 = scalar_select %p41, %s43, %s34
      %p45 = scmp.ge.s32.totalorder %s44, 2
      %s46 = scalar_select %p45, 0, %s44
      %s47 = ssub.s32 %s34, %s46
      %p48 = scmp.eq.s32.totalorder %s47, 0
      %s50 = sadd.s32 %s49, 1
      %s51 = scalar_select %p48, %s49, %s50
      %p54 = pneg %p48
      %p55 = scmp.eq.s32.totalorder %s27, 3
      %p56 = por %p54, %p55
      %p57 = scmp.ne.s32.totalorder %s49, %s52
      %p58 = scmp.eq.s32.totalorder %s27, 0
      %p59 = por %p57, %p58
      %p60 = scmp.ne.s32.totalorder %s49, %s52
      %p61 = scmp.eq.s32.totalorder %s32, 3
      %p62 = por %p60, %p61
      %p63 = scmp.ne.s32.totalorder %s52, %s53
      %p64 = scmp.eq.s32.totalorder %s32, 0
      %p65 = por %p63, %p64
      %p66 = scmp.ne.s32.totalorder %s52, %s53
      %p67 = scmp.eq.s32.totalorder %s33, 3
      %p68 = por %p66, %p67
      %p70 = scmp.ne.s32.totalorder %s53, %s69
      %p71 = scmp.eq.s32.totalorder %s33, 0
      %p72 = por %p70, %p71
      %s73 = ssub.s32 %s34, %s46
      %p74 = scmp.eq.s32.totalorder %s73, 0
      %s76 = sadd.s32 %s75, 1
      %s77 = scalar_select %p74, %s75, %s76
      %p80 = pneg %p74
      %p81 = scmp.eq.s32.totalorder %s27, 3
      %p82 = por %p80, %p81
      %p83 = scmp.ne.s32.totalorder %s75, %s78
      %p84 = scmp.eq.s32.totalorder %s27, 0
      %p85 = por %p83, %p84
      %p86 = scmp.ne.s32.totalorder %s75, %s78
      %p87 = scmp.eq.s32.totalorder %s32, 3
      %p88 = por %p86, %p87
      %p89 = scmp.ne.s32.totalorder %s78, %s79
      %p90 = scmp.eq.s32.totalorder %s32, 0
      %p91 = por %p89, %p90
      %p92 = scmp.ne.s32.totalorder %s78, %s79
      %p93 = scmp.eq.s32.totalorder %s33, 3
      %p94 = por %p92, %p93
      %p96 = scmp.ne.s32.totalorder %s79, %s95
      %p97 = scmp.eq.s32.totalorder %s33, 0
      %p98 = por %p96, %p97
      %s100 = sadd.s32 %s99, 1
      %p103 = scmp.eq.s32.totalorder %s27, 3
      %p104 = scmp.ne.s32.totalorder %s99, %s101
      %p105 = scmp.eq.s32.totalorder %s27, 0
      %p106 = por %p104, %p105
      %p107 = scmp.ne.s32.totalorder %s99, %s101
      %p108 = scmp.eq.s32.totalorder %s32, 3
      %p109 = por %p107, %p108
      %p110 = scmp.ne.s32.totalorder %s101, %s102
      %p111 = scmp.eq.s32.totalorder %s32, 0
      %p112 = por %p110, %p111
      %p113 = scmp.ne.s32.totalorder %s101, %s102
      %p114 = scmp.eq.s32.totalorder %s33, 3
      %p115 = por %p113, %p114
      %p117 = scmp.ne.s32.totalorder %s102, %s116
      %p118 = scmp.eq.s32.totalorder %s33, 0
      %p119 = por %p117, %p118
      %s120 = ssub.s32 %s35, %s42
      %p121 = scmp.eq.s32.totalorder %s120, 0
      %s123 = sadd.s32 %s122, 1
      %s124 = scalar_select %p121, %s122, %s123
      %p127 = pneg %p121
      %p128 = scmp.eq.s32.totalorder %s27, 3
      %p129 = por %p127, %p128
      %p130 = scmp.ne.s32.totalorder %s122, %s125
      %p131 = scmp.eq.s32.totalorder %s27, 0
      %p132 = por %p130, %p131
      %p133 = scmp.ne.s32.totalorder %s122, %s125
      %p134 = scmp.eq.s32.totalorder %s32, 3
      %p135 = por %p133, %p134
      %p136 = scmp.ne.s32.totalorder %s125, %s126
      %p137 = scmp.eq.s32.totalorder %s32, 0
      %p138 = por %p136, %p137
      %p139 = scmp.ne.s32.totalorder %s125, %s126
      %p140 = scmp.eq.s32.totalorder %s33, 3
      %p141 = por %p139, %p140
      %p143 = scmp.ne.s32.totalorder %s126, %s142
      %p144 = scmp.eq.s32.totalorder %s33, 0
      %p145 = por %p143, %p144
      %s146 = ssub.s32 %s35, %s42
      %p147 = scmp.eq.s32.totalorder %s146, 0
      %s149 = sadd.s32 %s148, 1
      %s150 = scalar_select %p147, %s148, %s149
      %p153 = pneg %p147
      %p154 = scmp.eq.s32.totalorder %s27, 3
      %p155 = por %p153, %p154
      %p156 = scmp.ne.s32.totalorder %s148, %s151
      %p157 = scmp.eq.s32.totalorder %s27, 0
      %p158 = por %p156, %p157
      %p159 = scmp.ne.s32.totalorder %s148, %s151
      %p160 = scmp.eq.s32.totalorder %s32, 3
      %p161 = por %p159, %p160
      %p162 = scmp.ne.s32.totalorder %s151, %s152
      %p163 = scmp.eq.s32.totalorder %s32, 0
      %p164 = por %p162, %p163
      %p165 = scmp.ne.s32.totalorder %s151, %s152
      %p166 = scmp.eq.s32.totalorder %s33, 3
      %p167 = por %p165, %p166
      %p169 = scmp.ne.s32.totalorder %s152, %s168
      %p170 = scmp.eq.s32.totalorder %s33, 0
      %p171 = por %p169, %p170
      %s172 = ssub.s32 %s35, %s42
      %p173 = scmp.eq.s32.totalorder %s172, 0
      %s175 = sadd.s32 %s174, 1
      %s176 = scalar_select %p173, %s174, %s175
      %p179 = pneg %p173
      %p180 = scmp.eq.s32.totalorder %s27, 3
      %p181 = por %p179, %p180
      %p182 = scmp.ne.s32.totalorder %s174, %s177
      %p183 = scmp.eq.s32.totalorder %s27, 0
      %p184 = por %p182, %p183
      %p185 = scmp.ne.s32.totalorder %s174, %s177
      %p186 = scmp.eq.s32.totalorder %s32, 3
      %p187 = por %p185, %p186
      %p188 = scmp.ne.s32.totalorder %s177, %s178
      %p189 = scmp.eq.s32.totalorder %s32, 0
      %p190 = por %p188, %p189
      %p191 = scmp.ne.s32.totalorder %s177, %s178
      %p192 = scmp.eq.s32.totalorder %s33, 3
      %p193 = por %p191, %p192
      %p195 = scmp.ne.s32.totalorder %s178, %s194
      %p196 = scmp.eq.s32.totalorder %s33, 0
      %p197 = por %p195, %p196
      %s198 = ssub.s32 %s35, %s42
      %p199 = scmp.eq.s32.totalorder %s198, 0
      %s201 = sadd.s32 %s200, 1
      %s202 = scalar_select %p199, %s200, %s201
      %p205 = pneg %p199
      %p206 = scmp.eq.s32.totalorder %s27, 3
      %p207 = por %p205, %p206
      %p208 = scmp.ne.s32.totalorder %s200, %s203
      %p209 = scmp.eq.s32.totalorder %s27, 0
      %p210 = por %p208, %p209
      %p211 = scmp.ne.s32.totalorder %s200, %s203
      %p212 = scmp.eq.s32.totalorder %s32, 3
      %p213 = por %p211, %p212
      %p214 = scmp.ne.s32.totalorder %s203, %s204
      %p215 = scmp.eq.s32.totalorder %s32, 0
      %p216 = por %p214, %p215
      %p217 = scmp.ne.s32.totalorder %s203, %s204
      %p218 = scmp.eq.s32.totalorder %s33, 3
      %p219 = por %p217, %p218
      %p221 = scmp.ne.s32.totalorder %s204, %s220
      %p222 = scmp.eq.s32.totalorder %s33, 0
      %p223 = por %p221, %p222
      %s224 = ssub.s32 %s35, %s42
      %p225 = scmp.eq.s32.totalorder %s224, 0
      %s227 = sadd.s32 %s226, 1
      %s228 = scalar_select %p225, %s226, %s227
      %p231 = pneg %p225
      %p232 = scmp.eq.s32.totalorder %s27, 3
      %p233 = por %p231, %p232
      %p234 = scmp.ne.s32.totalorder %s226, %s229
      %p235 = scmp.eq.s32.totalorder %s27, 0
      %p236 = por %p234, %p235
      %p237 = scmp.ne.s32.totalorder %s226, %s229
      %p238 = scmp.eq.s32.totalorder %s32, 3
      %p239 = por %p237, %p238
      %p240 = scmp.ne.s32.totalorder %s229, %s230
      %p241 = scmp.eq.s32.totalorder %s32, 0
      %p242 = por %p240, %p241
      %p243 = scmp.ne.s32.totalorder %s229, %s230
      %p244 = scmp.eq.s32.totalorder %s33, 3
      %p245 = por %p243, %p244
      %p247 = scmp.ne.s32.totalorder %s230, %s246
      %p248 = scmp.eq.s32.totalorder %s33, 0
      %p249 = por %p247, %p248
      %s250 = ssub.s32 %s35, %s42
      %p251 = scmp.eq.s32.totalorder %s250, 0
      %s253 = sadd.s32 %s252, 1
      %s254 = scalar_select %p251, %s252, %s253
      %p257 = pneg %p251
      %p258 = scmp.eq.s32.totalorder %s27, 3
      %p259 = por %p257, %p258
      %p260 = scmp.ne.s32.totalorder %s252, %s255
      %p261 = scmp.eq.s32.totalorder %s27, 0
      %p262 = por %p260, %p261
      %p263 = scmp.ne.s32.totalorder %s252, %s255
      %p264 = scmp.eq.s32.totalorder %s32, 3
      %p265 = por %p263, %p264
      %p266 = scmp.ne.s32.totalorder %s255, %s256
      %p267 = scmp.eq.s32.totalorder %s32, 0
      %p268 = por %p266, %p267
      %p269 = scmp.ne.s32.totalorder %s255, %s256
      %p270 = scmp.eq.s32.totalorder %s33, 3
      %p271 = por %p269, %p270
      %p273 = scmp.ne.s32.totalorder %s256, %s272
      %p274 = scmp.eq.s32.totalorder %s33, 0
      %p275 = por %p273, %p274
      %s276 = ssub.s32 %s34, %s46
      %p277 = scmp.eq.s32.totalorder %s276, 0
      %s279 = sadd.s32 %s278, 1
      %s280 = scalar_select %p277, %s278, %s279
      %p283 = pneg %p277
      %p284 = scmp.eq.s32.totalorder %s27, 3
      %p285 = por %p283, %p284
      %p286 = scmp.ne.s32.totalorder %s278, %s281
      %p287 = scmp.eq.s32.totalorder %s27, 0
      %p288 = por %p286, %p287
      %p289 = scmp.ne.s32.totalorder %s278, %s281
      %p290 = scmp.eq.s32.totalorder %s32, 3
      %p291 = por %p289, %p290
      %p292 = scmp.ne.s32.totalorder %s281, %s282
      %p293 = scmp.eq.s32.totalorder %s32, 0
      %p294 = por %p292, %p293
      %p295 = scmp.ne.s32.totalorder %s281, %s282
      %p296 = scmp.eq.s32.totalorder %s33, 3
      %p297 = por %p295, %p296
      %p299 = scmp.ne.s32.totalorder %s282, %s298
      %p300 = scmp.eq.s32.totalorder %s33, 0
      %p301 = por %p299, %p300
      %p302 = scmp.le.s32.totalorder 1, %s27
      %p303 = scmp.lt.s32.totalorder %s27, 5
      %p304 = pnand %p302, %p303
      %p305 = pneg %p304
      // Predicated region
      $region9: #{tpu_custom_call.1} parent=5 // pred_check
        _
      $region10: #{tpu_custom_call.1} parent=5 // pred_check_branch
        %307 = sbr.rel (%p304) target = $region12
      $region11: #{tpu_custom_call.1} parent=5 // pred_region
        %s308 = ssub.s32 %s27, 1
        // Predicated region
        $region13: #{tpu_custom_call.1} parent=11 // pred_check
          %p309 = pneg %p112
        $region14: #{tpu_custom_call.1} parent=11 // pred_check_branch
          %311 = sbr.rel (%p309) target = $region16
        $region15: #{tpu_custom_call.1} parent=11 // pred_region
          _
        $region16: #{tpu_custom_call.1} parent=11 // pred_fallthru
          _
      $region12: #{tpu_custom_call.1} parent=5 // pred_fallthru
        _
      %p312 = scmp.lt.s32.totalorder %s27, 4
      // Predicated region
      $region17: #{tpu_custom_call.1} parent=5 // pred_check
        %p313 = pneg %p312
      $region18: #{tpu_custom_call.1} parent=5 // pred_check_branch
        %315 = sbr.rel (%p313) target = $region20
      $region19: #{tpu_custom_call.1} parent=5 // pred_region
        // Predicated region
        $region21: #{tpu_custom_call.1} parent=19 // pred_check
          %p316 = pneg %p59
        $region22: #{tpu_custom_call.1} parent=19 // pred_check_branch
          %318 = sbr.rel (%p316) target = $region24
        $region23: #{tpu_custom_call.1} parent=19 // pred_region
          %s319 = sand.u32 %s49, 1
          %s320 = scalar_lea.sflag [#allocation4], %s319
          %s321 = sand.u32 %s49, 1
          %s322 = smul.addr %s321, 8
          %s323 = scalar_lea.vmem [#allocation3], %s322
          %s325 = ssub.s32 128, 128
          %326 = vsyncadd %s320, %s325
          %s327 = smul.addr %s34, 128
          %s328 = scalar_lea.hbm %s0, %s327
          %s330 = sshll.u32 %s323, 4
          %s331 = int_to_ptr.vmem [resolvable:$true] %s330
          %333 = dma.hbm_to_vmem [thread:$0]  %s328, 128, %s331, %s320
        $region24: #{tpu_custom_call.1} parent=19 // pred_fallthru
          _
        // Predicated region
        $region25: #{tpu_custom_call.1} parent=19 // pred_check
          %p334 = pneg %p85
        $region26: #{tpu_custom_call.1} parent=19 // pred_check_branch
          %336 = sbr.rel (%p334) target = $region28
        $region27: #{tpu_custom_call.1} parent=19 // pred_region
          %s337 = sand.u32 %s27, 1
          %s338 = scalar_lea.sflag [#allocation7], %s337
          %s339 = sand.u32 %s75, 1
          %s340 = smul.addr %s339, 8
          %s341 = scalar_lea.vmem [#allocation6], %s340
          %s343 = ssub.s32 128, 128
          %344 = vsyncadd %s338, %s343
          %s345 = smul.addr %s34, 128
          %s346 = scalar_lea.hbm %s1, %s345
          %s348 = sshll.u32 %s341, 4
          %s349 = int_to_ptr.vmem [resolvable:$true] %s348
          %351 = dma.hbm_to_vmem [thread:$0]  %s346, 128, %s349, %s338
        $region28: #{tpu_custom_call.1} parent=19 // pred_fallthru
          _
        // Predicated region
        $region29: #{tpu_custom_call.1} parent=19 // pred_check
          %p352 = pneg %p132
        $region30: #{tpu_custom_call.1} parent=19 // pred_check_branch
          %354 = sbr.rel (%p352) target = $region32
        $region31: #{tpu_custom_call.1} parent=19 // pred_region
          %s355 = sand.u32 %s27, 1
          %s356 = scalar_lea.sflag [#allocation7], %s355
          %s357 = sand.u32 %s122, 1
          %s358 = smul.addr %s357, 192
          %s359 = scalar_lea.vmem [#allocation8], %s358
          %s361 = ssub.s32 3072, 3072
          %362 = vsyncadd %s356, %s361
          %s363 = smul.addr %s35, 24
          %s364 = smul.addr %s363, 128
          %s365 = scalar_lea.hbm %s3, %s364
          %s366 = sshll.u32 %s359, 4
          %s367 = int_to_ptr.vmem [resolvable:$true] %s366
          %372 = dma.hbm_to_vmem [thread:$0]  %s365, 3072, %s367, %s356, 128, 128, 8
        $region32: #{tpu_custom_call.1} parent=19 // pred_fallthru
          _
        // Predicated region
        $region33: #{tpu_custom_call.1} parent=19 // pred_check
          %p373 = pneg %p158
        $region34: #{tpu_custom_call.1} parent=19 // pred_check_branch
          %375 = sbr.rel (%p373) target = $region36
        $region35: #{tpu_custom_call.1} parent=19 // pred_region
          %p376 = scmp.lt.s32.totalorder %s35, 1
          %s377 = scalar_select %p376, %s35, 1
          %s378 = smul.addr %s377, 8
          %s379 = smul.addr %s378, 8
          %s380 = scalar_lea.vmem %s4, %s379
        $region36: #{tpu_custom_call.1} parent=19 // pred_fallthru
          _
        // Predicated region
        $region37: #{tpu_custom_call.1} parent=19 // pred_check
          %p381 = pneg %p184
        $region38: #{tpu_custom_call.1} parent=19 // pred_check_branch
          %383 = sbr.rel (%p381) target = $region40
        $region39: #{tpu_custom_call.1} parent=19 // pred_region
          %p384 = scmp.lt.s32.totalorder %s35, 1
          %s385 = scalar_select %p384, %s35, 1
          %s386 = smul.addr %s385, 4
          %s387 = smul.addr %s386, 8
          %s388 = scalar_lea.vmem %s5, %s387
        $region40: #{tpu_custom_call.1} parent=19 // pred_fallthru
          _
        // Predicated region
        $region41: #{tpu_custom_call.1} parent=19 // pred_check
          %p389 = pneg %p210
        $region42: #{tpu_custom_call.1} parent=19 // pred_check_branch
          %391 = sbr.rel (%p389) target = $region44
        $region43: #{tpu_custom_call.1} parent=19 // pred_region
          %p392 = scmp.lt.s32.totalorder %s35, 1
          %s393 = scalar_select %p392, %s35, 1
          %s394 = smul.addr %s393, 8
          %s395 = smul.addr %s394, 8
          %s396 = scalar_lea.vmem %s6, %s395
        $region44: #{tpu_custom_call.1} parent=19 // pred_fallthru
          _
        // Predicated region
        $region45: #{tpu_custom_call.1} parent=19 // pred_check
          %p397 = pneg %p236
        $region46: #{tpu_custom_call.1} parent=19 // pred_check_branch
          %399 = sbr.rel (%p397) target = $region48
        $region47: #{tpu_custom_call.1} parent=19 // pred_region
          %s400 = sand.u32 %s226, 1
          %s401 = scalar_lea.sflag [#allocation10], %s400
          %s402 = sand.u32 %s226, 1
          %s403 = scalar_lea.vmem [#allocation9], %s402
          %s405 = ssub.s32 16, 16
          %406 = vsyncadd %s401, %s405
          %s407 = smul.addr %s35, 16
          %s408 = scalar_lea.hbm %s7, %s407
          %s410 = sshll.u32 %s403, 4
          %s411 = int_to_ptr.vmem [resolvable:$true] %s410
          %413 = dma.hbm_to_vmem [thread:$0]  %s408, 16, %s411, %s401
        $region48: #{tpu_custom_call.1} parent=19 // pred_fallthru
          _
        // Predicated region
        $region49: #{tpu_custom_call.1} parent=19 // pred_check
          %p414 = pneg %p262
        $region50: #{tpu_custom_call.1} parent=19 // pred_check_branch
          %416 = sbr.rel (%p414) target = $region52
        $region51: #{tpu_custom_call.1} parent=19 // pred_region
          %p417 = scmp.lt.s32.totalorder %s35, 1
          %s418 = scalar_select %p417, %s35, 1
          %s419 = smul.addr %s418, 2
          %s420 = smul.addr %s419, 8
          %s421 = scalar_lea.vmem %s8, %s420
        $region52: #{tpu_custom_call.1} parent=19 // pred_fallthru
          _
      $region20: #{tpu_custom_call.1} parent=5 // pred_fallthru
        _
      %p422 = scmp.le.s32.totalorder 1, %s27
      %p423 = scmp.lt.s32.totalorder %s27, 5
      %p424 = pnand %p422, %p423
      %p425 = pneg %p424
      // Predicated region
      $region53: #{tpu_custom_call.1} parent=5 // pred_check
        _
      $region54: #{tpu_custom_call.1} parent=5 // pred_check_branch
        %427 = sbr.rel (%p424) target = $region56
      $region55: #{tpu_custom_call.1} parent=5 // pred_region
        %s428 = ssub.s32 %s27, 1
        %s429 = sand.u32 %s52, 1
        %s430 = scalar_lea.sflag [#allocation4], %s429
        %s431 = sand.u32 %s52, 1
        %s432 = smul.addr %s431, 8
        %s433 = scalar_lea.vmem [#allocation3], %s432
        // Predicated region
        $region57: #{tpu_custom_call.1} parent=55 // pred_check
          %p434 = pneg %p65
        $region58: #{tpu_custom_call.1} parent=55 // pred_check_branch
          %436 = sbr.rel (%p434) target = $region60
        $region59: #{tpu_custom_call.1} parent=55 // pred_region
          %437 = dma.done %s430, 128
        $region60: #{tpu_custom_call.1} parent=55 // pred_fallthru
          _
        %s438 = sand.u32 %s32, 1
        %s439 = scalar_lea.sflag [#allocation7], %s438
        %s440 = sand.u32 %s78, 1
        %s441 = smul.addr %s440, 8
        %s442 = scalar_lea.vmem [#allocation6], %s441
        // Predicated region
        $region61: #{tpu_custom_call.1} parent=55 // pred_check
          %p443 = pneg %p91
        $region62: #{tpu_custom_call.1} parent=55 // pred_check_branch
          %445 = sbr.rel (%p443) target = $region64
        $region63: #{tpu_custom_call.1} parent=55 // pred_region
          %446 = dma.done %s439, 128
        $region64: #{tpu_custom_call.1} parent=55 // pred_fallthru
          _
        %s447 = sand.u32 %s32, 1
        %s448 = scalar_lea.sflag [#allocation7], %s447
        %s449 = sand.u32 %s125, 1
        %s450 = smul.addr %s449, 192
        %s451 = scalar_lea.vmem [#allocation8], %s450
        // Predicated region
        $region65: #{tpu_custom_call.1} parent=55 // pred_check
          %p452 = pneg %p138
        $region66: #{tpu_custom_call.1} parent=55 // pred_check_branch
          %454 = sbr.rel (%p452) target = $region68
        $region67: #{tpu_custom_call.1} parent=55 // pred_region
          %455 = dma.done %s448, 3072
        $region68: #{tpu_custom_call.1} parent=55 // pred_fallthru
          _
        %s456 = sand.u32 %s229, 1
        %s457 = scalar_lea.sflag [#allocation10], %s456
        %s458 = sand.u32 %s229, 1
        %s459 = scalar_lea.vmem [#allocation9], %s458
        // Predicated region
        $region69: #{tpu_custom_call.1} parent=55 // pred_check
          %p460 = pneg %p242
        $region70: #{tpu_custom_call.1} parent=55 // pred_check_branch
          %462 = sbr.rel (%p460) target = $region72
        $region71: #{tpu_custom_call.1} parent=55 // pred_region
          %463 = dma.done %s457, 16
        $region72: #{tpu_custom_call.1} parent=55 // pred_fallthru
          _
        %s464 = sand.u32 %s52, 1
        %s465 = scalar_lea.sflag [#allocation4], %s464
        %s466 = sand.u32 %s52, 1
        %s467 = smul.addr %s466, 8
        %s468 = scalar_lea.vmem [#allocation3], %s467
        %p469 = pneg %p65
        %p470 = pneg %p62
        %s471 = sand.u32 %s32, 1
        %s472 = scalar_lea.sflag [#allocation7], %s471
        %s473 = sand.u32 %s78, 1
        %s474 = smul.addr %s473, 8
        %s475 = scalar_lea.vmem [#allocation6], %s474
        %p476 = pneg %p91
        %p477 = pneg %p88
        %p478 = pneg %p112
        %p479 = pneg %p109
        %s480 = sand.u32 %s32, 1
        %s481 = scalar_lea.sflag [#allocation7], %s480
        %s482 = sand.u32 %s125, 1
        %s483 = smul.addr %s482, 192
        %s484 = scalar_lea.vmem [#allocation8], %s483
        %p485 = pneg %p138
        %p486 = pneg %p135
        %p487 = scmp.lt.s32.totalorder %s37, 1
        %s488 = scalar_select %p487, %s37, 1
        %s489 = smul.addr %s488, 8
        %s490 = smul.addr %s489, 8
        %s491 = scalar_lea.vmem %s4, %s490
        %p492 = pneg %p164
        %p493 = pneg %p161
        %p494 = scmp.lt.s32.totalorder %s37, 1
        %s495 = scalar_select %p494, %s37, 1
        %s496 = smul.addr %s495, 4
        %s497 = smul.addr %s496, 8
        %s498 = scalar_lea.vmem %s5, %s497
        %p499 = pneg %p190
        %p500 = pneg %p187
        %p501 = scmp.lt.s32.totalorder %s37, 1
        %s502 = scalar_select %p501, %s37, 1
        %s503 = smul.addr %s502, 8
        %s504 = smul.addr %s503, 8
        %s505 = scalar_lea.vmem %s6, %s504
        %p506 = pneg %p216
        %p507 = pneg %p213
        %s508 = sand.u32 %s229, 1
        %s509 = scalar_lea.sflag [#allocation10], %s508
        %s510 = sand.u32 %s229, 1
        %s511 = scalar_lea.vmem [#allocation9], %s510
        %p512 = pneg %p242
        %p513 = pneg %p239
        %p514 = scmp.lt.s32.totalorder %s37, 1
        %s515 = scalar_select %p514, %s37, 1
        %s516 = smul.addr %s515, 2
        %s517 = smul.addr %s516, 8
        %s518 = scalar_lea.vmem %s8, %s517
        %p519 = pneg %p268
        %p520 = pneg %p265
        %p521 = pneg %p294
        %p522 = pneg %p291
        %s523 = sand.u32 %s281, 1
        %s524 = scalar_lea.sflag [#allocation5], %s523
        %s525 = sand.u32 %s281, 1
        %s526 = smul.addr %s525, 8
        %s527 = scalar_lea.vmem [#allocation11], %s526
        %p528 = scmp.lt.s32.totalorder %s37, 1
        %s529 = scalar_select %p528, %s37, 1
        %s530 = smul.addr %s529, 8
        %s531 = smul.addr %s530, 8
        %s532 = scalar_lea.vmem %s4, %s531
        %p533 = scmp.lt.s32.totalorder %s37, 1
        %s534 = scalar_select %p533, %s37, 1
        %s535 = smul.addr %s534, 4
        %s536 = smul.addr %s535, 8
        %s537 = scalar_lea.vmem %s5, %s536
        %p538 = scmp.lt.s32.totalorder %s37, 1
        %s539 = scalar_select %p538, %s37, 1
        %s540 = smul.addr %s539, 8
        %s541 = smul.addr %s540, 8
        %s542 = scalar_lea.vmem %s6, %s541
        %p543 = scmp.lt.s32.totalorder %s37, 1
        %s544 = scalar_select %p543, %s37, 1
        %s545 = smul.addr %s544, 2
        %s546 = smul.addr %s545, 8
        %s547 = scalar_lea.vmem %s8, %s546
        %p548 = scmp.eq.s32.totalorder %s37, 0
        // Predicated region
        $region73: #{tpu_custom_call.1} parent=55 // pred_check
          %p549 = pneg %p548
        $region74: #{tpu_custom_call.1} parent=55 // pred_check_branch
          %551 = sbr.rel (%p549) target = $region76
        $region75: #{tpu_custom_call.1} parent=55 // pred_region
          %v552 = vld [vmem:[%s433] sm:$0xff]
          %vm553 = vcmask 261120
          %554 = vst.msk [vmem:[#allocation2] sm:$0xff] %vm553, %v552
        $region76: #{tpu_custom_call.1} parent=55 // pred_fallthru
          _
        %v555 = vld [vmem:[#allocation2] sm:$0xff]
        %v556 = vld [vmem:[%s2] sm:$0xff]
        %v557 = vld [vmem:[%s451] sm:$0xff]
        %v558 = vld [vmem:[%s451 + $0x8] sm:$0xff]
        %v559 = vld [vmem:[%s451 + $0x10] sm:$0xff]
        %v560 = vld [vmem:[%s451 + $0x18] sm:$0xff]
        %v561 = vld [vmem:[%s547] sm:$0x1]
        %v562 = vlaneseq
        %v563 = vshrl.u32 %v562, 7
        %v564 = vsub.s32 0, %v563
        %v565 = vrot.slane %v561, %v564
        %vm566 = vcmask 261120
        %v568 = vsel %vm566, %v555, 0
        %570 = vmatprep.subr.mxu0 0.0
        %571 = vmatpush1.msra.mxu0 0.0
        %572 = vmatprep.subr.mxu0 0.0
        %573 = vmatpush1.msra.mxu0 0.0
        %574 = vmatprep.subr.mxu0 0.0
        %575 = vmatpush1.msra.mxu0 0.0
        %576 = vmatprep.subr.mxu0 0.0
        %577 = vmatpush1.msra.mxu0 0.0
        %578 = vmatprep.subr.mxu0 0.0
        %579 = vmatpush1.msra.mxu0 0.0
        %580 = vmatprep.subr.mxu0 0.0
        %581 = vmatpush1.msra.mxu0 0.0
        %582 = vmatprep.subr.mxu0 0.0
        %583 = vmatpush1.msra.mxu0 0.0
        %584 = vmatprep.subr.mxu0 0.0
        %585 = vmatpush1.msra.mxu0 0.0
        %586 = vmatprep.subr.mxu0 0.0
        %587 = vmatpush1.msra.mxu0 0.0
        %588 = vmatprep.subr.mxu0 0.0
        %589 = vmatpush1.msra.mxu0 0.0
        %590 = vmatprep.subr.mxu0 0.0
        %591 = vmatpush1.msra.mxu0 0.0
        %592 = vmatprep.subr.mxu0 0.0
        %593 = vmatpush1.msra.mxu0 0.0
        %594 = vmatprep.subr.mxu0 0.0
        %595 = vmatpush1.msra.mxu0 %v560
        %596 = vmatprep.subr.mxu0 0.0
        %597 = vmatpush1.msra.mxu0 %v559
        %598 = vmatprep.subr.mxu0 0.0
        %599 = vmatpush1.msra.mxu0 %v558
        %600 = vmatprep.subr.mxu0 0.0
        %601 = vmatpush1.msra.mxu0 %v557
        %602 = vmatprep.subr.mxu0 0.0
        %603 = vmatpush2.msra.mxu0 0.0
        %604 = vmatprep.subr.mxu0 0.0
        %605 = vmatpush2.msra.mxu0 0.0
        %606 = vmatprep.subr.mxu0 0.0
        %607 = vmatpush2.msra.mxu0 0.0
        %608 = vmatprep.subr.mxu0 0.0
        %609 = vmatpush2.msra.mxu0 0.0
        %610 = vmatprep.subr.mxu0 0.0
        %611 = vmatpush2.msra.mxu0 0.0
        %612 = vmatprep.subr.mxu0 0.0
        %613 = vmatpush2.msra.mxu0 0.0
        %614 = vmatprep.subr.mxu0 0.0
        %615 = vmatpush2.msra.mxu0 0.0
        %616 = vmatprep.subr.mxu0 0.0
        %617 = vmatpush2.msra.mxu0 0.0
        %618 = vmatprep.subr.mxu0 0.0
        %619 = vmatpush2.msra.mxu0 0.0
        %620 = vmatprep.subr.mxu0 0.0
        %621 = vmatpush2.msra.mxu0 0.0
        %622 = vmatprep.subr.mxu0 0.0
        %623 = vmatpush2.msra.mxu0 0.0
        %624 = vmatprep.subr.mxu0 0.0
        %625 = vmatpush2.msra.mxu0 0.0
        %626 = vmatprep.subr.mxu0 0.0
        %627 = vmatpush2.msra.mxu0 0.0
        %628 = vmatprep.subr.mxu0 0.0
        %629 = vmatpush2.msra.mxu0 0.0
        %630 = vmatprep.subr.mxu0 0.0
        %631 = vmatpush2.msra.mxu0 0.0
        %632 = vmatprep.subr.mxu0 0.0
        %633 = vmatpush2.msra.mxu0 0.0
        %634 = vmatprep.mubr.f32.mxu0 0.0
        %635 = vmatmul.mubr.f32.gmra.mxu0 %v568
        %v636 = vpop.f32.mrf.mxu0
        %v637 = vadd.f32 %v565, %v636
        %v638 = vpop.f32.mrf.mxu0
        %639 = vdwg.mxu0
        %s640 = scalar_lea.vmem %s451, 32 [#allocation8]
        %v641 = vld [vmem:[%s640] sm:$0xff]
        %v642 = vld [vmem:[%s640 + $0x8] sm:$0xff]
        %v643 = vld [vmem:[%s640 + $0x10] sm:$0xff]
        %v644 = vld [vmem:[%s640 + $0x18] sm:$0xff]
        %v645 = vld [vmem:[%s547 + $0x1] sm:$0x1]
        %v646 = vlaneseq
        %v647 = vshrl.u32 %v646, 7
        %v648 = vsub.s32 0, %v647
        %v649 = vrot.slane %v645, %v648
        %650 = vmatprep.subr.mxu0 0.0
        %651 = vmatpush1.msra.mxu0 0.0
        %652 = vmatprep.subr.mxu0 0.0
        %653 = vmatpush1.msra.mxu0 0.0
        %654 = vmatprep.subr.mxu0 0.0
        %655 = vmatpush1.msra.mxu0 0.0
        %656 = vmatprep.subr.mxu0 0.0
        %657 = vmatpush1.msra.mxu0 0.0
        %658 = vmatprep.subr.mxu0 0.0
        %659 = vmatpush1.msra.mxu0 0.0
        %660 = vmatprep.subr.mxu0 0.0
        %661 = vmatpush1.msra.mxu0 0.0
        %662 = vmatprep.subr.mxu0 0.0
        %663 = vmatpush1.msra.mxu0 0.0
        %664 = vmatprep.subr.mxu0 0.0
        %665 = vmatpush1.msra.mxu0 0.0
        %666 = vmatprep.subr.mxu0 0.0
        %667 = vmatpush1.msra.mxu0 0.0
        %668 = vmatprep.subr.mxu0 0.0
        %669 = vmatpush1.msra.mxu0 0.0
        %670 = vmatprep.subr.mxu0 0.0
        %671 = vmatpush1.msra.mxu0 0.0
        %672 = vmatprep.subr.mxu0 0.0
        %673 = vmatpush1.msra.mxu0 0.0
        %674 = vmatprep.subr.mxu0 0.0
        %675 = vmatpush1.msra.mxu0 %v644
        %676 = vmatprep.subr.mxu0 0.0
        %677 = vmatpush1.msra.mxu0 %v643
        %678 = vmatprep.subr.mxu0 0.0
        %679 = vmatpush1.msra.mxu0 %v642
        %680 = vmatprep.subr.mxu0 0.0
        %681 = vmatpush1.msra.mxu0 %v641
        %682 = vmatprep.subr.mxu0 0.0
        %683 = vmatpush2.msra.mxu0 0.0
        %684 = vmatprep.subr.mxu0 0.0
        %685 = vmatpush2.msra.mxu0 0.0
        %686 = vmatprep.subr.mxu0 0.0
        %687 = vmatpush2.msra.mxu0 0.0
        %688 = vmatprep.subr.mxu0 0.0
        %689 = vmatpush2.msra.mxu0 0.0
        %690 = vmatprep.subr.mxu0 0.0
        %691 = vmatpush2.msra.mxu0 0.0
        %692 = vmatprep.subr.mxu0 0.0
        %693 = vmatpush2.msra.mxu0 0.0
        %694 = vmatprep.subr.mxu0 0.0
        %695 = vmatpush2.msra.mxu0 0.0
        %696 = vmatprep.subr.mxu0 0.0
        %697 = vmatpush2.msra.mxu0 0.0
        %698 = vmatprep.subr.mxu0 0.0
        %699 = vmatpush2.msra.mxu0 0.0
        %700 = vmatprep.subr.mxu0 0.0
        %701 = vmatpush2.msra.mxu0 0.0
        %702 = vmatprep.subr.mxu0 0.0
        %703 = vmatpush2.msra.mxu0 0.0
        %704 = vmatprep.subr.mxu0 0.0
        %705 = vmatpush2.msra.mxu0 0.0
        %706 = vmatprep.subr.mxu0 0.0
        %707 = vmatpush2.msra.mxu0 0.0
        %708 = vmatprep.subr.mxu0 0.0
        %709 = vmatpush2.msra.mxu0 0.0
        %710 = vmatprep.subr.mxu0 0.0
        %711 = vmatpush2.msra.mxu0 0.0
        %712 = vmatprep.subr.mxu0 0.0
        %713 = vmatpush2.msra.mxu0 0.0
        %714 = vmatprep.mubr.f32.mxu0 0.0
        %715 = vmatmul.mubr.f32.gmra.mxu0 %v568
        %v716 = vpop.f32.mrf.mxu0
        %v717 = vadd.f32 %v649, %v716
        %v718 = vpop.f32.mrf.mxu0
        %719 = vdwg.mxu0
        %s720 = scalar_lea.vmem %s451, 64 [#allocation8]
        %v721 = vld [vmem:[%s720] sm:$0xff]
        %v722 = vld [vmem:[%s720 + $0x8] sm:$0xff]
        %v723 = vld [vmem:[%s720 + $0x10] sm:$0xff]
        %v724 = vld [vmem:[%s720 + $0x18] sm:$0xff]
        %v725 = vld [vmem:[%s547 + $0x2] sm:$0x1]
        %v726 = vlaneseq
        %v727 = vshrl.u32 %v726, 7
        %v728 = vsub.s32 0, %v727
        %v729 = vrot.slane %v725, %v728
        %730 = vmatprep.subr.mxu0 0.0
        %731 = vmatpush1.msra.mxu0 0.0
        %732 = vmatprep.subr.mxu0 0.0
        %733 = vmatpush1.msra.mxu0 0.0
        %734 = vmatprep.subr.mxu0 0.0
        %735 = vmatpush1.msra.mxu0 0.0
        %736 = vmatprep.subr.mxu0 0.0
        %737 = vmatpush1.msra.mxu0 0.0
        %738 = vmatprep.subr.mxu0 0.0
        %739 = vmatpush1.msra.mxu0 0.0
        %740 = vmatprep.subr.mxu0 0.0
        %741 = vmatpush1.msra.mxu0 0.0
        %742 = vmatprep.subr.mxu0 0.0
        %743 = vmatpush1.msra.mxu0 0.0
        %744 = vmatprep.subr.mxu0 0.0
        %745 = vmatpush1.msra.mxu0 0.0
        %746 = vmatprep.subr.mxu0 0.0
        %747 = vmatpush1.msra.mxu0 0.0
        %748 = vmatprep.subr.mxu0 0.0
        %749 = vmatpush1.msra.mxu0 0.0
        %750 = vmatprep.subr.mxu0 0.0
        %751 = vmatpush1.msra.mxu0 0.0
        %752 = vmatprep.subr.mxu0 0.0
        %753 = vmatpush1.msra.mxu0 0.0
        %754 = vmatprep.subr.mxu0 0.0
        %755 = vmatpush1.msra.mxu0 %v724
        %756 = vmatprep.subr.mxu0 0.0
        %757 = vmatpush1.msra.mxu0 %v723
        %758 = vmatprep.subr.mxu0 0.0
        %759 = vmatpush1.msra.mxu0 %v722
        %760 = vmatprep.subr.mxu0 0.0
        %761 = vmatpush1.msra.mxu0 %v721
        %762 = vmatprep.subr.mxu0 0.0
        %763 = vmatpush2.msra.mxu0 0.0
        %764 = vmatprep.subr.mxu0 0.0
        %765 = vmatpush2.msra.mxu0 0.0
        %766 = vmatprep.subr.mxu0 0.0
        %767 = vmatpush2.msra.mxu0 0.0
        %768 = vmatprep.subr.mxu0 0.0
        %769 = vmatpush2.msra.mxu0 0.0
        %770 = vmatprep.subr.mxu0 0.0
        %771 = vmatpush2.msra.mxu0 0.0
        %772 = vmatprep.subr.mxu0 0.0
        %773 = vmatpush2.msra.mxu0 0.0
        %774 = vmatprep.subr.mxu0 0.0
        %775 = vmatpush2.msra.mxu0 0.0
        %776 = vmatprep.subr.mxu0 0.0
        %777 = vmatpush2.msra.mxu0 0.0
        %778 = vmatprep.subr.mxu0 0.0
        %779 = vmatpush2.msra.mxu0 0.0
        %780 = vmatprep.subr.mxu0 0.0
        %781 = vmatpush2.msra.mxu0 0.0
        %782 = vmatprep.subr.mxu0 0.0
        %783 = vmatpush2.msra.mxu0 0.0
        %784 = vmatprep.subr.mxu0 0.0
        %785 = vmatpush2.msra.mxu0 0.0
        %786 = vmatprep.subr.mxu0 0.0
        %787 = vmatpush2.msra.mxu0 0.0
        %788 = vmatprep.subr.mxu0 0.0
        %789 = vmatpush2.msra.mxu0 0.0
        %790 = vmatprep.subr.mxu0 0.0
        %791 = vmatpush2.msra.mxu0 0.0
        %792 = vmatprep.subr.mxu0 0.0
        %793 = vmatpush2.msra.mxu0 0.0
        %794 = vmatprep.mubr.f32.mxu0 0.0
        %795 = vmatmul.mubr.f32.gmra.mxu0 %v568
        %v796 = vpop.f32.mrf.mxu0
        %v797 = vadd.f32 %v729, %v796
        %v798 = vpop.f32.mrf.mxu0
        %799 = vdwg.mxu0
        %v800 = vld [vmem:[%s532] sm:$0xff]
        %v801 = vld [vmem:[%s532 + $0x8] sm:$0xff]
        %v802 = vld [vmem:[%s532 + $0x10] sm:$0xff]
        %v803 = vld [vmem:[%s532 + $0x18] sm:$0xff]
        %805 = vrot.lane.b32.xlu0 %v637, 120
        %v806 = vpop.permute.xlu0 %805
        %807 = vrot.lane.b32.xlu0 %v637, 112
        %v808 = vpop.permute.xlu0 %807
        %809 = vrot.lane.b32.xlu0 %v637, 104
        %v810 = vpop.permute.xlu0 %809
        %812 = vrot.lane.b32.xlu0 %v717, 120
        %v813 = vpop.permute.xlu0 %812
        %814 = vrot.lane.b32.xlu0 %v717, 112
        %v815 = vpop.permute.xlu0 %814
        %816 = vrot.lane.b32.xlu0 %v717, 104
        %v817 = vpop.permute.xlu0 %816
        %819 = vrot.lane.b32.xlu0 %v797, 120
        %v820 = vpop.permute.xlu0 %819
        %822 = vrot.lane.b32.xlu0 %v797, 112
        %v823 = vpop.permute.xlu0 %822
        %825 = vrot.lane.b32.xlu0 %v797, 104
        %v826 = vpop.permute.xlu0 %825
        %vm828 = vcmask 64512
        %v829 = vsel %vm828, %v637, 0
        %v831 = vsel %vm828, %v717, 0
        %833 = vmatprep.subr.mxu0 0.0
        %834 = vmatpush1.xpose.msra.mxu0 0.0
        %835 = vmatprep.subr.mxu0 0.0
        %836 = vmatpush1.xpose.msra.mxu0 0.0
        %837 = vmatprep.subr.mxu0 0.0
        %838 = vmatpush1.xpose.msra.mxu0 0.0
        %839 = vmatprep.subr.mxu0 0.0
        %840 = vmatpush1.xpose.msra.mxu0 0.0
        %841 = vmatprep.subr.mxu0 0.0
        %842 = vmatpush1.xpose.msra.mxu0 0.0
        %843 = vmatprep.subr.mxu0 0.0
        %844 = vmatpush1.xpose.msra.mxu0 0.0
        %845 = vmatprep.subr.mxu0 0.0
        %846 = vmatpush1.xpose.msra.mxu0 0.0
        %847 = vmatprep.subr.mxu0 0.0
        %848 = vmatpush1.xpose.msra.mxu0 0.0
        %849 = vmatprep.subr.mxu0 0.0
        %850 = vmatpush1.xpose.msra.mxu0 0.0
        %851 = vmatprep.subr.mxu0 0.0
        %852 = vmatpush1.xpose.msra.mxu0 0.0
        %853 = vmatprep.subr.mxu0 0.0
        %854 = vmatpush1.xpose.msra.mxu0 0.0
        %855 = vmatprep.subr.mxu0 0.0
        %856 = vmatpush1.xpose.msra.mxu0 0.0
        %857 = vmatprep.subr.mxu0 0.0
        %858 = vmatpush1.xpose.msra.mxu0 0.0
        %859 = vmatprep.subr.mxu0 0.0
        %860 = vmatpush1.xpose.msra.mxu0 0.0
        %861 = vmatprep.subr.mxu0 0.0
        %862 = vmatpush1.xpose.msra.mxu0 0.0
        %863 = vmatprep.subr.mxu0 0.0
        %864 = vmatpush1.xpose.msra.mxu0 %v831
        %865 = vmatprep.subr.mxu0 0.0
        %866 = vmatpush2.xpose.msra.mxu0 0.0
        %867 = vmatprep.subr.mxu0 0.0
        %868 = vmatpush2.xpose.msra.mxu0 0.0
        %869 = vmatprep.subr.mxu0 0.0
        %870 = vmatpush2.xpose.msra.mxu0 0.0
        %871 = vmatprep.subr.mxu0 0.0
        %872 = vmatpush2.xpose.msra.mxu0 0.0
        %873 = vmatprep.subr.mxu0 0.0
        %874 = vmatpush2.xpose.msra.mxu0 0.0
        %875 = vmatprep.subr.mxu0 0.0
        %876 = vmatpush2.xpose.msra.mxu0 0.0
        %877 = vmatprep.subr.mxu0 0.0
        %878 = vmatpush2.xpose.msra.mxu0 0.0
        %879 = vmatprep.subr.mxu0 0.0
        %880 = vmatpush2.xpose.msra.mxu0 0.0
        %881 = vmatprep.subr.mxu0 0.0
        %882 = vmatpush2.xpose.msra.mxu0 0.0
        %883 = vmatprep.subr.mxu0 0.0
        %884 = vmatpush2.xpose.msra.mxu0 0.0
        %885 = vmatprep.subr.mxu0 0.0
        %886 = vmatpush2.xpose.msra.mxu0 0.0
        %887 = vmatprep.subr.mxu0 0.0
        %888 = vmatpush2.xpose.msra.mxu0 0.0
        %889 = vmatprep.subr.mxu0 0.0
        %890 = vmatpush2.xpose.msra.mxu0 0.0
        %891 = vmatprep.subr.mxu0 0.0
        %892 = vmatpush2.xpose.msra.mxu0 0.0
        %893 = vmatprep.subr.mxu0 0.0
        %894 = vmatpush2.xpose.msra.mxu0 0.0
        %895 = vmatprep.subr.mxu0 0.0
        %896 = vmatpush2.xpose.msra.mxu0 0.0
        %897 = vmatprep.mubr.f32.mxu0 0.0
        %898 = vmatmul.mubr.f32.gmra.mxu0 %v829
        %v899 = vpop.f32.mrf.mxu0
        %v900 = vadd.f32 %v556, %v899
        %v901 = vpop.f32.mrf.mxu0
        %902 = vdwg.mxu0
        %v903 = vsel %vm828, %v806, 0
        %v905 = vsel %vm828, %v813, 0
        %907 = vmatprep.subr.mxu0 0.0
        %908 = vmatpush1.xpose.msra.mxu0 0.0
        %909 = vmatprep.subr.mxu0 0.0
        %910 = vmatpush1.xpose.msra.mxu0 0.0
        %911 = vmatprep.subr.mxu0 0.0
        %912 = vmatpush1.xpose.msra.mxu0 0.0
        %913 = vmatprep.subr.mxu0 0.0
        %914 = vmatpush1.xpose.msra.mxu0 0.0
        %915 = vmatprep.subr.mxu0 0.0
        %916 = vmatpush1.xpose.msra.mxu0 0.0
        %917 = vmatprep.subr.mxu0 0.0
        %918 = vmatpush1.xpose.msra.mxu0 0.0
        %919 = vmatprep.subr.mxu0 0.0
        %920 = vmatpush1.xpose.msra.mxu0 0.0
        %921 = vmatprep.subr.mxu0 0.0
        %922 = vmatpush1.xpose.msra.mxu0 0.0
        %923 = vmatprep.subr.mxu0 0.0
        %924 = vmatpush1.xpose.msra.mxu0 0.0
        %925 = vmatprep.subr.mxu0 0.0
        %926 = vmatpush1.xpose.msra.mxu0 0.0
        %927 = vmatprep.subr.mxu0 0.0
        %928 = vmatpush1.xpose.msra.mxu0 0.0
        %929 = vmatprep.subr.mxu0 0.0
        %930 = vmatpush1.xpose.msra.mxu0 0.0
        %931 = vmatprep.subr.mxu0 0.0
        %932 = vmatpush1.xpose.msra.mxu0 0.0
        %933 = vmatprep.subr.mxu0 0.0
        %934 = vmatpush1.xpose.msra.mxu0 0.0
        %935 = vmatprep.subr.mxu0 0.0
        %936 = vmatpush1.xpose.msra.mxu0 0.0
        %937 = vmatprep.subr.mxu0 0.0
        %938 = vmatpush1.xpose.msra.mxu0 %v905
        %939 = vmatprep.subr.mxu0 0.0
        %940 = vmatpush2.xpose.msra.mxu0 0.0
        %941 = vmatprep.subr.mxu0 0.0
        %942 = vmatpush2.xpose.msra.mxu0 0.0
        %943 = vmatprep.subr.mxu0 0.0
        %944 = vmatpush2.xpose.msra.mxu0 0.0
        %945 = vmatprep.subr.mxu0 0.0
        %946 = vmatpush2.xpose.msra.mxu0 0.0
        %947 = vmatprep.subr.mxu0 0.0
        %948 = vmatpush2.xpose.msra.mxu0 0.0
        %949 = vmatprep.subr.mxu0 0.0
        %950 = vmatpush2.xpose.msra.mxu0 0.0
        %951 = vmatprep.subr.mxu0 0.0
        %952 = vmatpush2.xpose.msra.mxu0 0.0
        %953 = vmatprep.subr.mxu0 0.0
        %954 = vmatpush2.xpose.msra.mxu0 0.0
        %955 = vmatprep.subr.mxu0 0.0
        %956 = vmatpush2.xpose.msra.mxu0 0.0
        %957 = vmatprep.subr.mxu0 0.0
        %958 = vmatpush2.xpose.msra.mxu0 0.0
        %959 = vmatprep.subr.mxu0 0.0
        %960 = vmatpush2.xpose.msra.mxu0 0.0
        %961 = vmatprep.subr.mxu0 0.0
        %962 = vmatpush2.xpose.msra.mxu0 0.0
        %963 = vmatprep.subr.mxu0 0.0
        %964 = vmatpush2.xpose.msra.mxu0 0.0
        %965 = vmatprep.subr.mxu0 0.0
        %966 = vmatpush2.xpose.msra.mxu0 0.0
        %967 = vmatprep.subr.mxu0 0.0
        %968 = vmatpush2.xpose.msra.mxu0 0.0
        %969 = vmatprep.subr.mxu0 0.0
        %970 = vmatpush2.xpose.msra.mxu0 0.0
        %971 = vmatprep.mubr.f32.mxu0 0.0
        %972 = vmatmul.mubr.f32.gmra.mxu0 %v903
        %v973 = vpop.f32.mrf.mxu0
        %v974 = vadd.f32 %v556, %v973
        %v975 = vpop.f32.mrf.mxu0
        %976 = vdwg.mxu0
        %v977 = vsel %vm828, %v808, 0
        %v979 = vsel %vm828, %v815, 0
        %981 = vmatprep.subr.mxu0 0.0
        %982 = vmatpush1.xpose.msra.mxu0 0.0
        %983 = vmatprep.subr.mxu0 0.0
        %984 = vmatpush1.xpose.msra.mxu0 0.0
        %985 = vmatprep.subr.mxu0 0.0
        %986 = vmatpush1.xpose.msra.mxu0 0.0
        %987 = vmatprep.subr.mxu0 0.0
        %988 = vmatpush1.xpose.msra.mxu0 0.0
        %989 = vmatprep.subr.mxu0 0.0
        %990 = vmatpush1.xpose.msra.mxu0 0.0
        %991 = vmatprep.subr.mxu0 0.0
        %992 = vmatpush1.xpose.msra.mxu0 0.0
        %993 = vmatprep.subr.mxu0 0.0
        %994 = vmatpush1.xpose.msra.mxu0 0.0
        %995 = vmatprep.subr.mxu0 0.0
        %996 = vmatpush1.xpose.msra.mxu0 0.0
        %997 = vmatprep.subr.mxu0 0.0
        %998 = vmatpush1.xpose.msra.mxu0 0.0
        %999 = vmatprep.subr.mxu0 0.0
        %1000 = vmatpush1.xpose.msra.mxu0 0.0
        %1001 = vmatprep.subr.mxu0 0.0
        %1002 = vmatpush1.xpose.msra.mxu0 0.0
        %1003 = vmatprep.subr.mxu0 0.0
        %1004 = vmatpush1.xpose.msra.mxu0 0.0
        %1005 = vmatprep.subr.mxu0 0.0
        %1006 = vmatpush1.xpose.msra.mxu0 0.0
        %1007 = vmatprep.subr.mxu0 0.0
        %1008 = vmatpush1.xpose.msra.mxu0 0.0
        %1009 = vmatprep.subr.mxu0 0.0
        %1010 = vmatpush1.xpose.msra.mxu0 0.0
        %1011 = vmatprep.subr.mxu0 0.0
        %1012 = vmatpush1.xpose.msra.mxu0 %v979
        %1013 = vmatprep.subr.mxu0 0.0
        %1014 = vmatpush2.xpose.msra.mxu0 0.0
        %1015 = vmatprep.subr.mxu0 0.0
        %1016 = vmatpush2.xpose.msra.mxu0 0.0
        %1017 = vmatprep.subr.mxu0 0.0
        %1018 = vmatpush2.xpose.msra.mxu0 0.0
        %1019 = vmatprep.subr.mxu0 0.0
        %1020 = vmatpush2.xpose.msra.mxu0 0.0
        %1021 = vmatprep.subr.mxu0 0.0
        %1022 = vmatpush2.xpose.msra.mxu0 0.0
        %1023 = vmatprep.subr.mxu0 0.0
        %1024 = vmatpush2.xpose.msra.mxu0 0.0
        %1025 = vmatprep.subr.mxu0 0.0
        %1026 = vmatpush2.xpose.msra.mxu0 0.0
        %1027 = vmatprep.subr.mxu0 0.0
        %1028 = vmatpush2.xpose.msra.mxu0 0.0
        %1029 = vmatprep.subr.mxu0 0.0
        %1030 = vmatpush2.xpose.msra.mxu0 0.0
        %1031 = vmatprep.subr.mxu0 0.0
        %1032 = vmatpush2.xpose.msra.mxu0 0.0
        %1033 = vmatprep.subr.mxu0 0.0
        %1034 = vmatpush2.xpose.msra.mxu0 0.0
        %1035 = vmatprep.subr.mxu0 0.0
        %1036 = vmatpush2.xpose.msra.mxu0 0.0
        %1037 = vmatprep.subr.mxu0 0.0
        %1038 = vmatpush2.xpose.msra.mxu0 0.0
        %1039 = vmatprep.subr.mxu0 0.0
        %1040 = vmatpush2.xpose.msra.mxu0 0.0
        %1041 = vmatprep.subr.mxu0 0.0
        %1042 = vmatpush2.xpose.msra.mxu0 0.0
        %1043 = vmatprep.subr.mxu0 0.0
        %1044 = vmatpush2.xpose.msra.mxu0 0.0
        %1045 = vmatprep.mubr.f32.mxu0 0.0
        %1046 = vmatmul.mubr.f32.gmra.mxu0 %v977
        %v1047 = vpop.f32.mrf.mxu0
        %v1048 = vadd.f32 %v556, %v1047
        %v1049 = vpop.f32.mrf.mxu0
        %1050 = vdwg.mxu0
        %v1051 = vsel %vm828, %v810, 0
        %v1053 = vsel %vm828, %v817, 0
        %1055 = vmatprep.subr.mxu0 0.0
        %1056 = vmatpush1.xpose.msra.mxu0 0.0
        %1057 = vmatprep.subr.mxu0 0.0
        %1058 = vmatpush1.xpose.msra.mxu0 0.0
        %1059 = vmatprep.subr.mxu0 0.0
        %1060 = vmatpush1.xpose.msra.mxu0 0.0
        %1061 = vmatprep.subr.mxu0 0.0
        %1062 = vmatpush1.xpose.msra.mxu0 0.0
        %1063 = vmatprep.subr.mxu0 0.0
        %1064 = vmatpush1.xpose.msra.mxu0 0.0
        %1065 = vmatprep.subr.mxu0 0.0
        %1066 = vmatpush1.xpose.msra.mxu0 0.0
        %1067 = vmatprep.subr.mxu0 0.0
        %1068 = vmatpush1.xpose.msra.mxu0 0.0
        %1069 = vmatprep.subr.mxu0 0.0
        %1070 = vmatpush1.xpose.msra.mxu0 0.0
        %1071 = vmatprep.subr.mxu0 0.0
        %1072 = vmatpush1.xpose.msra.mxu0 0.0
        %1073 = vmatprep.subr.mxu0 0.0
        %1074 = vmatpush1.xpose.msra.mxu0 0.0
        %1075 = vmatprep.subr.mxu0 0.0
        %1076 = vmatpush1.xpose.msra.mxu0 0.0
        %1077 = vmatprep.subr.mxu0 0.0
        %1078 = vmatpush1.xpose.msra.mxu0 0.0
        %1079 = vmatprep.subr.mxu0 0.0
        %1080 = vmatpush1.xpose.msra.mxu0 0.0
        %1081 = vmatprep.subr.mxu0 0.0
        %1082 = vmatpush1.xpose.msra.mxu0 0.0
        %1083 = vmatprep.subr.mxu0 0.0
        %1084 = vmatpush1.xpose.msra.mxu0 0.0
        %1085 = vmatprep.subr.mxu0 0.0
        %1086 = vmatpush1.xpose.msra.mxu0 %v1053
        %1087 = vmatprep.subr.mxu0 0.0
        %1088 = vmatpush2.xpose.msra.mxu0 0.0
        %1089 = vmatprep.subr.mxu0 0.0
        %1090 = vmatpush2.xpose.msra.mxu0 0.0
        %1091 = vmatprep.subr.mxu0 0.0
        %1092 = vmatpush2.xpose.msra.mxu0 0.0
        %1093 = vmatprep.subr.mxu0 0.0
        %1094 = vmatpush2.xpose.msra.mxu0 0.0
        %1095 = vmatprep.subr.mxu0 0.0
        %1096 = vmatpush2.xpose.msra.mxu0 0.0
        %1097 = vmatprep.subr.mxu0 0.0
        %1098 = vmatpush2.xpose.msra.mxu0 0.0
        %1099 = vmatprep.subr.mxu0 0.0
        %1100 = vmatpush2.xpose.msra.mxu0 0.0
        %1101 = vmatprep.subr.mxu0 0.0
        %1102 = vmatpush2.xpose.msra.mxu0 0.0
        %1103 = vmatprep.subr.mxu0 0.0
        %1104 = vmatpush2.xpose.msra.mxu0 0.0
        %1105 = vmatprep.subr.mxu0 0.0
        %1106 = vmatpush2.xpose.msra.mxu0 0.0
        %1107 = vmatprep.subr.mxu0 0.0
        %1108 = vmatpush2.xpose.msra.mxu0 0.0
        %1109 = vmatprep.subr.mxu0 0.0
        %1110 = vmatpush2.xpose.msra.mxu0 0.0
        %1111 = vmatprep.subr.mxu0 0.0
        %1112 = vmatpush2.xpose.msra.mxu0 0.0
        %1113 = vmatprep.subr.mxu0 0.0
        %1114 = vmatpush2.xpose.msra.mxu0 0.0
        %1115 = vmatprep.subr.mxu0 0.0
        %1116 = vmatpush2.xpose.msra.mxu0 0.0
        %1117 = vmatprep.subr.mxu0 0.0
        %1118 = vmatpush2.xpose.msra.mxu0 0.0
        %1119 = vmatprep.mubr.f32.mxu0 0.0
        %1120 = vmatmul.mubr.f32.gmra.mxu0 %v1051
        %v1121 = vpop.f32.mrf.mxu0
        %v1122 = vadd.f32 %v556, %v1121
        %v1123 = vpop.f32.mrf.mxu0
        %1124 = vdwg.mxu0
        %v1125 = vsel %vm828, %v900, -inf
        %1126 = vmax.xlane.f32.xlu0 %v1125
        %v1127 = vpop.xlane.xlu0 %1126
        %v1128 = vsel %vm828, %v974, -inf
        %1129 = vmax.xlane.f32.xlu0 %v1128
        %v1130 = vpop.xlane.xlu0 %1129
        %v1131 = vsel %vm828, %v1048, -inf
        %1132 = vmax.xlane.f32.xlu0 %v1131
        %v1133 = vpop.xlane.xlu0 %1132
        %v1134 = vsel %vm828, %v1122, -inf
        %1135 = vmax.xlane.f32.xlu0 %v1134
        %v1136 = vpop.xlane.xlu0 %1135
        %v1137 = vsub.f32 %v900, %v1127
        %v1138 = vsub.f32 %v974, %v1130
        %v1139 = vsub.f32 %v1048, %v1133
        %v1140 = vsub.f32 %v1122, %v1136
        %v1141 = vmul.f32 %v1137, 1.442695
        %v1142 = vpow.pop %v1141
        %v1143 = vmul.f32 %v1138, 1.442695
        %v1144 = vpow.pop %v1143
        %v1145 = vmul.f32 %v1139, 1.442695
        %v1146 = vpow.pop %v1145
        %v1147 = vmul.f32 %v1140, 1.442695
        %v1148 = vpow.pop %v1147
        %v1149 = vsel %vm828, %v1142, 0.0
        %1150 = vadd.xlane.f32.xlu0 %v1149
        %v1151 = vpop.xlane.xlu0 %1150
        %v1152 = vsel %vm828, %v1144, 0.0
        %1153 = vadd.xlane.f32.xlu0 %v1152
        %v1154 = vpop.xlane.xlu0 %1153
        %v1155 = vsel %vm828, %v1146, 0.0
        %1156 = vadd.xlane.f32.xlu0 %v1155
        %v1157 = vpop.xlane.xlu0 %1156
        %v1158 = vsel %vm828, %v1148, 0.0
        %1159 = vadd.xlane.f32.xlu0 %v1158
        %v1160 = vpop.xlane.xlu0 %1159
        %v1161 = vrcp.pop %v1151
        %v1162 = vrcp.pop %v1154
        %v1163 = vrcp.pop %v1157
        %v1164 = vrcp.pop %v1160
        %v1165 = vmul.f32 %v1142, %v1161
        %v1166 = vmul.f32 %v1144, %v1162
        %v1167 = vmul.f32 %v1146, %v1163
        %v1168 = vmul.f32 %v1148, %v1164
        %v1170 = vsel %vm828, %v1165, 0
        %1172 = vmatprep.subr.mxu0 0.0
        %1173 = vmatpush1.msra.mxu0 0.0
        %1174 = vmatprep.subr.mxu0 0.0
        %1175 = vmatpush1.msra.mxu0 0.0
        %1176 = vmatprep.subr.mxu0 0.0
        %1177 = vmatpush1.msra.mxu0 0.0
        %1178 = vmatprep.subr.mxu0 0.0
        %1179 = vmatpush1.msra.mxu0 0.0
        %1180 = vmatprep.subr.mxu0 0.0
        %1181 = vmatpush1.msra.mxu0 0.0
        %1182 = vmatprep.subr.mxu0 0.0
        %1183 = vmatpush1.msra.mxu0 0.0
        %1184 = vmatprep.subr.mxu0 0.0
        %1185 = vmatpush1.msra.mxu0 0.0
        %1186 = vmatprep.subr.mxu0 0.0
        %1187 = vmatpush1.msra.mxu0 0.0
        %1188 = vmatprep.subr.mxu0 0.0
        %1189 = vmatpush1.msra.mxu0 0.0
        %1190 = vmatprep.subr.mxu0 0.0
        %1191 = vmatpush1.msra.mxu0 0.0
        %1192 = vmatprep.subr.mxu0 0.0
        %1193 = vmatpush1.msra.mxu0 0.0
        %1194 = vmatprep.subr.mxu0 0.0
        %1195 = vmatpush1.msra.mxu0 0.0
        %1196 = vmatprep.subr.mxu0 0.0
        %1197 = vmatpush1.msra.mxu0 0.0
        %1198 = vmatprep.subr.mxu0 0.0
        %1199 = vmatpush1.msra.mxu0 0.0
        %1200 = vmatprep.subr.mxu0 0.0
        %1201 = vmatpush1.msra.mxu0 0.0
        %1202 = vmatprep.subr.mxu0 0.0
        %1203 = vmatpush1.msra.mxu0 %v797
        %1204 = vmatprep.subr.mxu0 0.0
        %1205 = vmatpush2.msra.mxu0 0.0
        %1206 = vmatprep.subr.mxu0 0.0
        %1207 = vmatpush2.msra.mxu0 0.0
        %1208 = vmatprep.subr.mxu0 0.0
        %1209 = vmatpush2.msra.mxu0 0.0
        %1210 = vmatprep.subr.mxu0 0.0
        %1211 = vmatpush2.msra.mxu0 0.0
        %1212 = vmatprep.subr.mxu0 0.0
        %1213 = vmatpush2.msra.mxu0 0.0
        %1214 = vmatprep.subr.mxu0 0.0
        %1215 = vmatpush2.msra.mxu0 0.0
        %1216 = vmatprep.subr.mxu0 0.0
        %1217 = vmatpush2.msra.mxu0 0.0
        %1218 = vmatprep.subr.mxu0 0.0
        %1219 = vmatpush2.msra.mxu0 0.0
        %1220 = vmatprep.subr.mxu0 0.0
        %1221 = vmatpush2.msra.mxu0 0.0
        %1222 = vmatprep.subr.mxu0 0.0
        %1223 = vmatpush2.msra.mxu0 0.0
        %1224 = vmatprep.subr.mxu0 0.0
        %1225 = vmatpush2.msra.mxu0 0.0
        %1226 = vmatprep.subr.mxu0 0.0
        %1227 = vmatpush2.msra.mxu0 0.0
        %1228 = vmatprep.subr.mxu0 0.0
        %1229 = vmatpush2.msra.mxu0 0.0
        %1230 = vmatprep.subr.mxu0 0.0
        %1231 = vmatpush2.msra.mxu0 0.0
        %1232 = vmatprep.subr.mxu0 0.0
        %1233 = vmatpush2.msra.mxu0 0.0
        %1234 = vmatprep.subr.mxu0 0.0
        %1235 = vmatpush2.msra.mxu0 0.0
        %1236 = vmatprep.mubr.f32.mxu0 0.0
        %1237 = vmatmul.mubr.f32.gmra.mxu0 %v1170
        %v1238 = vpop.f32.mrf.mxu0
        %v1239 = vadd.f32 0.0, %v1238
        %v1240 = vpop.f32.mrf.mxu0
        %1241 = vdwg.mxu0
        %v1243 = vsel %vm828, %v1166, 0
        %1245 = vmatprep.subr.mxu0 0.0
        %1246 = vmatpush1.msra.mxu0 0.0
        %1247 = vmatprep.subr.mxu0 0.0
        %1248 = vmatpush1.msra.mxu0 0.0
        %1249 = vmatprep.subr.mxu0 0.0
        %1250 = vmatpush1.msra.mxu0 0.0
        %1251 = vmatprep.subr.mxu0 0.0
        %1252 = vmatpush1.msra.mxu0 0.0
        %1253 = vmatprep.subr.mxu0 0.0
        %1254 = vmatpush1.msra.mxu0 0.0
        %1255 = vmatprep.subr.mxu0 0.0
        %1256 = vmatpush1.msra.mxu0 0.0
        %1257 = vmatprep.subr.mxu0 0.0
        %1258 = vmatpush1.msra.mxu0 0.0
        %1259 = vmatprep.subr.mxu0 0.0
        %1260 = vmatpush1.msra.mxu0 0.0
        %1261 = vmatprep.subr.mxu0 0.0
        %1262 = vmatpush1.msra.mxu0 0.0
        %1263 = vmatprep.subr.mxu0 0.0
        %1264 = vmatpush1.msra.mxu0 0.0
        %1265 = vmatprep.subr.mxu0 0.0
        %1266 = vmatpush1.msra.mxu0 0.0
        %1267 = vmatprep.subr.mxu0 0.0
        %1268 = vmatpush1.msra.mxu0 0.0
        %1269 = vmatprep.subr.mxu0 0.0
        %1270 = vmatpush1.msra.mxu0 0.0
        %1271 = vmatprep.subr.mxu0 0.0
        %1272 = vmatpush1.msra.mxu0 0.0
        %1273 = vmatprep.subr.mxu0 0.0
        %1274 = vmatpush1.msra.mxu0 0.0
        %1275 = vmatprep.subr.mxu0 0.0
        %1276 = vmatpush1.msra.mxu0 %v820
        %1277 = vmatprep.subr.mxu0 0.0
        %1278 = vmatpush2.msra.mxu0 0.0
        %1279 = vmatprep.subr.mxu0 0.0
        %1280 = vmatpush2.msra.mxu0 0.0
        %1281 = vmatprep.subr.mxu0 0.0
        %1282 = vmatpush2.msra.mxu0 0.0
        %1283 = vmatprep.subr.mxu0 0.0
        %1284 = vmatpush2.msra.mxu0 0.0
        %1285 = vmatprep.subr.mxu0 0.0
        %1286 = vmatpush2.msra.mxu0 0.0
        %1287 = vmatprep.subr.mxu0 0.0
        %1288 = vmatpush2.msra.mxu0 0.0
        %1289 = vmatprep.subr.mxu0 0.0
        %1290 = vmatpush2.msra.mxu0 0.0
        %1291 = vmatprep.subr.mxu0 0.0
        %1292 = vmatpush2.msra.mxu0 0.0
        %1293 = vmatprep.subr.mxu0 0.0
        %1294 = vmatpush2.msra.mxu0 0.0
        %1295 = vmatprep.subr.mxu0 0.0
        %1296 = vmatpush2.msra.mxu0 0.0
        %1297 = vmatprep.subr.mxu0 0.0
        %1298 = vmatpush2.msra.mxu0 0.0
        %1299 = vmatprep.subr.mxu0 0.0
        %1300 = vmatpush2.msra.mxu0 0.0
        %1301 = vmatprep.subr.mxu0 0.0
        %1302 = vmatpush2.msra.mxu0 0.0
        %1303 = vmatprep.subr.mxu0 0.0
        %1304 = vmatpush2.msra.mxu0 0.0
        %1305 = vmatprep.subr.mxu0 0.0
        %1306 = vmatpush2.msra.mxu0 0.0
        %1307 = vmatprep.subr.mxu0 0.0
        %1308 = vmatpush2.msra.mxu0 0.0
        %1309 = vmatprep.mubr.f32.mxu0 0.0
        %1310 = vmatmul.mubr.f32.gmra.mxu0 %v1243
        %v1311 = vpop.f32.mrf.mxu0
        %v1312 = vadd.f32 0.0, %v1311
        %v1313 = vpop.f32.mrf.mxu0
        %1314 = vdwg.mxu0
        %v1316 = vsel %vm828, %v1167, 0
        %1318 = vmatprep.subr.mxu0 0.0
        %1319 = vmatpush1.msra.mxu0 0.0
        %1320 = vmatprep.subr.mxu0 0.0
        %1321 = vmatpush1.msra.mxu0 0.0
        %1322 = vmatprep.subr.mxu0 0.0
        %1323 = vmatpush1.msra.mxu0 0.0
        %1324 = vmatprep.subr.mxu0 0.0
        %1325 = vmatpush1.msra.mxu0 0.0
        %1326 = vmatprep.subr.mxu0 0.0
        %1327 = vmatpush1.msra.mxu0 0.0
        %1328 = vmatprep.subr.mxu0 0.0
        %1329 = vmatpush1.msra.mxu0 0.0
        %1330 = vmatprep.subr.mxu0 0.0
        %1331 = vmatpush1.msra.mxu0 0.0
        %1332 = vmatprep.subr.mxu0 0.0
        %1333 = vmatpush1.msra.mxu0 0.0
        %1334 = vmatprep.subr.mxu0 0.0
        %1335 = vmatpush1.msra.mxu0 0.0
        %1336 = vmatprep.subr.mxu0 0.0
        %1337 = vmatpush1.msra.mxu0 0.0
        %1338 = vmatprep.subr.mxu0 0.0
        %1339 = vmatpush1.msra.mxu0 0.0
        %1340 = vmatprep.subr.mxu0 0.0
        %1341 = vmatpush1.msra.mxu0 0.0
        %1342 = vmatprep.subr.mxu0 0.0
        %1343 = vmatpush1.msra.mxu0 0.0
        %1344 = vmatprep.subr.mxu0 0.0
        %1345 = vmatpush1.msra.mxu0 0.0
        %1346 = vmatprep.subr.mxu0 0.0
        %1347 = vmatpush1.msra.mxu0 0.0
        %1348 = vmatprep.subr.mxu0 0.0
        %1349 = vmatpush1.msra.mxu0 %v823
        %1350 = vmatprep.subr.mxu0 0.0
        %1351 = vmatpush2.msra.mxu0 0.0
        %1352 = vmatprep.subr.mxu0 0.0
        %1353 = vmatpush2.msra.mxu0 0.0
        %1354 = vmatprep.subr.mxu0 0.0
        %1355 = vmatpush2.msra.mxu0 0.0
        %1356 = vmatprep.subr.mxu0 0.0
        %1357 = vmatpush2.msra.mxu0 0.0
        %1358 = vmatprep.subr.mxu0 0.0
        %1359 = vmatpush2.msra.mxu0 0.0
        %1360 = vmatprep.subr.mxu0 0.0
        %1361 = vmatpush2.msra.mxu0 0.0
        %1362 = vmatprep.subr.mxu0 0.0
        %1363 = vmatpush2.msra.mxu0 0.0
        %1364 = vmatprep.subr.mxu0 0.0
        %1365 = vmatpush2.msra.mxu0 0.0
        %1366 = vmatprep.subr.mxu0 0.0
        %1367 = vmatpush2.msra.mxu0 0.0
        %1368 = vmatprep.subr.mxu0 0.0
        %1369 = vmatpush2.msra.mxu0 0.0
        %1370 = vmatprep.subr.mxu0 0.0
        %1371 = vmatpush2.msra.mxu0 0.0
        %1372 = vmatprep.subr.mxu0 0.0
        %1373 = vmatpush2.msra.mxu0 0.0
        %1374 = vmatprep.subr.mxu0 0.0
        %1375 = vmatpush2.msra.mxu0 0.0
        %1376 = vmatprep.subr.mxu0 0.0
        %1377 = vmatpush2.msra.mxu0 0.0
        %1378 = vmatprep.subr.mxu0 0.0
        %1379 = vmatpush2.msra.mxu0 0.0
        %1380 = vmatprep.subr.mxu0 0.0
        %1381 = vmatpush2.msra.mxu0 0.0
        %1382 = vmatprep.mubr.f32.mxu0 0.0
        %1383 = vmatmul.mubr.f32.gmra.mxu0 %v1316
        %v1384 = vpop.f32.mrf.mxu0
        %v1385 = vadd.f32 0.0, %v1384
        %v1386 = vpop.f32.mrf.mxu0
        %1387 = vdwg.mxu0
        %v1389 = vsel %vm828, %v1168, 0
        %1391 = vmatprep.subr.mxu0 0.0
        %1392 = vmatpush1.msra.mxu0 0.0
        %1393 = vmatprep.subr.mxu0 0.0
        %1394 = vmatpush1.msra.mxu0 0.0
        %1395 = vmatprep.subr.mxu0 0.0
        %1396 = vmatpush1.msra.mxu0 0.0
        %1397 = vmatprep.subr.mxu0 0.0
        %1398 = vmatpush1.msra.mxu0 0.0
        %1399 = vmatprep.subr.mxu0 0.0
        %1400 = vmatpush1.msra.mxu0 0.0
        %1401 = vmatprep.subr.mxu0 0.0
        %1402 = vmatpush1.msra.mxu0 0.0
        %1403 = vmatprep.subr.mxu0 0.0
        %1404 = vmatpush1.msra.mxu0 0.0
        %1405 = vmatprep.subr.mxu0 0.0
        %1406 = vmatpush1.msra.mxu0 0.0
        %1407 = vmatprep.subr.mxu0 0.0
        %1408 = vmatpush1.msra.mxu0 0.0
        %1409 = vmatprep.subr.mxu0 0.0
        %1410 = vmatpush1.msra.mxu0 0.0
        %1411 = vmatprep.subr.mxu0 0.0
        %1412 = vmatpush1.msra.mxu0 0.0
        %1413 = vmatprep.subr.mxu0 0.0
        %1414 = vmatpush1.msra.mxu0 0.0
        %1415 = vmatprep.subr.mxu0 0.0
        %1416 = vmatpush1.msra.mxu0 0.0
        %1417 = vmatprep.subr.mxu0 0.0
        %1418 = vmatpush1.msra.mxu0 0.0
        %1419 = vmatprep.subr.mxu0 0.0
        %1420 = vmatpush1.msra.mxu0 0.0
        %1421 = vmatprep.subr.mxu0 0.0
        %1422 = vmatpush1.msra.mxu0 %v826
        %1423 = vmatprep.subr.mxu0 0.0
        %1424 = vmatpush2.msra.mxu0 0.0
        %1425 = vmatprep.subr.mxu0 0.0
        %1426 = vmatpush2.msra.mxu0 0.0
        %1427 = vmatprep.subr.mxu0 0.0
        %1428 = vmatpush2.msra.mxu0 0.0
        %1429 = vmatprep.subr.mxu0 0.0
        %1430 = vmatpush2.msra.mxu0 0.0
        %1431 = vmatprep.subr.mxu0 0.0
        %1432 = vmatpush2.msra.mxu0 0.0
        %1433 = vmatprep.subr.mxu0 0.0
        %1434 = vmatpush2.msra.mxu0 0.0
        %1435 = vmatprep.subr.mxu0 0.0
        %1436 = vmatpush2.msra.mxu0 0.0
        %1437 = vmatprep.subr.mxu0 0.0
        %1438 = vmatpush2.msra.mxu0 0.0
        %1439 = vmatprep.subr.mxu0 0.0
        %1440 = vmatpush2.msra.mxu0 0.0
        %1441 = vmatprep.subr.mxu0 0.0
        %1442 = vmatpush2.msra.mxu0 0.0
        %1443 = vmatprep.subr.mxu0 0.0
        %1444 = vmatpush2.msra.mxu0 0.0
        %1445 = vmatprep.subr.mxu0 0.0
        %1446 = vmatpush2.msra.mxu0 0.0
        %1447 = vmatprep.subr.mxu0 0.0
        %1448 = vmatpush2.msra.mxu0 0.0
        %1449 = vmatprep.subr.mxu0 0.0
        %1450 = vmatpush2.msra.mxu0 0.0
        %1451 = vmatprep.subr.mxu0 0.0
        %1452 = vmatpush2.msra.mxu0 0.0
        %1453 = vmatprep.subr.mxu0 0.0
        %1454 = vmatpush2.msra.mxu0 0.0
        %1455 = vmatprep.mubr.f32.mxu0 0.0
        %1456 = vmatmul.mubr.f32.gmra.mxu0 %v1389
        %v1457 = vpop.f32.mrf.mxu0
        %v1458 = vadd.f32 0.0, %v1457
        %v1459 = vpop.f32.mrf.mxu0
        %1460 = vdwg.mxu0
        %v1462 = vsel %vm828, %v1312, 0
        %1464 = vmatprep.subr.mxu0 0.0
        %1465 = vmatpush1.msra.mxu0 0.0
        %1466 = vmatprep.subr.mxu0 0.0
        %1467 = vmatpush1.msra.mxu0 0.0
        %1468 = vmatprep.subr.mxu0 0.0
        %1469 = vmatpush1.msra.mxu0 0.0
        %1470 = vmatprep.subr.mxu0 0.0
        %1471 = vmatpush1.msra.mxu0 0.0
        %1472 = vmatprep.subr.mxu0 0.0
        %1473 = vmatpush1.msra.mxu0 0.0
        %1474 = vmatprep.subr.mxu0 0.0
        %1475 = vmatpush1.msra.mxu0 0.0
        %1476 = vmatprep.subr.mxu0 0.0
        %1477 = vmatpush1.msra.mxu0 0.0
        %1478 = vmatprep.subr.mxu0 0.0
        %1479 = vmatpush1.msra.mxu0 0.0
        %1480 = vmatprep.subr.mxu0 0.0
        %1481 = vmatpush1.msra.mxu0 0.0
        %1482 = vmatprep.subr.mxu0 0.0
        %1483 = vmatpush1.msra.mxu0 0.0
        %1484 = vmatprep.subr.mxu0 0.0
        %1485 = vmatpush1.msra.mxu0 0.0
        %1486 = vmatprep.subr.mxu0 0.0
        %1487 = vmatpush1.msra.mxu0 0.0
        %1488 = vmatprep.subr.mxu0 0.0
        %1489 = vmatpush1.msra.mxu0 0.0
        %1490 = vmatprep.subr.mxu0 0.0
        %1491 = vmatpush1.msra.mxu0 0.0
        %1492 = vmatprep.subr.mxu0 0.0
        %1493 = vmatpush1.msra.mxu0 0.0
        %1494 = vmatprep.subr.mxu0 0.0
        %1495 = vmatpush1.msra.mxu0 %v801
        %1496 = vmatprep.subr.mxu0 0.0
        %1497 = vmatpush2.msra.mxu0 0.0
        %1498 = vmatprep.subr.mxu0 0.0
        %1499 = vmatpush2.msra.mxu0 0.0
        %1500 = vmatprep.subr.mxu0 0.0
        %1501 = vmatpush2.msra.mxu0 0.0
        %1502 = vmatprep.subr.mxu0 0.0
        %1503 = vmatpush2.msra.mxu0 0.0
        %1504 = vmatprep.subr.mxu0 0.0
        %1505 = vmatpush2.msra.mxu0 0.0
        %1506 = vmatprep.subr.mxu0 0.0
        %1507 = vmatpush2.msra.mxu0 0.0
        %1508 = vmatprep.subr.mxu0 0.0
        %1509 = vmatpush2.msra.mxu0 0.0
        %1510 = vmatprep.subr.mxu0 0.0
        %1511 = vmatpush2.msra.mxu0 0.0
        %1512 = vmatprep.subr.mxu0 0.0
        %1513 = vmatpush2.msra.mxu0 0.0
        %1514 = vmatprep.subr.mxu0 0.0
        %1515 = vmatpush2.msra.mxu0 0.0
        %1516 = vmatprep.subr.mxu0 0.0
        %1517 = vmatpush2.msra.mxu0 0.0
        %1518 = vmatprep.subr.mxu0 0.0
        %1519 = vmatpush2.msra.mxu0 0.0
        %1520 = vmatprep.subr.mxu0 0.0
        %1521 = vmatpush2.msra.mxu0 0.0
        %1522 = vmatprep.subr.mxu0 0.0
        %1523 = vmatpush2.msra.mxu0 0.0
        %1524 = vmatprep.subr.mxu0 0.0
        %1525 = vmatpush2.msra.mxu0 0.0
        %1526 = vmatprep.subr.mxu0 0.0
        %1527 = vmatpush2.msra.mxu0 0.0
        %1528 = vmatprep.mubr.f32.mxu0 0.0
        %1529 = vmatmul.mubr.f32.gmra.mxu0 %v1462
        %v1530 = vpop.f32.mrf.mxu0
        %v1531 = vadd.f32 0.0, %v1530
        %v1532 = vpop.f32.mrf.mxu0
        %1533 = vdwg.mxu0
        %v1535 = vsel %vm828, %v1239, 0
        %1537 = vmatprep.subr.mxu0 0.0
        %1538 = vmatpush1.msra.mxu0 0.0
        %1539 = vmatprep.subr.mxu0 0.0
        %1540 = vmatpush1.msra.mxu0 0.0
        %1541 = vmatprep.subr.mxu0 0.0
        %1542 = vmatpush1.msra.mxu0 0.0
        %1543 = vmatprep.subr.mxu0 0.0
        %1544 = vmatpush1.msra.mxu0 0.0
        %1545 = vmatprep.subr.mxu0 0.0
        %1546 = vmatpush1.msra.mxu0 0.0
        %1547 = vmatprep.subr.mxu0 0.0
        %1548 = vmatpush1.msra.mxu0 0.0
        %1549 = vmatprep.subr.mxu0 0.0
        %1550 = vmatpush1.msra.mxu0 0.0
        %1551 = vmatprep.subr.mxu0 0.0
        %1552 = vmatpush1.msra.mxu0 0.0
        %1553 = vmatprep.subr.mxu0 0.0
        %1554 = vmatpush1.msra.mxu0 0.0
        %1555 = vmatprep.subr.mxu0 0.0
        %1556 = vmatpush1.msra.mxu0 0.0
        %1557 = vmatprep.subr.mxu0 0.0
        %1558 = vmatpush1.msra.mxu0 0.0
        %1559 = vmatprep.subr.mxu0 0.0
        %1560 = vmatpush1.msra.mxu0 0.0
        %1561 = vmatprep.subr.mxu0 0.0
        %1562 = vmatpush1.msra.mxu0 0.0
        %1563 = vmatprep.subr.mxu0 0.0
        %1564 = vmatpush1.msra.mxu0 0.0
        %1565 = vmatprep.subr.mxu0 0.0
        %1566 = vmatpush1.msra.mxu0 0.0
        %1567 = vmatprep.subr.mxu0 0.0
        %1568 = vmatpush1.msra.mxu0 %v800
        %1569 = vmatprep.subr.mxu0 0.0
        %1570 = vmatpush2.msra.mxu0 0.0
        %1571 = vmatprep.subr.mxu0 0.0
        %1572 = vmatpush2.msra.mxu0 0.0
        %1573 = vmatprep.subr.mxu0 0.0
        %1574 = vmatpush2.msra.mxu0 0.0
        %1575 = vmatprep.subr.mxu0 0.0
        %1576 = vmatpush2.msra.mxu0 0.0
        %1577 = vmatprep.subr.mxu0 0.0
        %1578 = vmatpush2.msra.mxu0 0.0
        %1579 = vmatprep.subr.mxu0 0.0
        %1580 = vmatpush2.msra.mxu0 0.0
        %1581 = vmatprep.subr.mxu0 0.0
        %1582 = vmatpush2.msra.mxu0 0.0
        %1583 = vmatprep.subr.mxu0 0.0
        %1584 = vmatpush2.msra.mxu0 0.0
        %1585 = vmatprep.subr.mxu0 0.0
        %1586 = vmatpush2.msra.mxu0 0.0
        %1587 = vmatprep.subr.mxu0 0.0
        %1588 = vmatpush2.msra.mxu0 0.0
        %1589 = vmatprep.subr.mxu0 0.0
        %1590 = vmatpush2.msra.mxu0 0.0
        %1591 = vmatprep.subr.mxu0 0.0
        %1592 = vmatpush2.msra.mxu0 0.0
        %1593 = vmatprep.subr.mxu0 0.0
        %1594 = vmatpush2.msra.mxu0 0.0
        %1595 = vmatprep.subr.mxu0 0.0
        %1596 = vmatpush2.msra.mxu0 0.0
        %1597 = vmatprep.subr.mxu0 0.0
        %1598 = vmatpush2.msra.mxu0 0.0
        %1599 = vmatprep.subr.mxu0 0.0
        %1600 = vmatpush2.msra.mxu0 0.0
        %1601 = vmatprep.mubr.f32.mxu0 0.0
        %1602 = vmatmul.mubr.f32.gmra.mxu0 %v1535
        %v1603 = vpop.f32.mrf.mxu0
        %v1604 = vadd.f32 %v1531, %v1603
        %v1605 = vpop.f32.mrf.mxu0
        %1606 = vdwg.mxu0
        %v1608 = vsel %vm828, %v1385, 0
        %1610 = vmatprep.subr.mxu0 0.0
        %1611 = vmatpush1.msra.mxu0 0.0
        %1612 = vmatprep.subr.mxu0 0.0
        %1613 = vmatpush1.msra.mxu0 0.0
        %1614 = vmatprep.subr.mxu0 0.0
        %1615 = vmatpush1.msra.mxu0 0.0
        %1616 = vmatprep.subr.mxu0 0.0
        %1617 = vmatpush1.msra.mxu0 0.0
        %1618 = vmatprep.subr.mxu0 0.0
        %1619 = vmatpush1.msra.mxu0 0.0
        %1620 = vmatprep.subr.mxu0 0.0
        %1621 = vmatpush1.msra.mxu0 0.0
        %1622 = vmatprep.subr.mxu0 0.0
        %1623 = vmatpush1.msra.mxu0 0.0
        %1624 = vmatprep.subr.mxu0 0.0
        %1625 = vmatpush1.msra.mxu0 0.0
        %1626 = vmatprep.subr.mxu0 0.0
        %1627 = vmatpush1.msra.mxu0 0.0
        %1628 = vmatprep.subr.mxu0 0.0
        %1629 = vmatpush1.msra.mxu0 0.0
        %1630 = vmatprep.subr.mxu0 0.0
        %1631 = vmatpush1.msra.mxu0 0.0
        %1632 = vmatprep.subr.mxu0 0.0
        %1633 = vmatpush1.msra.mxu0 0.0
        %1634 = vmatprep.subr.mxu0 0.0
        %1635 = vmatpush1.msra.mxu0 0.0
        %1636 = vmatprep.subr.mxu0 0.0
        %1637 = vmatpush1.msra.mxu0 0.0
        %1638 = vmatprep.subr.mxu0 0.0
        %1639 = vmatpush1.msra.mxu0 0.0
        %1640 = vmatprep.subr.mxu0 0.0
        %1641 = vmatpush1.msra.mxu0 %v802
        %1642 = vmatprep.subr.mxu0 0.0
        %1643 = vmatpush2.msra.mxu0 0.0
        %1644 = vmatprep.subr.mxu0 0.0
        %1645 = vmatpush2.msra.mxu0 0.0
        %1646 = vmatprep.subr.mxu0 0.0
        %1647 = vmatpush2.msra.mxu0 0.0
        %1648 = vmatprep.subr.mxu0 0.0
        %1649 = vmatpush2.msra.mxu0 0.0
        %1650 = vmatprep.subr.mxu0 0.0
        %1651 = vmatpush2.msra.mxu0 0.0
        %1652 = vmatprep.subr.mxu0 0.0
        %1653 = vmatpush2.msra.mxu0 0.0
        %1654 = vmatprep.subr.mxu0 0.0
        %1655 = vmatpush2.msra.mxu0 0.0
        %1656 = vmatprep.subr.mxu0 0.0
        %1657 = vmatpush2.msra.mxu0 0.0
        %1658 = vmatprep.subr.mxu0 0.0
        %1659 = vmatpush2.msra.mxu0 0.0
        %1660 = vmatprep.subr.mxu0 0.0
        %1661 = vmatpush2.msra.mxu0 0.0
        %1662 = vmatprep.subr.mxu0 0.0
        %1663 = vmatpush2.msra.mxu0 0.0
        %1664 = vmatprep.subr.mxu0 0.0
        %1665 = vmatpush2.msra.mxu0 0.0
        %1666 = vmatprep.subr.mxu0 0.0
        %1667 = vmatpush2.msra.mxu0 0.0
        %1668 = vmatprep.subr.mxu0 0.0
        %1669 = vmatpush2.msra.mxu0 0.0
        %1670 = vmatprep.subr.mxu0 0.0
        %1671 = vmatpush2.msra.mxu0 0.0
        %1672 = vmatprep.subr.mxu0 0.0
        %1673 = vmatpush2.msra.mxu0 0.0
        %1674 = vmatprep.mubr.f32.mxu0 0.0
        %1675 = vmatmul.mubr.f32.gmra.mxu0 %v1608
        %v1676 = vpop.f32.mrf.mxu0
        %v1677 = vadd.f32 0.0, %v1676
        %v1678 = vpop.f32.mrf.mxu0
        %1679 = vdwg.mxu0
        %v1680 = vadd.f32 %v1604, %v1677
        %v1682 = vsel %vm828, %v1458, 0
        %1684 = vmatprep.subr.mxu0 0.0
        %1685 = vmatpush1.msra.mxu0 0.0
        %1686 = vmatprep.subr.mxu0 0.0
        %1687 = vmatpush1.msra.mxu0 0.0
        %1688 = vmatprep.subr.mxu0 0.0
        %1689 = vmatpush1.msra.mxu0 0.0
        %1690 = vmatprep.subr.mxu0 0.0
        %1691 = vmatpush1.msra.mxu0 0.0
        %1692 = vmatprep.subr.mxu0 0.0
        %1693 = vmatpush1.msra.mxu0 0.0
        %1694 = vmatprep.subr.mxu0 0.0
        %1695 = vmatpush1.msra.mxu0 0.0
        %1696 = vmatprep.subr.mxu0 0.0
        %1697 = vmatpush1.msra.mxu0 0.0
        %1698 = vmatprep.subr.mxu0 0.0
        %1699 = vmatpush1.msra.mxu0 0.0
        %1700 = vmatprep.subr.mxu0 0.0
        %1701 = vmatpush1.msra.mxu0 0.0
        %1702 = vmatprep.subr.mxu0 0.0
        %1703 = vmatpush1.msra.mxu0 0.0
        %1704 = vmatprep.subr.mxu0 0.0
        %1705 = vmatpush1.msra.mxu0 0.0
        %1706 = vmatprep.subr.mxu0 0.0
        %1707 = vmatpush1.msra.mxu0 0.0
        %1708 = vmatprep.subr.mxu0 0.0
        %1709 = vmatpush1.msra.mxu0 0.0
        %1710 = vmatprep.subr.mxu0 0.0
        %1711 = vmatpush1.msra.mxu0 0.0
        %1712 = vmatprep.subr.mxu0 0.0
        %1713 = vmatpush1.msra.mxu0 0.0
        %1714 = vmatprep.subr.mxu0 0.0
        %1715 = vmatpush1.msra.mxu0 %v803
        %1716 = vmatprep.subr.mxu0 0.0
        %1717 = vmatpush2.msra.mxu0 0.0
        %1718 = vmatprep.subr.mxu0 0.0
        %1719 = vmatpush2.msra.mxu0 0.0
        %1720 = vmatprep.subr.mxu0 0.0
        %1721 = vmatpush2.msra.mxu0 0.0
        %1722 = vmatprep.subr.mxu0 0.0
        %1723 = vmatpush2.msra.mxu0 0.0
        %1724 = vmatprep.subr.mxu0 0.0
        %1725 = vmatpush2.msra.mxu0 0.0
        %1726 = vmatprep.subr.mxu0 0.0
        %1727 = vmatpush2.msra.mxu0 0.0
        %1728 = vmatprep.subr.mxu0 0.0
        %1729 = vmatpush2.msra.mxu0 0.0
        %1730 = vmatprep.subr.mxu0 0.0
        %1731 = vmatpush2.msra.mxu0 0.0
        %1732 = vmatprep.subr.mxu0 0.0
        %1733 = vmatpush2.msra.mxu0 0.0
        %1734 = vmatprep.subr.mxu0 0.0
        %1735 = vmatpush2.msra.mxu0 0.0
        %1736 = vmatprep.subr.mxu0 0.0
        %1737 = vmatpush2.msra.mxu0 0.0
        %1738 = vmatprep.subr.mxu0 0.0
        %1739 = vmatpush2.msra.mxu0 0.0
        %1740 = vmatprep.subr.mxu0 0.0
        %1741 = vmatpush2.msra.mxu0 0.0
        %1742 = vmatprep.subr.mxu0 0.0
        %1743 = vmatpush2.msra.mxu0 0.0
        %1744 = vmatprep.subr.mxu0 0.0
        %1745 = vmatpush2.msra.mxu0 0.0
        %1746 = vmatprep.subr.mxu0 0.0
        %1747 = vmatpush2.msra.mxu0 0.0
        %1748 = vmatprep.mubr.f32.mxu0 0.0
        %1749 = vmatmul.mubr.f32.gmra.mxu0 %v1682
        %v1750 = vpop.f32.mrf.mxu0
        %v1751 = vadd.f32 0.0, %v1750
        %v1752 = vpop.f32.mrf.mxu0
        %1753 = vdwg.mxu0
        %v1754 = vadd.f32 %v1680, %v1751
        %v1755 = vld [vmem:[%s547 + $0x3] sm:$0x1]
        %v1756 = vlaneseq
        %v1757 = vshrl.u32 %v1756, 7
        %v1758 = vsub.s32 0, %v1757
        %v1759 = vrot.slane %v1755, %v1758
        %v1760 = vadd.f32 %v1754, %v1759
        %v1761 = vadd.f32 %v1760, %v555
        %v1762 = vld [vmem:[%s547 + $0x9] sm:$0x1]
        %v1763 = vld [vmem:[%s547 + $0xc] sm:$0x1]
        %v1764 = vsel %vm566, %v1761, 0.0
        %1765 = vadd.xlane.f32.xlu0 %v1764
        %v1766 = vpop.xlane.xlu0 %1765
        %v1767 = vrcp.pop 32.0
        %v1768 = vmul.f32 %v1766, %v1767
        %v1769 = vsub.f32 %v1761, %v1768
        %v1770 = vmul.f32 %v1769, %v1769
        %v1771 = vsel %vm566, %v1770, 0.0
        %1772 = vadd.xlane.f32.xlu0 %v1771
        %v1773 = vpop.xlane.xlu0 %1772
        %v1774 = vmul.f32 %v1773, %v1767
        %v1775 = vadd.f32 %v1774, 1e-05
        %v1776 = vrsqrt.pop %v1775
        %v1777 = vmul.f32 %v1769, %v1776
        %v1778 = vlaneseq
        %v1779 = vshrl.u32 %v1778, 7
        %v1780 = vsub.s32 0, %v1779
        %v1781 = vrot.slane %v1762, %v1780
        %v1782 = vmul.f32 %v1777, %v1781
        %v1783 = vlaneseq
        %v1784 = vshrl.u32 %v1783, 7
        %v1785 = vsub.s32 0, %v1784
        %v1786 = vrot.slane %v1763, %v1785
        %v1787 = vadd.f32 %v1782, %v1786
        %v1788 = vld [vmem:[%s442] sm:$0xff]
        %s1789 = scalar_lea.vmem %s451, 96 [#allocation8]
        %v1790 = vld [vmem:[%s1789] sm:$0xff]
        %v1791 = vld [vmem:[%s1789 + $0x8] sm:$0xff]
        %v1792 = vld [vmem:[%s1789 + $0x10] sm:$0xff]
        %v1793 = vld [vmem:[%s1789 + $0x18] sm:$0xff]
        %v1794 = vld [vmem:[%s547 + $0x4] sm:$0x1]
        %v1795 = vlaneseq
        %v1796 = vshrl.u32 %v1795, 7
        %v1797 = vsub.s32 0, %v1796
        %v1798 = vrot.slane %v1794, %v1797
        %v1800 = vsel %vm566, %v1787, 0
        %1802 = vmatprep.subr.mxu0 0.0
        %1803 = vmatpush1.msra.mxu0 0.0
        %1804 = vmatprep.subr.mxu0 0.0
        %1805 = vmatpush1.msra.mxu0 0.0
        %1806 = vmatprep.subr.mxu0 0.0
        %1807 = vmatpush1.msra.mxu0 0.0
        %1808 = vmatprep.subr.mxu0 0.0
        %1809 = vmatpush1.msra.mxu0 0.0
        %1810 = vmatprep.subr.mxu0 0.0
        %1811 = vmatpush1.msra.mxu0 0.0
        %1812 = vmatprep.subr.mxu0 0.0
        %1813 = vmatpush1.msra.mxu0 0.0
        %1814 = vmatprep.subr.mxu0 0.0
        %1815 = vmatpush1.msra.mxu0 0.0
        %1816 = vmatprep.subr.mxu0 0.0
        %1817 = vmatpush1.msra.mxu0 0.0
        %1818 = vmatprep.subr.mxu0 0.0
        %1819 = vmatpush1.msra.mxu0 0.0
        %1820 = vmatprep.subr.mxu0 0.0
        %1821 = vmatpush1.msra.mxu0 0.0
        %1822 = vmatprep.subr.mxu0 0.0
        %1823 = vmatpush1.msra.mxu0 0.0
        %1824 = vmatprep.subr.mxu0 0.0
        %1825 = vmatpush1.msra.mxu0 0.0
        %1826 = vmatprep.subr.mxu0 0.0
        %1827 = vmatpush1.msra.mxu0 %v1793
        %1828 = vmatprep.subr.mxu0 0.0
        %1829 = vmatpush1.msra.mxu0 %v1792
        %1830 = vmatprep.subr.mxu0 0.0
        %1831 = vmatpush1.msra.mxu0 %v1791
        %1832 = vmatprep.subr.mxu0 0.0
        %1833 = vmatpush1.msra.mxu0 %v1790
        %1834 = vmatprep.subr.mxu0 0.0
        %1835 = vmatpush2.msra.mxu0 0.0
        %1836 = vmatprep.subr.mxu0 0.0
        %1837 = vmatpush2.msra.mxu0 0.0
        %1838 = vmatprep.subr.mxu0 0.0
        %1839 = vmatpush2.msra.mxu0 0.0
        %1840 = vmatprep.subr.mxu0 0.0
        %1841 = vmatpush2.msra.mxu0 0.0
        %1842 = vmatprep.subr.mxu0 0.0
        %1843 = vmatpush2.msra.mxu0 0.0
        %1844 = vmatprep.subr.mxu0 0.0
        %1845 = vmatpush2.msra.mxu0 0.0
        %1846 = vmatprep.subr.mxu0 0.0
        %1847 = vmatpush2.msra.mxu0 0.0
        %1848 = vmatprep.subr.mxu0 0.0
        %1849 = vmatpush2.msra.mxu0 0.0
        %1850 = vmatprep.subr.mxu0 0.0
        %1851 = vmatpush2.msra.mxu0 0.0
        %1852 = vmatprep.subr.mxu0 0.0
        %1853 = vmatpush2.msra.mxu0 0.0
        %1854 = vmatprep.subr.mxu0 0.0
        %1855 = vmatpush2.msra.mxu0 0.0
        %1856 = vmatprep.subr.mxu0 0.0
        %1857 = vmatpush2.msra.mxu0 0.0
        %1858 = vmatprep.subr.mxu0 0.0
        %1859 = vmatpush2.msra.mxu0 0.0
        %1860 = vmatprep.subr.mxu0 0.0
        %1861 = vmatpush2.msra.mxu0 0.0
        %1862 = vmatprep.subr.mxu0 0.0
        %1863 = vmatpush2.msra.mxu0 0.0
        %1864 = vmatprep.subr.mxu0 0.0
        %1865 = vmatpush2.msra.mxu0 0.0
        %1866 = vmatprep.mubr.f32.mxu0 0.0
        %1867 = vmatmul.mubr.f32.gmra.mxu0 %v1800
        %v1868 = vpop.f32.mrf.mxu0
        %v1869 = vadd.f32 %v1798, %v1868
        %v1870 = vpop.f32.mrf.mxu0
        %1871 = vdwg.mxu0
        %s1872 = scalar_lea.vmem %s451, 128 [#allocation8]
        %v1873 = vld [vmem:[%s1872] sm:$0xff]
        %v1874 = vld [vmem:[%s1872 + $0x8] sm:$0xff]
        %v1875 = vld [vmem:[%s1872 + $0x10] sm:$0xff]
        %v1876 = vld [vmem:[%s1872 + $0x18] sm:$0xff]
        %v1877 = vld [vmem:[%s547 + $0x5] sm:$0x1]
        %v1878 = vlaneseq
        %v1879 = vshrl.u32 %v1878, 7
        %v1880 = vsub.s32 0, %v1879
        %v1881 = vrot.slane %v1877, %v1880
        %v1883 = vsel %vm566, %v1788, 0
        %1885 = vmatprep.subr.mxu0 0.0
        %1886 = vmatpush1.msra.mxu0 0.0
        %1887 = vmatprep.subr.mxu0 0.0
        %1888 = vmatpush1.msra.mxu0 0.0
        %1889 = vmatprep.subr.mxu0 0.0
        %1890 = vmatpush1.msra.mxu0 0.0
        %1891 = vmatprep.subr.mxu0 0.0
        %1892 = vmatpush1.msra.mxu0 0.0
        %1893 = vmatprep.subr.mxu0 0.0
        %1894 = vmatpush1.msra.mxu0 0.0
        %1895 = vmatprep.subr.mxu0 0.0
        %1896 = vmatpush1.msra.mxu0 0.0
        %1897 = vmatprep.subr.mxu0 0.0
        %1898 = vmatpush1.msra.mxu0 0.0
        %1899 = vmatprep.subr.mxu0 0.0
        %1900 = vmatpush1.msra.mxu0 0.0
        %1901 = vmatprep.subr.mxu0 0.0
        %1902 = vmatpush1.msra.mxu0 0.0
        %1903 = vmatprep.subr.mxu0 0.0
        %1904 = vmatpush1.msra.mxu0 0.0
        %1905 = vmatprep.subr.mxu0 0.0
        %1906 = vmatpush1.msra.mxu0 0.0
        %1907 = vmatprep.subr.mxu0 0.0
        %1908 = vmatpush1.msra.mxu0 0.0
        %1909 = vmatprep.subr.mxu0 0.0
        %1910 = vmatpush1.msra.mxu0 %v1876
        %1911 = vmatprep.subr.mxu0 0.0
        %1912 = vmatpush1.msra.mxu0 %v1875
        %1913 = vmatprep.subr.mxu0 0.0
        %1914 = vmatpush1.msra.mxu0 %v1874
        %1915 = vmatprep.subr.mxu0 0.0
        %1916 = vmatpush1.msra.mxu0 %v1873
        %1917 = vmatprep.subr.mxu0 0.0
        %1918 = vmatpush2.msra.mxu0 0.0
        %1919 = vmatprep.subr.mxu0 0.0
        %1920 = vmatpush2.msra.mxu0 0.0
        %1921 = vmatprep.subr.mxu0 0.0
        %1922 = vmatpush2.msra.mxu0 0.0
        %1923 = vmatprep.subr.mxu0 0.0
        %1924 = vmatpush2.msra.mxu0 0.0
        %1925 = vmatprep.subr.mxu0 0.0
        %1926 = vmatpush2.msra.mxu0 0.0
        %1927 = vmatprep.subr.mxu0 0.0
        %1928 = vmatpush2.msra.mxu0 0.0
        %1929 = vmatprep.subr.mxu0 0.0
        %1930 = vmatpush2.msra.mxu0 0.0
        %1931 = vmatprep.subr.mxu0 0.0
        %1932 = vmatpush2.msra.mxu0 0.0
        %1933 = vmatprep.subr.mxu0 0.0
        %1934 = vmatpush2.msra.mxu0 0.0
        %1935 = vmatprep.subr.mxu0 0.0
        %1936 = vmatpush2.msra.mxu0 0.0
        %1937 = vmatprep.subr.mxu0 0.0
        %1938 = vmatpush2.msra.mxu0 0.0
        %1939 = vmatprep.subr.mxu0 0.0
        %1940 = vmatpush2.msra.mxu0 0.0
        %1941 = vmatprep.subr.mxu0 0.0
        %1942 = vmatpush2.msra.mxu0 0.0
        %1943 = vmatprep.subr.mxu0 0.0
        %1944 = vmatpush2.msra.mxu0 0.0
        %1945 = vmatprep.subr.mxu0 0.0
        %1946 = vmatpush2.msra.mxu0 0.0
        %1947 = vmatprep.subr.mxu0 0.0
        %1948 = vmatpush2.msra.mxu0 0.0
        %1949 = vmatprep.mubr.f32.mxu0 0.0
        %1950 = vmatmul.mubr.f32.gmra.mxu0 %v1883
        %v1951 = vpop.f32.mrf.mxu0
        %v1952 = vadd.f32 %v1881, %v1951
        %v1953 = vpop.f32.mrf.mxu0
        %1954 = vdwg.mxu0
        %s1955 = scalar_lea.vmem %s451, 160 [#allocation8]
        %v1956 = vld [vmem:[%s1955] sm:$0xff]
        %v1957 = vld [vmem:[%s1955 + $0x8] sm:$0xff]
        %v1958 = vld [vmem:[%s1955 + $0x10] sm:$0xff]
        %v1959 = vld [vmem:[%s1955 + $0x18] sm:$0xff]
        %v1960 = vld [vmem:[%s547 + $0x6] sm:$0x1]
        %v1961 = vlaneseq
        %v1962 = vshrl.u32 %v1961, 7
        %v1963 = vsub.s32 0, %v1962
        %v1964 = vrot.slane %v1960, %v1963
        %1965 = vmatprep.subr.mxu0 0.0
        %1966 = vmatpush1.msra.mxu0 0.0
        %1967 = vmatprep.subr.mxu0 0.0
        %1968 = vmatpush1.msra.mxu0 0.0
        %1969 = vmatprep.subr.mxu0 0.0
        %1970 = vmatpush1.msra.mxu0 0.0
        %1971 = vmatprep.subr.mxu0 0.0
        %1972 = vmatpush1.msra.mxu0 0.0
        %1973 = vmatprep.subr.mxu0 0.0
        %1974 = vmatpush1.msra.mxu0 0.0
        %1975 = vmatprep.subr.mxu0 0.0
        %1976 = vmatpush1.msra.mxu0 0.0
        %1977 = vmatprep.subr.mxu0 0.0
        %1978 = vmatpush1.msra.mxu0 0.0
        %1979 = vmatprep.subr.mxu0 0.0
        %1980 = vmatpush1.msra.mxu0 0.0
        %1981 = vmatprep.subr.mxu0 0.0
        %1982 = vmatpush1.msra.mxu0 0.0
        %1983 = vmatprep.subr.mxu0 0.0
        %1984 = vmatpush1.msra.mxu0 0.0
        %1985 = vmatprep.subr.mxu0 0.0
        %1986 = vmatpush1.msra.mxu0 0.0
        %1987 = vmatprep.subr.mxu0 0.0
        %1988 = vmatpush1.msra.mxu0 0.0
        %1989 = vmatprep.subr.mxu0 0.0
        %1990 = vmatpush1.msra.mxu0 %v1959
        %1991 = vmatprep.subr.mxu0 0.0
        %1992 = vmatpush1.msra.mxu0 %v1958
        %1993 = vmatprep.subr.mxu0 0.0
        %1994 = vmatpush1.msra.mxu0 %v1957
        %1995 = vmatprep.subr.mxu0 0.0
        %1996 = vmatpush1.msra.mxu0 %v1956
        %1997 = vmatprep.subr.mxu0 0.0
        %1998 = vmatpush2.msra.mxu0 0.0
        %1999 = vmatprep.subr.mxu0 0.0
        %2000 = vmatpush2.msra.mxu0 0.0
        %2001 = vmatprep.subr.mxu0 0.0
        %2002 = vmatpush2.msra.mxu0 0.0
        %2003 = vmatprep.subr.mxu0 0.0
        %2004 = vmatpush2.msra.mxu0 0.0
        %2005 = vmatprep.subr.mxu0 0.0
        %2006 = vmatpush2.msra.mxu0 0.0
        %2007 = vmatprep.subr.mxu0 0.0
        %2008 = vmatpush2.msra.mxu0 0.0
        %2009 = vmatprep.subr.mxu0 0.0
        %2010 = vmatpush2.msra.mxu0 0.0
        %2011 = vmatprep.subr.mxu0 0.0
        %2012 = vmatpush2.msra.mxu0 0.0
        %2013 = vmatprep.subr.mxu0 0.0
        %2014 = vmatpush2.msra.mxu0 0.0
        %2015 = vmatprep.subr.mxu0 0.0
        %2016 = vmatpush2.msra.mxu0 0.0
        %2017 = vmatprep.subr.mxu0 0.0
        %2018 = vmatpush2.msra.mxu0 0.0
        %2019 = vmatprep.subr.mxu0 0.0
        %2020 = vmatpush2.msra.mxu0 0.0
        %2021 = vmatprep.subr.mxu0 0.0
        %2022 = vmatpush2.msra.mxu0 0.0
        %2023 = vmatprep.subr.mxu0 0.0
        %2024 = vmatpush2.msra.mxu0 0.0
        %2025 = vmatprep.subr.mxu0 0.0
        %2026 = vmatpush2.msra.mxu0 0.0
        %2027 = vmatprep.subr.mxu0 0.0
        %2028 = vmatpush2.msra.mxu0 0.0
        %2029 = vmatprep.mubr.f32.mxu0 0.0
        %2030 = vmatmul.mubr.f32.gmra.mxu0 %v1883
        %v2031 = vpop.f32.mrf.mxu0
        %v2032 = vadd.f32 %v1964, %v2031
        %v2033 = vpop.f32.mrf.mxu0
        %2034 = vdwg.mxu0
        %s2035 = scalar_lea.vmem %s532, 32
        %v2036 = vld [vmem:[%s2035] sm:$0xff]
        %v2037 = vld [vmem:[%s2035 + $0x8] sm:$0xff]
        %v2038 = vld [vmem:[%s2035 + $0x10] sm:$0xff]
        %v2039 = vld [vmem:[%s2035 + $0x18] sm:$0xff]
        %2041 = vrot.lane.b32.xlu0 %v1869, 120
        %v2042 = vpop.permute.xlu0 %2041
        %2043 = vrot.lane.b32.xlu0 %v1869, 112
        %v2044 = vpop.permute.xlu0 %2043
        %2045 = vrot.lane.b32.xlu0 %v1869, 104
        %v2046 = vpop.permute.xlu0 %2045
        %2048 = vrot.lane.b32.xlu0 %v1952, 120
        %v2049 = vpop.permute.xlu0 %2048
        %2050 = vrot.lane.b32.xlu0 %v1952, 112
        %v2051 = vpop.permute.xlu0 %2050
        %2052 = vrot.lane.b32.xlu0 %v1952, 104
        %v2053 = vpop.permute.xlu0 %2052
        %2055 = vrot.lane.b32.xlu0 %v2032, 120
        %v2056 = vpop.permute.xlu0 %2055
        %2058 = vrot.lane.b32.xlu0 %v2032, 112
        %v2059 = vpop.permute.xlu0 %2058
        %2061 = vrot.lane.b32.xlu0 %v2032, 104
        %v2062 = vpop.permute.xlu0 %2061
        %v2064 = vsel %vm828, %v1869, 0
        %v2066 = vsel %vm828, %v1952, 0
        %2068 = vmatprep.subr.mxu0 0.0
        %2069 = vmatpush1.xpose.msra.mxu0 0.0
        %2070 = vmatprep.subr.mxu0 0.0
        %2071 = vmatpush1.xpose.msra.mxu0 0.0
        %2072 = vmatprep.subr.mxu0 0.0
        %2073 = vmatpush1.xpose.msra.mxu0 0.0
        %2074 = vmatprep.subr.mxu0 0.0
        %2075 = vmatpush1.xpose.msra.mxu0 0.0
        %2076 = vmatprep.subr.mxu0 0.0
        %2077 = vmatpush1.xpose.msra.mxu0 0.0
        %2078 = vmatprep.subr.mxu0 0.0
        %2079 = vmatpush1.xpose.msra.mxu0 0.0
        %2080 = vmatprep.subr.mxu0 0.0
        %2081 = vmatpush1.xpose.msra.mxu0 0.0
        %2082 = vmatprep.subr.mxu0 0.0
        %2083 = vmatpush1.xpose.msra.mxu0 0.0
        %2084 = vmatprep.subr.mxu0 0.0
        %2085 = vmatpush1.xpose.msra.mxu0 0.0
        %2086 = vmatprep.subr.mxu0 0.0
        %2087 = vmatpush1.xpose.msra.mxu0 0.0
        %2088 = vmatprep.subr.mxu0 0.0
        %2089 = vmatpush1.xpose.msra.mxu0 0.0
        %2090 = vmatprep.subr.mxu0 0.0
        %2091 = vmatpush1.xpose.msra.mxu0 0.0
        %2092 = vmatprep.subr.mxu0 0.0
        %2093 = vmatpush1.xpose.msra.mxu0 0.0
        %2094 = vmatprep.subr.mxu0 0.0
        %2095 = vmatpush1.xpose.msra.mxu0 0.0
        %2096 = vmatprep.subr.mxu0 0.0
        %2097 = vmatpush1.xpose.msra.mxu0 0.0
        %2098 = vmatprep.subr.mxu0 0.0
        %2099 = vmatpush1.xpose.msra.mxu0 %v2066
        %2100 = vmatprep.subr.mxu0 0.0
        %2101 = vmatpush2.xpose.msra.mxu0 0.0
        %2102 = vmatprep.subr.mxu0 0.0
        %2103 = vmatpush2.xpose.msra.mxu0 0.0
        %2104 = vmatprep.subr.mxu0 0.0
        %2105 = vmatpush2.xpose.msra.mxu0 0.0
        %2106 = vmatprep.subr.mxu0 0.0
        %2107 = vmatpush2.xpose.msra.mxu0 0.0
        %2108 = vmatprep.subr.mxu0 0.0
        %2109 = vmatpush2.xpose.msra.mxu0 0.0
        %2110 = vmatprep.subr.mxu0 0.0
        %2111 = vmatpush2.xpose.msra.mxu0 0.0
        %2112 = vmatprep.subr.mxu0 0.0
        %2113 = vmatpush2.xpose.msra.mxu0 0.0
        %2114 = vmatprep.subr.mxu0 0.0
        %2115 = vmatpush2.xpose.msra.mxu0 0.0
        %2116 = vmatprep.subr.mxu0 0.0
        %2117 = vmatpush2.xpose.msra.mxu0 0.0
        %2118 = vmatprep.subr.mxu0 0.0
        %2119 = vmatpush2.xpose.msra.mxu0 0.0
        %2120 = vmatprep.subr.mxu0 0.0
        %2121 = vmatpush2.xpose.msra.mxu0 0.0
        %2122 = vmatprep.subr.mxu0 0.0
        %2123 = vmatpush2.xpose.msra.mxu0 0.0
        %2124 = vmatprep.subr.mxu0 0.0
        %2125 = vmatpush2.xpose.msra.mxu0 0.0
        %2126 = vmatprep.subr.mxu0 0.0
        %2127 = vmatpush2.xpose.msra.mxu0 0.0
        %2128 = vmatprep.subr.mxu0 0.0
        %2129 = vmatpush2.xpose.msra.mxu0 0.0
        %2130 = vmatprep.subr.mxu0 0.0
        %2131 = vmatpush2.xpose.msra.mxu0 0.0
        %2132 = vmatprep.mubr.f32.mxu0 0.0
        %2133 = vmatmul.mubr.f32.gmra.mxu0 %v2064
        %v2134 = vpop.f32.mrf.mxu0
        %v2135 = vadd.f32 0.0, %v2134
        %v2136 = vpop.f32.mrf.mxu0
        %2137 = vdwg.mxu0
        %v2138 = vsel %vm828, %v2042, 0
        %v2140 = vsel %vm828, %v2049, 0
        %2142 = vmatprep.subr.mxu0 0.0
        %2143 = vmatpush1.xpose.msra.mxu0 0.0
        %2144 = vmatprep.subr.mxu0 0.0
        %2145 = vmatpush1.xpose.msra.mxu0 0.0
        %2146 = vmatprep.subr.mxu0 0.0
        %2147 = vmatpush1.xpose.msra.mxu0 0.0
        %2148 = vmatprep.subr.mxu0 0.0
        %2149 = vmatpush1.xpose.msra.mxu0 0.0
        %2150 = vmatprep.subr.mxu0 0.0
        %2151 = vmatpush1.xpose.msra.mxu0 0.0
        %2152 = vmatprep.subr.mxu0 0.0
        %2153 = vmatpush1.xpose.msra.mxu0 0.0
        %2154 = vmatprep.subr.mxu0 0.0
        %2155 = vmatpush1.xpose.msra.mxu0 0.0
        %2156 = vmatprep.subr.mxu0 0.0
        %2157 = vmatpush1.xpose.msra.mxu0 0.0
        %2158 = vmatprep.subr.mxu0 0.0
        %2159 = vmatpush1.xpose.msra.mxu0 0.0
        %2160 = vmatprep.subr.mxu0 0.0
        %2161 = vmatpush1.xpose.msra.mxu0 0.0
        %2162 = vmatprep.subr.mxu0 0.0
        %2163 = vmatpush1.xpose.msra.mxu0 0.0
        %2164 = vmatprep.subr.mxu0 0.0
        %2165 = vmatpush1.xpose.msra.mxu0 0.0
        %2166 = vmatprep.subr.mxu0 0.0
        %2167 = vmatpush1.xpose.msra.mxu0 0.0
        %2168 = vmatprep.subr.mxu0 0.0
        %2169 = vmatpush1.xpose.msra.mxu0 0.0
        %2170 = vmatprep.subr.mxu0 0.0
        %2171 = vmatpush1.xpose.msra.mxu0 0.0
        %2172 = vmatprep.subr.mxu0 0.0
        %2173 = vmatpush1.xpose.msra.mxu0 %v2140
        %2174 = vmatprep.subr.mxu0 0.0
        %2175 = vmatpush2.xpose.msra.mxu0 0.0
        %2176 = vmatprep.subr.mxu0 0.0
        %2177 = vmatpush2.xpose.msra.mxu0 0.0
        %2178 = vmatprep.subr.mxu0 0.0
        %2179 = vmatpush2.xpose.msra.mxu0 0.0
        %2180 = vmatprep.subr.mxu0 0.0
        %2181 = vmatpush2.xpose.msra.mxu0 0.0
        %2182 = vmatprep.subr.mxu0 0.0
        %2183 = vmatpush2.xpose.msra.mxu0 0.0
        %2184 = vmatprep.subr.mxu0 0.0
        %2185 = vmatpush2.xpose.msra.mxu0 0.0
        %2186 = vmatprep.subr.mxu0 0.0
        %2187 = vmatpush2.xpose.msra.mxu0 0.0
        %2188 = vmatprep.subr.mxu0 0.0
        %2189 = vmatpush2.xpose.msra.mxu0 0.0
        %2190 = vmatprep.subr.mxu0 0.0
        %2191 = vmatpush2.xpose.msra.mxu0 0.0
        %2192 = vmatprep.subr.mxu0 0.0
        %2193 = vmatpush2.xpose.msra.mxu0 0.0
        %2194 = vmatprep.subr.mxu0 0.0
        %2195 = vmatpush2.xpose.msra.mxu0 0.0
        %2196 = vmatprep.subr.mxu0 0.0
        %2197 = vmatpush2.xpose.msra.mxu0 0.0
        %2198 = vmatprep.subr.mxu0 0.0
        %2199 = vmatpush2.xpose.msra.mxu0 0.0
        %2200 = vmatprep.subr.mxu0 0.0
        %2201 = vmatpush2.xpose.msra.mxu0 0.0
        %2202 = vmatprep.subr.mxu0 0.0
        %2203 = vmatpush2.xpose.msra.mxu0 0.0
        %2204 = vmatprep.subr.mxu0 0.0
        %2205 = vmatpush2.xpose.msra.mxu0 0.0
        %2206 = vmatprep.mubr.f32.mxu0 0.0
        %2207 = vmatmul.mubr.f32.gmra.mxu0 %v2138
        %v2208 = vpop.f32.mrf.mxu0
        %v2209 = vadd.f32 0.0, %v2208
        %v2210 = vpop.f32.mrf.mxu0
        %2211 = vdwg.mxu0
        %v2212 = vsel %vm828, %v2044, 0
        %v2214 = vsel %vm828, %v2051, 0
        %2216 = vmatprep.subr.mxu0 0.0
        %2217 = vmatpush1.xpose.msra.mxu0 0.0
        %2218 = vmatprep.subr.mxu0 0.0
        %2219 = vmatpush1.xpose.msra.mxu0 0.0
        %2220 = vmatprep.subr.mxu0 0.0
        %2221 = vmatpush1.xpose.msra.mxu0 0.0
        %2222 = vmatprep.subr.mxu0 0.0
        %2223 = vmatpush1.xpose.msra.mxu0 0.0
        %2224 = vmatprep.subr.mxu0 0.0
        %2225 = vmatpush1.xpose.msra.mxu0 0.0
        %2226 = vmatprep.subr.mxu0 0.0
        %2227 = vmatpush1.xpose.msra.mxu0 0.0
        %2228 = vmatprep.subr.mxu0 0.0
        %2229 = vmatpush1.xpose.msra.mxu0 0.0
        %2230 = vmatprep.subr.mxu0 0.0
        %2231 = vmatpush1.xpose.msra.mxu0 0.0
        %2232 = vmatprep.subr.mxu0 0.0
        %2233 = vmatpush1.xpose.msra.mxu0 0.0
        %2234 = vmatprep.subr.mxu0 0.0
        %2235 = vmatpush1.xpose.msra.mxu0 0.0
        %2236 = vmatprep.subr.mxu0 0.0
        %2237 = vmatpush1.xpose.msra.mxu0 0.0
        %2238 = vmatprep.subr.mxu0 0.0
        %2239 = vmatpush1.xpose.msra.mxu0 0.0
        %2240 = vmatprep.subr.mxu0 0.0
        %2241 = vmatpush1.xpose.msra.mxu0 0.0
        %2242 = vmatprep.subr.mxu0 0.0
        %2243 = vmatpush1.xpose.msra.mxu0 0.0
        %2244 = vmatprep.subr.mxu0 0.0
        %2245 = vmatpush1.xpose.msra.mxu0 0.0
        %2246 = vmatprep.subr.mxu0 0.0
        %2247 = vmatpush1.xpose.msra.mxu0 %v2214
        %2248 = vmatprep.subr.mxu0 0.0
        %2249 = vmatpush2.xpose.msra.mxu0 0.0
        %2250 = vmatprep.subr.mxu0 0.0
        %2251 = vmatpush2.xpose.msra.mxu0 0.0
        %2252 = vmatprep.subr.mxu0 0.0
        %2253 = vmatpush2.xpose.msra.mxu0 0.0
        %2254 = vmatprep.subr.mxu0 0.0
        %2255 = vmatpush2.xpose.msra.mxu0 0.0
        %2256 = vmatprep.subr.mxu0 0.0
        %2257 = vmatpush2.xpose.msra.mxu0 0.0
        %2258 = vmatprep.subr.mxu0 0.0
        %2259 = vmatpush2.xpose.msra.mxu0 0.0
        %2260 = vmatprep.subr.mxu0 0.0
        %2261 = vmatpush2.xpose.msra.mxu0 0.0
        %2262 = vmatprep.subr.mxu0 0.0
        %2263 = vmatpush2.xpose.msra.mxu0 0.0
        %2264 = vmatprep.subr.mxu0 0.0
        %2265 = vmatpush2.xpose.msra.mxu0 0.0
        %2266 = vmatprep.subr.mxu0 0.0
        %2267 = vmatpush2.xpose.msra.mxu0 0.0
        %2268 = vmatprep.subr.mxu0 0.0
        %2269 = vmatpush2.xpose.msra.mxu0 0.0
        %2270 = vmatprep.subr.mxu0 0.0
        %2271 = vmatpush2.xpose.msra.mxu0 0.0
        %2272 = vmatprep.subr.mxu0 0.0
        %2273 = vmatpush2.xpose.msra.mxu0 0.0
        %2274 = vmatprep.subr.mxu0 0.0
        %2275 = vmatpush2.xpose.msra.mxu0 0.0
        %2276 = vmatprep.subr.mxu0 0.0
        %2277 = vmatpush2.xpose.msra.mxu0 0.0
        %2278 = vmatprep.subr.mxu0 0.0
        %2279 = vmatpush2.xpose.msra.mxu0 0.0
        %2280 = vmatprep.mubr.f32.mxu0 0.0
        %2281 = vmatmul.mubr.f32.gmra.mxu0 %v2212
        %v2282 = vpop.f32.mrf.mxu0
        %v2283 = vadd.f32 0.0, %v2282
        %v2284 = vpop.f32.mrf.mxu0
        %2285 = vdwg.mxu0
        %v2286 = vsel %vm828, %v2046, 0
        %v2288 = vsel %vm828, %v2053, 0
        %2290 = vmatprep.subr.mxu0 0.0
        %2291 = vmatpush1.xpose.msra.mxu0 0.0
        %2292 = vmatprep.subr.mxu0 0.0
        %2293 = vmatpush1.xpose.msra.mxu0 0.0
        %2294 = vmatprep.subr.mxu0 0.0
        %2295 = vmatpush1.xpose.msra.mxu0 0.0
        %2296 = vmatprep.subr.mxu0 0.0
        %2297 = vmatpush1.xpose.msra.mxu0 0.0
        %2298 = vmatprep.subr.mxu0 0.0
        %2299 = vmatpush1.xpose.msra.mxu0 0.0
        %2300 = vmatprep.subr.mxu0 0.0
        %2301 = vmatpush1.xpose.msra.mxu0 0.0
        %2302 = vmatprep.subr.mxu0 0.0
        %2303 = vmatpush1.xpose.msra.mxu0 0.0
        %2304 = vmatprep.subr.mxu0 0.0
        %2305 = vmatpush1.xpose.msra.mxu0 0.0
        %2306 = vmatprep.subr.mxu0 0.0
        %2307 = vmatpush1.xpose.msra.mxu0 0.0
        %2308 = vmatprep.subr.mxu0 0.0
        %2309 = vmatpush1.xpose.msra.mxu0 0.0
        %2310 = vmatprep.subr.mxu0 0.0
        %2311 = vmatpush1.xpose.msra.mxu0 0.0
        %2312 = vmatprep.subr.mxu0 0.0
        %2313 = vmatpush1.xpose.msra.mxu0 0.0
        %2314 = vmatprep.subr.mxu0 0.0
        %2315 = vmatpush1.xpose.msra.mxu0 0.0
        %2316 = vmatprep.subr.mxu0 0.0
        %2317 = vmatpush1.xpose.msra.mxu0 0.0
        %2318 = vmatprep.subr.mxu0 0.0
        %2319 = vmatpush1.xpose.msra.mxu0 0.0
        %2320 = vmatprep.subr.mxu0 0.0
        %2321 = vmatpush1.xpose.msra.mxu0 %v2288
        %2322 = vmatprep.subr.mxu0 0.0
        %2323 = vmatpush2.xpose.msra.mxu0 0.0
        %2324 = vmatprep.subr.mxu0 0.0
        %2325 = vmatpush2.xpose.msra.mxu0 0.0
        %2326 = vmatprep.subr.mxu0 0.0
        %2327 = vmatpush2.xpose.msra.mxu0 0.0
        %2328 = vmatprep.subr.mxu0 0.0
        %2329 = vmatpush2.xpose.msra.mxu0 0.0
        %2330 = vmatprep.subr.mxu0 0.0
        %2331 = vmatpush2.xpose.msra.mxu0 0.0
        %2332 = vmatprep.subr.mxu0 0.0
        %2333 = vmatpush2.xpose.msra.mxu0 0.0
        %2334 = vmatprep.subr.mxu0 0.0
        %2335 = vmatpush2.xpose.msra.mxu0 0.0
        %2336 = vmatprep.subr.mxu0 0.0
        %2337 = vmatpush2.xpose.msra.mxu0 0.0
        %2338 = vmatprep.subr.mxu0 0.0
        %2339 = vmatpush2.xpose.msra.mxu0 0.0
        %2340 = vmatprep.subr.mxu0 0.0
        %2341 = vmatpush2.xpose.msra.mxu0 0.0
        %2342 = vmatprep.subr.mxu0 0.0
        %2343 = vmatpush2.xpose.msra.mxu0 0.0
        %2344 = vmatprep.subr.mxu0 0.0
        %2345 = vmatpush2.xpose.msra.mxu0 0.0
        %2346 = vmatprep.subr.mxu0 0.0
        %2347 = vmatpush2.xpose.msra.mxu0 0.0
        %2348 = vmatprep.subr.mxu0 0.0
        %2349 = vmatpush2.xpose.msra.mxu0 0.0
        %2350 = vmatprep.subr.mxu0 0.0
        %2351 = vmatpush2.xpose.msra.mxu0 0.0
        %2352 = vmatprep.subr.mxu0 0.0
        %2353 = vmatpush2.xpose.msra.mxu0 0.0
        %2354 = vmatprep.mubr.f32.mxu0 0.0
        %2355 = vmatmul.mubr.f32.gmra.mxu0 %v2286
        %v2356 = vpop.f32.mrf.mxu0
        %v2357 = vadd.f32 0.0, %v2356
        %v2358 = vpop.f32.mrf.mxu0
        %2359 = vdwg.mxu0
        %v2360 = vsel %vm828, %v2135, -inf
        %2361 = vmax.xlane.f32.xlu0 %v2360
        %v2362 = vpop.xlane.xlu0 %2361
        %v2363 = vsel %vm828, %v2209, -inf
        %2364 = vmax.xlane.f32.xlu0 %v2363
        %v2365 = vpop.xlane.xlu0 %2364
        %v2366 = vsel %vm828, %v2283, -inf
        %2367 = vmax.xlane.f32.xlu0 %v2366
        %v2368 = vpop.xlane.xlu0 %2367
        %v2369 = vsel %vm828, %v2357, -inf
        %2370 = vmax.xlane.f32.xlu0 %v2369
        %v2371 = vpop.xlane.xlu0 %2370
        %v2372 = vsub.f32 %v2135, %v2362
        %v2373 = vsub.f32 %v2209, %v2365
        %v2374 = vsub.f32 %v2283, %v2368
        %v2375 = vsub.f32 %v2357, %v2371
        %v2376 = vmul.f32 %v2372, 1.442695
        %v2377 = vpow.pop %v2376
        %v2378 = vmul.f32 %v2373, 1.442695
        %v2379 = vpow.pop %v2378
        %v2380 = vmul.f32 %v2374, 1.442695
        %v2381 = vpow.pop %v2380
        %v2382 = vmul.f32 %v2375, 1.442695
        %v2383 = vpow.pop %v2382
        %v2384 = vsel %vm828, %v2377, 0.0
        %2385 = vadd.xlane.f32.xlu0 %v2384
        %v2386 = vpop.xlane.xlu0 %2385
        %v2387 = vsel %vm828, %v2379, 0.0
        %2388 = vadd.xlane.f32.xlu0 %v2387
        %v2389 = vpop.xlane.xlu0 %2388
        %v2390 = vsel %vm828, %v2381, 0.0
        %2391 = vadd.xlane.f32.xlu0 %v2390
        %v2392 = vpop.xlane.xlu0 %2391
        %v2393 = vsel %vm828, %v2383, 0.0
        %2394 = vadd.xlane.f32.xlu0 %v2393
        %v2395 = vpop.xlane.xlu0 %2394
        %v2396 = vrcp.pop %v2386
        %v2397 = vrcp.pop %v2389
        %v2398 = vrcp.pop %v2392
        %v2399 = vrcp.pop %v2395
        %v2400 = vmul.f32 %v2377, %v2396
        %v2401 = vmul.f32 %v2379, %v2397
        %v2402 = vmul.f32 %v2381, %v2398
        %v2403 = vmul.f32 %v2383, %v2399
        %v2405 = vsel %vm828, %v2400, 0
        %2407 = vmatprep.subr.mxu0 0.0
        %2408 = vmatpush1.msra.mxu0 0.0
        %2409 = vmatprep.subr.mxu0 0.0
        %2410 = vmatpush1.msra.mxu0 0.0
        %2411 = vmatprep.subr.mxu0 0.0
        %2412 = vmatpush1.msra.mxu0 0.0
        %2413 = vmatprep.subr.mxu0 0.0
        %2414 = vmatpush1.msra.mxu0 0.0
        %2415 = vmatprep.subr.mxu0 0.0
        %2416 = vmatpush1.msra.mxu0 0.0
        %2417 = vmatprep.subr.mxu0 0.0
        %2418 = vmatpush1.msra.mxu0 0.0
        %2419 = vmatprep.subr.mxu0 0.0
        %2420 = vmatpush1.msra.mxu0 0.0
        %2421 = vmatprep.subr.mxu0 0.0
        %2422 = vmatpush1.msra.mxu0 0.0
        %2423 = vmatprep.subr.mxu0 0.0
        %2424 = vmatpush1.msra.mxu0 0.0
        %2425 = vmatprep.subr.mxu0 0.0
        %2426 = vmatpush1.msra.mxu0 0.0
        %2427 = vmatprep.subr.mxu0 0.0
        %2428 = vmatpush1.msra.mxu0 0.0
        %2429 = vmatprep.subr.mxu0 0.0
        %2430 = vmatpush1.msra.mxu0 0.0
        %2431 = vmatprep.subr.mxu0 0.0
        %2432 = vmatpush1.msra.mxu0 0.0
        %2433 = vmatprep.subr.mxu0 0.0
        %2434 = vmatpush1.msra.mxu0 0.0
        %2435 = vmatprep.subr.mxu0 0.0
        %2436 = vmatpush1.msra.mxu0 0.0
        %2437 = vmatprep.subr.mxu0 0.0
        %2438 = vmatpush1.msra.mxu0 %v2032
        %2439 = vmatprep.subr.mxu0 0.0
        %2440 = vmatpush2.msra.mxu0 0.0
        %2441 = vmatprep.subr.mxu0 0.0
        %2442 = vmatpush2.msra.mxu0 0.0
        %2443 = vmatprep.subr.mxu0 0.0
        %2444 = vmatpush2.msra.mxu0 0.0
        %2445 = vmatprep.subr.mxu0 0.0
        %2446 = vmatpush2.msra.mxu0 0.0
        %2447 = vmatprep.subr.mxu0 0.0
        %2448 = vmatpush2.msra.mxu0 0.0
        %2449 = vmatprep.subr.mxu0 0.0
        %2450 = vmatpush2.msra.mxu0 0.0
        %2451 = vmatprep.subr.mxu0 0.0
        %2452 = vmatpush2.msra.mxu0 0.0
        %2453 = vmatprep.subr.mxu0 0.0
        %2454 = vmatpush2.msra.mxu0 0.0
        %2455 = vmatprep.subr.mxu0 0.0
        %2456 = vmatpush2.msra.mxu0 0.0
        %2457 = vmatprep.subr.mxu0 0.0
        %2458 = vmatpush2.msra.mxu0 0.0
        %2459 = vmatprep.subr.mxu0 0.0
        %2460 = vmatpush2.msra.mxu0 0.0
        %2461 = vmatprep.subr.mxu0 0.0
        %2462 = vmatpush2.msra.mxu0 0.0
        %2463 = vmatprep.subr.mxu0 0.0
        %2464 = vmatpush2.msra.mxu0 0.0
        %2465 = vmatprep.subr.mxu0 0.0
        %2466 = vmatpush2.msra.mxu0 0.0
        %2467 = vmatprep.subr.mxu0 0.0
        %2468 = vmatpush2.msra.mxu0 0.0
        %2469 = vmatprep.subr.mxu0 0.0
        %2470 = vmatpush2.msra.mxu0 0.0
        %2471 = vmatprep.mubr.f32.mxu0 0.0
        %2472 = vmatmul.mubr.f32.gmra.mxu0 %v2405
        %v2473 = vpop.f32.mrf.mxu0
        %v2474 = vadd.f32 0.0, %v2473
        %v2475 = vpop.f32.mrf.mxu0
        %2476 = vdwg.mxu0
        %v2478 = vsel %vm828, %v2401, 0
        %2480 = vmatprep.subr.mxu0 0.0
        %2481 = vmatpush1.msra.mxu0 0.0
        %2482 = vmatprep.subr.mxu0 0.0
        %2483 = vmatpush1.msra.mxu0 0.0
        %2484 = vmatprep.subr.mxu0 0.0
        %2485 = vmatpush1.msra.mxu0 0.0
        %2486 = vmatprep.subr.mxu0 0.0
        %2487 = vmatpush1.msra.mxu0 0.0
        %2488 = vmatprep.subr.mxu0 0.0
        %2489 = vmatpush1.msra.mxu0 0.0
        %2490 = vmatprep.subr.mxu0 0.0
        %2491 = vmatpush1.msra.mxu0 0.0
        %2492 = vmatprep.subr.mxu0 0.0
        %2493 = vmatpush1.msra.mxu0 0.0
        %2494 = vmatprep.subr.mxu0 0.0
        %2495 = vmatpush1.msra.mxu0 0.0
        %2496 = vmatprep.subr.mxu0 0.0
        %2497 = vmatpush1.msra.mxu0 0.0
        %2498 = vmatprep.subr.mxu0 0.0
        %2499 = vmatpush1.msra.mxu0 0.0
        %2500 = vmatprep.subr.mxu0 0.0
        %2501 = vmatpush1.msra.mxu0 0.0
        %2502 = vmatprep.subr.mxu0 0.0
        %2503 = vmatpush1.msra.mxu0 0.0
        %2504 = vmatprep.subr.mxu0 0.0
        %2505 = vmatpush1.msra.mxu0 0.0
        %2506 = vmatprep.subr.mxu0 0.0
        %2507 = vmatpush1.msra.mxu0 0.0
        %2508 = vmatprep.subr.mxu0 0.0
        %2509 = vmatpush1.msra.mxu0 0.0
        %2510 = vmatprep.subr.mxu0 0.0
        %2511 = vmatpush1.msra.mxu0 %v2056
        %2512 = vmatprep.subr.mxu0 0.0
        %2513 = vmatpush2.msra.mxu0 0.0
        %2514 = vmatprep.subr.mxu0 0.0
        %2515 = vmatpush2.msra.mxu0 0.0
        %2516 = vmatprep.subr.mxu0 0.0
        %2517 = vmatpush2.msra.mxu0 0.0
        %2518 = vmatprep.subr.mxu0 0.0
        %2519 = vmatpush2.msra.mxu0 0.0
        %2520 = vmatprep.subr.mxu0 0.0
        %2521 = vmatpush2.msra.mxu0 0.0
        %2522 = vmatprep.subr.mxu0 0.0
        %2523 = vmatpush2.msra.mxu0 0.0
        %2524 = vmatprep.subr.mxu0 0.0
        %2525 = vmatpush2.msra.mxu0 0.0
        %2526 = vmatprep.subr.mxu0 0.0
        %2527 = vmatpush2.msra.mxu0 0.0
        %2528 = vmatprep.subr.mxu0 0.0
        %2529 = vmatpush2.msra.mxu0 0.0
        %2530 = vmatprep.subr.mxu0 0.0
        %2531 = vmatpush2.msra.mxu0 0.0
        %2532 = vmatprep.subr.mxu0 0.0
        %2533 = vmatpush2.msra.mxu0 0.0
        %2534 = vmatprep.subr.mxu0 0.0
        %2535 = vmatpush2.msra.mxu0 0.0
        %2536 = vmatprep.subr.mxu0 0.0
        %2537 = vmatpush2.msra.mxu0 0.0
        %2538 = vmatprep.subr.mxu0 0.0
        %2539 = vmatpush2.msra.mxu0 0.0
        %2540 = vmatprep.subr.mxu0 0.0
        %2541 = vmatpush2.msra.mxu0 0.0
        %2542 = vmatprep.subr.mxu0 0.0
        %2543 = vmatpush2.msra.mxu0 0.0
        %2544 = vmatprep.mubr.f32.mxu0 0.0
        %2545 = vmatmul.mubr.f32.gmra.mxu0 %v2478
        %v2546 = vpop.f32.mrf.mxu0
        %v2547 = vadd.f32 0.0, %v2546
        %v2548 = vpop.f32.mrf.mxu0
        %2549 = vdwg.mxu0
        %v2551 = vsel %vm828, %v2402, 0
        %2553 = vmatprep.subr.mxu0 0.0
        %2554 = vmatpush1.msra.mxu0 0.0
        %2555 = vmatprep.subr.mxu0 0.0
        %2556 = vmatpush1.msra.mxu0 0.0
        %2557 = vmatprep.subr.mxu0 0.0
        %2558 = vmatpush1.msra.mxu0 0.0
        %2559 = vmatprep.subr.mxu0 0.0
        %2560 = vmatpush1.msra.mxu0 0.0
        %2561 = vmatprep.subr.mxu0 0.0
        %2562 = vmatpush1.msra.mxu0 0.0
        %2563 = vmatprep.subr.mxu0 0.0
        %2564 = vmatpush1.msra.mxu0 0.0
        %2565 = vmatprep.subr.mxu0 0.0
        %2566 = vmatpush1.msra.mxu0 0.0
        %2567 = vmatprep.subr.mxu0 0.0
        %2568 = vmatpush1.msra.mxu0 0.0
        %2569 = vmatprep.subr.mxu0 0.0
        %2570 = vmatpush1.msra.mxu0 0.0
        %2571 = vmatprep.subr.mxu0 0.0
        %2572 = vmatpush1.msra.mxu0 0.0
        %2573 = vmatprep.subr.mxu0 0.0
        %2574 = vmatpush1.msra.mxu0 0.0
        %2575 = vmatprep.subr.mxu0 0.0
        %2576 = vmatpush1.msra.mxu0 0.0
        %2577 = vmatprep.subr.mxu0 0.0
        %2578 = vmatpush1.msra.mxu0 0.0
        %2579 = vmatprep.subr.mxu0 0.0
        %2580 = vmatpush1.msra.mxu0 0.0
        %2581 = vmatprep.subr.mxu0 0.0
        %2582 = vmatpush1.msra.mxu0 0.0
        %2583 = vmatprep.subr.mxu0 0.0
        %2584 = vmatpush1.msra.mxu0 %v2059
        %2585 = vmatprep.subr.mxu0 0.0
        %2586 = vmatpush2.msra.mxu0 0.0
        %2587 = vmatprep.subr.mxu0 0.0
        %2588 = vmatpush2.msra.mxu0 0.0
        %2589 = vmatprep.subr.mxu0 0.0
        %2590 = vmatpush2.msra.mxu0 0.0
        %2591 = vmatprep.subr.mxu0 0.0
        %2592 = vmatpush2.msra.mxu0 0.0
        %2593 = vmatprep.subr.mxu0 0.0
        %2594 = vmatpush2.msra.mxu0 0.0
        %2595 = vmatprep.subr.mxu0 0.0
        %2596 = vmatpush2.msra.mxu0 0.0
        %2597 = vmatprep.subr.mxu0 0.0
        %2598 = vmatpush2.msra.mxu0 0.0
        %2599 = vmatprep.subr.mxu0 0.0
        %2600 = vmatpush2.msra.mxu0 0.0
        %2601 = vmatprep.subr.mxu0 0.0
        %2602 = vmatpush2.msra.mxu0 0.0
        %2603 = vmatprep.subr.mxu0 0.0
        %2604 = vmatpush2.msra.mxu0 0.0
        %2605 = vmatprep.subr.mxu0 0.0
        %2606 = vmatpush2.msra.mxu0 0.0
        %2607 = vmatprep.subr.mxu0 0.0
        %2608 = vmatpush2.msra.mxu0 0.0
        %2609 = vmatprep.subr.mxu0 0.0
        %2610 = vmatpush2.msra.mxu0 0.0
        %2611 = vmatprep.subr.mxu0 0.0
        %2612 = vmatpush2.msra.mxu0 0.0
        %2613 = vmatprep.subr.mxu0 0.0
        %2614 = vmatpush2.msra.mxu0 0.0
        %2615 = vmatprep.subr.mxu0 0.0
        %2616 = vmatpush2.msra.mxu0 0.0
        %2617 = vmatprep.mubr.f32.mxu0 0.0
        %2618 = vmatmul.mubr.f32.gmra.mxu0 %v2551
        %v2619 = vpop.f32.mrf.mxu0
        %v2620 = vadd.f32 0.0, %v2619
        %v2621 = vpop.f32.mrf.mxu0
        %2622 = vdwg.mxu0
        %v2624 = vsel %vm828, %v2403, 0
        %2626 = vmatprep.subr.mxu0 0.0
        %2627 = vmatpush1.msra.mxu0 0.0
        %2628 = vmatprep.subr.mxu0 0.0
        %2629 = vmatpush1.msra.mxu0 0.0
        %2630 = vmatprep.subr.mxu0 0.0
        %2631 = vmatpush1.msra.mxu0 0.0
        %2632 = vmatprep.subr.mxu0 0.0
        %2633 = vmatpush1.msra.mxu0 0.0
        %2634 = vmatprep.subr.mxu0 0.0
        %2635 = vmatpush1.msra.mxu0 0.0
        %2636 = vmatprep.subr.mxu0 0.0
        %2637 = vmatpush1.msra.mxu0 0.0
        %2638 = vmatprep.subr.mxu0 0.0
        %2639 = vmatpush1.msra.mxu0 0.0
        %2640 = vmatprep.subr.mxu0 0.0
        %2641 = vmatpush1.msra.mxu0 0.0
        %2642 = vmatprep.subr.mxu0 0.0
        %2643 = vmatpush1.msra.mxu0 0.0
        %2644 = vmatprep.subr.mxu0 0.0
        %2645 = vmatpush1.msra.mxu0 0.0
        %2646 = vmatprep.subr.mxu0 0.0
        %2647 = vmatpush1.msra.mxu0 0.0
        %2648 = vmatprep.subr.mxu0 0.0
        %2649 = vmatpush1.msra.mxu0 0.0
        %2650 = vmatprep.subr.mxu0 0.0
        %2651 = vmatpush1.msra.mxu0 0.0
        %2652 = vmatprep.subr.mxu0 0.0
        %2653 = vmatpush1.msra.mxu0 0.0
        %2654 = vmatprep.subr.mxu0 0.0
        %2655 = vmatpush1.msra.mxu0 0.0
        %2656 = vmatprep.subr.mxu0 0.0
        %2657 = vmatpush1.msra.mxu0 %v2062
        %2658 = vmatprep.subr.mxu0 0.0
        %2659 = vmatpush2.msra.mxu0 0.0
        %2660 = vmatprep.subr.mxu0 0.0
        %2661 = vmatpush2.msra.mxu0 0.0
        %2662 = vmatprep.subr.mxu0 0.0
        %2663 = vmatpush2.msra.mxu0 0.0
        %2664 = vmatprep.subr.mxu0 0.0
        %2665 = vmatpush2.msra.mxu0 0.0
        %2666 = vmatprep.subr.mxu0 0.0
        %2667 = vmatpush2.msra.mxu0 0.0
        %2668 = vmatprep.subr.mxu0 0.0
        %2669 = vmatpush2.msra.mxu0 0.0
        %2670 = vmatprep.subr.mxu0 0.0
        %2671 = vmatpush2.msra.mxu0 0.0
        %2672 = vmatprep.subr.mxu0 0.0
        %2673 = vmatpush2.msra.mxu0 0.0
        %2674 = vmatprep.subr.mxu0 0.0
        %2675 = vmatpush2.msra.mxu0 0.0
        %2676 = vmatprep.subr.mxu0 0.0
        %2677 = vmatpush2.msra.mxu0 0.0
        %2678 = vmatprep.subr.mxu0 0.0
        %2679 = vmatpush2.msra.mxu0 0.0
        %2680 = vmatprep.subr.mxu0 0.0
        %2681 = vmatpush2.msra.mxu0 0.0
        %2682 = vmatprep.subr.mxu0 0.0
        %2683 = vmatpush2.msra.mxu0 0.0
        %2684 = vmatprep.subr.mxu0 0.0
        %2685 = vmatpush2.msra.mxu0 0.0
        %2686 = vmatprep.subr.mxu0 0.0
        %2687 = vmatpush2.msra.mxu0 0.0
        %2688 = vmatprep.subr.mxu0 0.0
        %2689 = vmatpush2.msra.mxu0 0.0
        %2690 = vmatprep.mubr.f32.mxu0 0.0
        %2691 = vmatmul.mubr.f32.gmra.mxu0 %v2624
        %v2692 = vpop.f32.mrf.mxu0
        %v2693 = vadd.f32 0.0, %v2692
        %v2694 = vpop.f32.mrf.mxu0
        %2695 = vdwg.mxu0
        %v2697 = vsel %vm828, %v2547, 0
        %2699 = vmatprep.subr.mxu0 0.0
        %2700 = vmatpush1.msra.mxu0 0.0
        %2701 = vmatprep.subr.mxu0 0.0
        %2702 = vmatpush1.msra.mxu0 0.0
        %2703 = vmatprep.subr.mxu0 0.0
        %2704 = vmatpush1.msra.mxu0 0.0
        %2705 = vmatprep.subr.mxu0 0.0
        %2706 = vmatpush1.msra.mxu0 0.0
        %2707 = vmatprep.subr.mxu0 0.0
        %2708 = vmatpush1.msra.mxu0 0.0
        %2709 = vmatprep.subr.mxu0 0.0
        %2710 = vmatpush1.msra.mxu0 0.0
        %2711 = vmatprep.subr.mxu0 0.0
        %2712 = vmatpush1.msra.mxu0 0.0
        %2713 = vmatprep.subr.mxu0 0.0
        %2714 = vmatpush1.msra.mxu0 0.0
        %2715 = vmatprep.subr.mxu0 0.0
        %2716 = vmatpush1.msra.mxu0 0.0
        %2717 = vmatprep.subr.mxu0 0.0
        %2718 = vmatpush1.msra.mxu0 0.0
        %2719 = vmatprep.subr.mxu0 0.0
        %2720 = vmatpush1.msra.mxu0 0.0
        %2721 = vmatprep.subr.mxu0 0.0
        %2722 = vmatpush1.msra.mxu0 0.0
        %2723 = vmatprep.subr.mxu0 0.0
        %2724 = vmatpush1.msra.mxu0 0.0
        %2725 = vmatprep.subr.mxu0 0.0
        %2726 = vmatpush1.msra.mxu0 0.0
        %2727 = vmatprep.subr.mxu0 0.0
        %2728 = vmatpush1.msra.mxu0 0.0
        %2729 = vmatprep.subr.mxu0 0.0
        %2730 = vmatpush1.msra.mxu0 %v2037
        %2731 = vmatprep.subr.mxu0 0.0
        %2732 = vmatpush2.msra.mxu0 0.0
        %2733 = vmatprep.subr.mxu0 0.0
        %2734 = vmatpush2.msra.mxu0 0.0
        %2735 = vmatprep.subr.mxu0 0.0
        %2736 = vmatpush2.msra.mxu0 0.0
        %2737 = vmatprep.subr.mxu0 0.0
        %2738 = vmatpush2.msra.mxu0 0.0
        %2739 = vmatprep.subr.mxu0 0.0
        %2740 = vmatpush2.msra.mxu0 0.0
        %2741 = vmatprep.subr.mxu0 0.0
        %2742 = vmatpush2.msra.mxu0 0.0
        %2743 = vmatprep.subr.mxu0 0.0
        %2744 = vmatpush2.msra.mxu0 0.0
        %2745 = vmatprep.subr.mxu0 0.0
        %2746 = vmatpush2.msra.mxu0 0.0
        %2747 = vmatprep.subr.mxu0 0.0
        %2748 = vmatpush2.msra.mxu0 0.0
        %2749 = vmatprep.subr.mxu0 0.0
        %2750 = vmatpush2.msra.mxu0 0.0
        %2751 = vmatprep.subr.mxu0 0.0
        %2752 = vmatpush2.msra.mxu0 0.0
        %2753 = vmatprep.subr.mxu0 0.0
        %2754 = vmatpush2.msra.mxu0 0.0
        %2755 = vmatprep.subr.mxu0 0.0
        %2756 = vmatpush2.msra.mxu0 0.0
        %2757 = vmatprep.subr.mxu0 0.0
        %2758 = vmatpush2.msra.mxu0 0.0
        %2759 = vmatprep.subr.mxu0 0.0
        %2760 = vmatpush2.msra.mxu0 0.0
        %2761 = vmatprep.subr.mxu0 0.0
        %2762 = vmatpush2.msra.mxu0 0.0
        %2763 = vmatprep.mubr.f32.mxu0 0.0
        %2764 = vmatmul.mubr.f32.gmra.mxu0 %v2697
        %v2765 = vpop.f32.mrf.mxu0
        %v2766 = vadd.f32 0.0, %v2765
        %v2767 = vpop.f32.mrf.mxu0
        %2768 = vdwg.mxu0
        %v2770 = vsel %vm828, %v2474, 0
        %2772 = vmatprep.subr.mxu0 0.0
        %2773 = vmatpush1.msra.mxu0 0.0
        %2774 = vmatprep.subr.mxu0 0.0
        %2775 = vmatpush1.msra.mxu0 0.0
        %2776 = vmatprep.subr.mxu0 0.0
        %2777 = vmatpush1.msra.mxu0 0.0
        %2778 = vmatprep.subr.mxu0 0.0
        %2779 = vmatpush1.msra.mxu0 0.0
        %2780 = vmatprep.subr.mxu0 0.0
        %2781 = vmatpush1.msra.mxu0 0.0
        %2782 = vmatprep.subr.mxu0 0.0
        %2783 = vmatpush1.msra.mxu0 0.0
        %2784 = vmatprep.subr.mxu0 0.0
        %2785 = vmatpush1.msra.mxu0 0.0
        %2786 = vmatprep.subr.mxu0 0.0
        %2787 = vmatpush1.msra.mxu0 0.0
        %2788 = vmatprep.subr.mxu0 0.0
        %2789 = vmatpush1.msra.mxu0 0.0
        %2790 = vmatprep.subr.mxu0 0.0
        %2791 = vmatpush1.msra.mxu0 0.0
        %2792 = vmatprep.subr.mxu0 0.0
        %2793 = vmatpush1.msra.mxu0 0.0
        %2794 = vmatprep.subr.mxu0 0.0
        %2795 = vmatpush1.msra.mxu0 0.0
        %2796 = vmatprep.subr.mxu0 0.0
        %2797 = vmatpush1.msra.mxu0 0.0
        %2798 = vmatprep.subr.mxu0 0.0
        %2799 = vmatpush1.msra.mxu0 0.0
        %2800 = vmatprep.subr.mxu0 0.0
        %2801 = vmatpush1.msra.mxu0 0.0
        %2802 = vmatprep.subr.mxu0 0.0
        %2803 = vmatpush1.msra.mxu0 %v2036
        %2804 = vmatprep.subr.mxu0 0.0
        %2805 = vmatpush2.msra.mxu0 0.0
        %2806 = vmatprep.subr.mxu0 0.0
        %2807 = vmatpush2.msra.mxu0 0.0
        %2808 = vmatprep.subr.mxu0 0.0
        %2809 = vmatpush2.msra.mxu0 0.0
        %2810 = vmatprep.subr.mxu0 0.0
        %2811 = vmatpush2.msra.mxu0 0.0
        %2812 = vmatprep.subr.mxu0 0.0
        %2813 = vmatpush2.msra.mxu0 0.0
        %2814 = vmatprep.subr.mxu0 0.0
        %2815 = vmatpush2.msra.mxu0 0.0
        %2816 = vmatprep.subr.mxu0 0.0
        %2817 = vmatpush2.msra.mxu0 0.0
        %2818 = vmatprep.subr.mxu0 0.0
        %2819 = vmatpush2.msra.mxu0 0.0
        %2820 = vmatprep.subr.mxu0 0.0
        %2821 = vmatpush2.msra.mxu0 0.0
        %2822 = vmatprep.subr.mxu0 0.0
        %2823 = vmatpush2.msra.mxu0 0.0
        %2824 = vmatprep.subr.mxu0 0.0
        %2825 = vmatpush2.msra.mxu0 0.0
        %2826 = vmatprep.subr.mxu0 0.0
        %2827 = vmatpush2.msra.mxu0 0.0
        %2828 = vmatprep.subr.mxu0 0.0
        %2829 = vmatpush2.msra.mxu0 0.0
        %2830 = vmatprep.subr.mxu0 0.0
        %2831 = vmatpush2.msra.mxu0 0.0
        %2832 = vmatprep.subr.mxu0 0.0
        %2833 = vmatpush2.msra.mxu0 0.0
        %2834 = vmatprep.subr.mxu0 0.0
        %2835 = vmatpush2.msra.mxu0 0.0
        %2836 = vmatprep.mubr.f32.mxu0 0.0
        %2837 = vmatmul.mubr.f32.gmra.mxu0 %v2770
        %v2838 = vpop.f32.mrf.mxu0
        %v2839 = vadd.f32 %v2766, %v2838
        %v2840 = vpop.f32.mrf.mxu0
        %2841 = vdwg.mxu0
        %v2843 = vsel %vm828, %v2620, 0
        %2845 = vmatprep.subr.mxu0 0.0
        %2846 = vmatpush1.msra.mxu0 0.0
        %2847 = vmatprep.subr.mxu0 0.0
        %2848 = vmatpush1.msra.mxu0 0.0
        %2849 = vmatprep.subr.mxu0 0.0
        %2850 = vmatpush1.msra.mxu0 0.0
        %2851 = vmatprep.subr.mxu0 0.0
        %2852 = vmatpush1.msra.mxu0 0.0
        %2853 = vmatprep.subr.mxu0 0.0
        %2854 = vmatpush1.msra.mxu0 0.0
        %2855 = vmatprep.subr.mxu0 0.0
        %2856 = vmatpush1.msra.mxu0 0.0
        %2857 = vmatprep.subr.mxu0 0.0
        %2858 = vmatpush1.msra.mxu0 0.0
        %2859 = vmatprep.subr.mxu0 0.0
        %2860 = vmatpush1.msra.mxu0 0.0
        %2861 = vmatprep.subr.mxu0 0.0
        %2862 = vmatpush1.msra.mxu0 0.0
        %2863 = vmatprep.subr.mxu0 0.0
        %2864 = vmatpush1.msra.mxu0 0.0
        %2865 = vmatprep.subr.mxu0 0.0
        %2866 = vmatpush1.msra.mxu0 0.0
        %2867 = vmatprep.subr.mxu0 0.0
        %2868 = vmatpush1.msra.mxu0 0.0
        %2869 = vmatprep.subr.mxu0 0.0
        %2870 = vmatpush1.msra.mxu0 0.0
        %2871 = vmatprep.subr.mxu0 0.0
        %2872 = vmatpush1.msra.mxu0 0.0
        %2873 = vmatprep.subr.mxu0 0.0
        %2874 = vmatpush1.msra.mxu0 0.0
        %2875 = vmatprep.subr.mxu0 0.0
        %2876 = vmatpush1.msra.mxu0 %v2038
        %2877 = vmatprep.subr.mxu0 0.0
        %2878 = vmatpush2.msra.mxu0 0.0
        %2879 = vmatprep.subr.mxu0 0.0
        %2880 = vmatpush2.msra.mxu0 0.0
        %2881 = vmatprep.subr.mxu0 0.0
        %2882 = vmatpush2.msra.mxu0 0.0
        %2883 = vmatprep.subr.mxu0 0.0
        %2884 = vmatpush2.msra.mxu0 0.0
        %2885 = vmatprep.subr.mxu0 0.0
        %2886 = vmatpush2.msra.mxu0 0.0
        %2887 = vmatprep.subr.mxu0 0.0
        %2888 = vmatpush2.msra.mxu0 0.0
        %2889 = vmatprep.subr.mxu0 0.0
        %2890 = vmatpush2.msra.mxu0 0.0
        %2891 = vmatprep.subr.mxu0 0.0
        %2892 = vmatpush2.msra.mxu0 0.0
        %2893 = vmatprep.subr.mxu0 0.0
        %2894 = vmatpush2.msra.mxu0 0.0
        %2895 = vmatprep.subr.mxu0 0.0
        %2896 = vmatpush2.msra.mxu0 0.0
        %2897 = vmatprep.subr.mxu0 0.0
        %2898 = vmatpush2.msra.mxu0 0.0
        %2899 = vmatprep.subr.mxu0 0.0
        %2900 = vmatpush2.msra.mxu0 0.0
        %2901 = vmatprep.subr.mxu0 0.0
        %2902 = vmatpush2.msra.mxu0 0.0
        %2903 = vmatprep.subr.mxu0 0.0
        %2904 = vmatpush2.msra.mxu0 0.0
        %2905 = vmatprep.subr.mxu0 0.0
        %2906 = vmatpush2.msra.mxu0 0.0
        %2907 = vmatprep.subr.mxu0 0.0
        %2908 = vmatpush2.msra.mxu0 0.0
        %2909 = vmatprep.mubr.f32.mxu0 0.0
        %2910 = vmatmul.mubr.f32.gmra.mxu0 %v2843
        %v2911 = vpop.f32.mrf.mxu0
        %v2912 = vadd.f32 0.0, %v2911
        %v2913 = vpop.f32.mrf.mxu0
        %2914 = vdwg.mxu0
        %v2915 = vadd.f32 %v2839, %v2912
        %v2917 = vsel %vm828, %v2693, 0
        %2919 = vmatprep.subr.mxu0 0.0
        %2920 = vmatpush1.msra.mxu0 0.0
        %2921 = vmatprep.subr.mxu0 0.0
        %2922 = vmatpush1.msra.mxu0 0.0
        %2923 = vmatprep.subr.mxu0 0.0
        %2924 = vmatpush1.msra.mxu0 0.0
        %2925 = vmatprep.subr.mxu0 0.0
        %2926 = vmatpush1.msra.mxu0 0.0
        %2927 = vmatprep.subr.mxu0 0.0
        %2928 = vmatpush1.msra.mxu0 0.0
        %2929 = vmatprep.subr.mxu0 0.0
        %2930 = vmatpush1.msra.mxu0 0.0
        %2931 = vmatprep.subr.mxu0 0.0
        %2932 = vmatpush1.msra.mxu0 0.0
        %2933 = vmatprep.subr.mxu0 0.0
        %2934 = vmatpush1.msra.mxu0 0.0
        %2935 = vmatprep.subr.mxu0 0.0
        %2936 = vmatpush1.msra.mxu0 0.0
        %2937 = vmatprep.subr.mxu0 0.0
        %2938 = vmatpush1.msra.mxu0 0.0
        %2939 = vmatprep.subr.mxu0 0.0
        %2940 = vmatpush1.msra.mxu0 0.0
        %2941 = vmatprep.subr.mxu0 0.0
        %2942 = vmatpush1.msra.mxu0 0.0
        %2943 = vmatprep.subr.mxu0 0.0
        %2944 = vmatpush1.msra.mxu0 0.0
        %2945 = vmatprep.subr.mxu0 0.0
        %2946 = vmatpush1.msra.mxu0 0.0
        %2947 = vmatprep.subr.mxu0 0.0
        %2948 = vmatpush1.msra.mxu0 0.0
        %2949 = vmatprep.subr.mxu0 0.0
        %2950 = vmatpush1.msra.mxu0 %v2039
        %2951 = vmatprep.subr.mxu0 0.0
        %2952 = vmatpush2.msra.mxu0 0.0
        %2953 = vmatprep.subr.mxu0 0.0
        %2954 = vmatpush2.msra.mxu0 0.0
        %2955 = vmatprep.subr.mxu0 0.0
        %2956 = vmatpush2.msra.mxu0 0.0
        %2957 = vmatprep.subr.mxu0 0.0
        %2958 = vmatpush2.msra.mxu0 0.0
        %2959 = vmatprep.subr.mxu0 0.0
        %2960 = vmatpush2.msra.mxu0 0.0
        %2961 = vmatprep.subr.mxu0 0.0
        %2962 = vmatpush2.msra.mxu0 0.0
        %2963 = vmatprep.subr.mxu0 0.0
        %2964 = vmatpush2.msra.mxu0 0.0
        %2965 = vmatprep.subr.mxu0 0.0
        %2966 = vmatpush2.msra.mxu0 0.0
        %2967 = vmatprep.subr.mxu0 0.0
        %2968 = vmatpush2.msra.mxu0 0.0
        %2969 = vmatprep.subr.mxu0 0.0
        %2970 = vmatpush2.msra.mxu0 0.0
        %2971 = vmatprep.subr.mxu0 0.0
        %2972 = vmatpush2.msra.mxu0 0.0
        %2973 = vmatprep.subr.mxu0 0.0
        %2974 = vmatpush2.msra.mxu0 0.0
        %2975 = vmatprep.subr.mxu0 0.0
        %2976 = vmatpush2.msra.mxu0 0.0
        %2977 = vmatprep.subr.mxu0 0.0
        %2978 = vmatpush2.msra.mxu0 0.0
        %2979 = vmatprep.subr.mxu0 0.0
        %2980 = vmatpush2.msra.mxu0 0.0
        %2981 = vmatprep.subr.mxu0 0.0
        %2982 = vmatpush2.msra.mxu0 0.0
        %2983 = vmatprep.mubr.f32.mxu0 0.0
        %2984 = vmatmul.mubr.f32.gmra.mxu0 %v2917
        %v2985 = vpop.f32.mrf.mxu0
        %v2986 = vadd.f32 0.0, %v2985
        %v2987 = vpop.f32.mrf.mxu0
        %2988 = vdwg.mxu0
        %v2989 = vadd.f32 %v2915, %v2986
        %v2990 = vld [vmem:[%s547 + $0x7] sm:$0x1]
        %v2991 = vlaneseq
        %v2992 = vshrl.u32 %v2991, 7
        %v2993 = vsub.s32 0, %v2992
        %v2994 = vrot.slane %v2990, %v2993
        %v2995 = vadd.f32 %v2989, %v2994
        %v2996 = vadd.f32 %v2995, %v1787
        %v2997 = vld [vmem:[%s547 + $0xa] sm:$0x1]
        %v2998 = vld [vmem:[%s547 + $0xd] sm:$0x1]
        %v2999 = vsel %vm566, %v2996, 0.0
        %3000 = vadd.xlane.f32.xlu0 %v2999
        %v3001 = vpop.xlane.xlu0 %3000
        %v3002 = vmul.f32 %v3001, %v1767
        %v3003 = vsub.f32 %v2996, %v3002
        %v3004 = vmul.f32 %v3003, %v3003
        %v3005 = vsel %vm566, %v3004, 0.0
        %3006 = vadd.xlane.f32.xlu0 %v3005
        %v3007 = vpop.xlane.xlu0 %3006
        %v3008 = vmul.f32 %v3007, %v1767
        %v3009 = vadd.f32 %v3008, 1e-05
        %v3010 = vrsqrt.pop %v3009
        %v3011 = vmul.f32 %v3003, %v3010
        %v3012 = vlaneseq
        %v3013 = vshrl.u32 %v3012, 7
        %v3014 = vsub.s32 0, %v3013
        %v3015 = vrot.slane %v2997, %v3014
        %v3016 = vmul.f32 %v3011, %v3015
        %v3017 = vlaneseq
        %v3018 = vshrl.u32 %v3017, 7
        %v3019 = vsub.s32 0, %v3018
        %v3020 = vrot.slane %v2998, %v3019
        %v3021 = vadd.f32 %v3016, %v3020
        %v3022 = vld [vmem:[%s537] sm:$0xff]
        %v3023 = vld [vmem:[%s537 + $0x8] sm:$0xff]
        %v3024 = vld [vmem:[%s537 + $0x10] sm:$0xff]
        %v3025 = vld [vmem:[%s537 + $0x18] sm:$0xff]
        %v3026 = vld [vmem:[%s459] sm:$0x1]
        %v3028 = vlaneseq
        %v3029 = vshrl.u32 %v3028, 7
        %v3030 = vsub.s32 0, %v3029
        %v3031 = vrot.slane %v3026, %v3030
        %v3034 = vsel %vm566, %v3021, 0
        %3036 = vmatprep.subr.mxu0 0.0
        %3037 = vmatpush1.msra.mxu0 0.0
        %3038 = vmatprep.subr.mxu0 0.0
        %3039 = vmatpush1.msra.mxu0 0.0
        %3040 = vmatprep.subr.mxu0 0.0
        %3041 = vmatpush1.msra.mxu0 0.0
        %3042 = vmatprep.subr.mxu0 0.0
        %3043 = vmatpush1.msra.mxu0 0.0
        %3044 = vmatprep.subr.mxu0 0.0
        %3045 = vmatpush1.msra.mxu0 0.0
        %3046 = vmatprep.subr.mxu0 0.0
        %3047 = vmatpush1.msra.mxu0 0.0
        %3048 = vmatprep.subr.mxu0 0.0
        %3049 = vmatpush1.msra.mxu0 0.0
        %3050 = vmatprep.subr.mxu0 0.0
        %3051 = vmatpush1.msra.mxu0 0.0
        %3052 = vmatprep.subr.mxu0 0.0
        %3053 = vmatpush1.msra.mxu0 0.0
        %3054 = vmatprep.subr.mxu0 0.0
        %3055 = vmatpush1.msra.mxu0 0.0
        %3056 = vmatprep.subr.mxu0 0.0
        %3057 = vmatpush1.msra.mxu0 0.0
        %3058 = vmatprep.subr.mxu0 0.0
        %3059 = vmatpush1.msra.mxu0 0.0
        %3060 = vmatprep.subr.mxu0 0.0
        %3061 = vmatpush1.msra.mxu0 %v3025
        %3062 = vmatprep.subr.mxu0 0.0
        %3063 = vmatpush1.msra.mxu0 %v3024
        %3064 = vmatprep.subr.mxu0 0.0
        %3065 = vmatpush1.msra.mxu0 %v3023
        %3066 = vmatprep.subr.mxu0 0.0
        %3067 = vmatpush1.msra.mxu0 %v3022
        %3068 = vmatprep.subr.mxu0 0.0
        %3069 = vmatpush2.msra.mxu0 0.0
        %3070 = vmatprep.subr.mxu0 0.0
        %3071 = vmatpush2.msra.mxu0 0.0
        %3072 = vmatprep.subr.mxu0 0.0
        %3073 = vmatpush2.msra.mxu0 0.0
        %3074 = vmatprep.subr.mxu0 0.0
        %3075 = vmatpush2.msra.mxu0 0.0
        %3076 = vmatprep.subr.mxu0 0.0
        %3077 = vmatpush2.msra.mxu0 0.0
        %3078 = vmatprep.subr.mxu0 0.0
        %3079 = vmatpush2.msra.mxu0 0.0
        %3080 = vmatprep.subr.mxu0 0.0
        %3081 = vmatpush2.msra.mxu0 0.0
        %3082 = vmatprep.subr.mxu0 0.0
        %3083 = vmatpush2.msra.mxu0 0.0
        %3084 = vmatprep.subr.mxu0 0.0
        %3085 = vmatpush2.msra.mxu0 0.0
        %3086 = vmatprep.subr.mxu0 0.0
        %3087 = vmatpush2.msra.mxu0 0.0
        %3088 = vmatprep.subr.mxu0 0.0
        %3089 = vmatpush2.msra.mxu0 0.0
        %3090 = vmatprep.subr.mxu0 0.0
        %3091 = vmatpush2.msra.mxu0 0.0
        %3092 = vmatprep.subr.mxu0 0.0
        %3093 = vmatpush2.msra.mxu0 0.0
        %3094 = vmatprep.subr.mxu0 0.0
        %3095 = vmatpush2.msra.mxu0 0.0
        %3096 = vmatprep.subr.mxu0 0.0
        %3097 = vmatpush2.msra.mxu0 0.0
        %3098 = vmatprep.subr.mxu0 0.0
        %3099 = vmatpush2.msra.mxu0 0.0
        %3100 = vmatprep.mubr.f32.mxu0 0.0
        %3101 = vmatmul.mubr.f32.gmra.mxu0 %v3034
        %v3102 = vpop.f32.mrf.mxu0
        %v3103 = vadd.f32 %v3031, %v3102
        %v3104 = vpop.f32.mrf.mxu0
        %3105 = vdwg.mxu0
        %v3106 = vmax.f32 %v3103, 0.0
        %v3107 = vld [vmem:[%s542] sm:$0xff]
        %v3108 = vld [vmem:[%s542 + $0x8] sm:$0xff]
        %v3109 = vld [vmem:[%s542 + $0x10] sm:$0xff]
        %v3110 = vld [vmem:[%s542 + $0x18] sm:$0xff]
        %v3111 = vld [vmem:[%s542 + $0x20] sm:$0xff]
        %v3112 = vld [vmem:[%s542 + $0x28] sm:$0xff]
        %v3113 = vld [vmem:[%s542 + $0x30] sm:$0xff]
        %v3114 = vld [vmem:[%s542 + $0x38] sm:$0xff]
        %v3115 = vld [vmem:[%s547 + $0x8] sm:$0x1]
        %v3116 = vlaneseq
        %v3117 = vshrl.u32 %v3116, 7
        %v3118 = vsub.s32 0, %v3117
        %v3119 = vrot.slane %v3115, %v3118
        %vm3120 = vcmask 523264
        %v3122 = vsel %vm3120, %v3106, 0
        %3124 = vmatprep.subr.mxu0 0.0
        %3125 = vmatpush1.msra.mxu0 0.0
        %3126 = vmatprep.subr.mxu0 0.0
        %3127 = vmatpush1.msra.mxu0 0.0
        %3128 = vmatprep.subr.mxu0 0.0
        %3129 = vmatpush1.msra.mxu0 0.0
        %3130 = vmatprep.subr.mxu0 0.0
        %3131 = vmatpush1.msra.mxu0 0.0
        %3132 = vmatprep.subr.mxu0 0.0
        %3133 = vmatpush1.msra.mxu0 0.0
        %3134 = vmatprep.subr.mxu0 0.0
        %3135 = vmatpush1.msra.mxu0 0.0
        %3136 = vmatprep.subr.mxu0 0.0
        %3137 = vmatpush1.msra.mxu0 0.0
        %3138 = vmatprep.subr.mxu0 0.0
        %3139 = vmatpush1.msra.mxu0 0.0
        %3140 = vmatprep.subr.mxu0 0.0
        %3141 = vmatpush1.msra.mxu0 %v3114
        %3142 = vmatprep.subr.mxu0 0.0
        %3143 = vmatpush1.msra.mxu0 %v3113
        %3144 = vmatprep.subr.mxu0 0.0
        %3145 = vmatpush1.msra.mxu0 %v3112
        %3146 = vmatprep.subr.mxu0 0.0
        %3147 = vmatpush1.msra.mxu0 %v3111
        %3148 = vmatprep.subr.mxu0 0.0
        %3149 = vmatpush1.msra.mxu0 %v3110
        %3150 = vmatprep.subr.mxu0 0.0
        %3151 = vmatpush1.msra.mxu0 %v3109
        %3152 = vmatprep.subr.mxu0 0.0
        %3153 = vmatpush1.msra.mxu0 %v3108
        %3154 = vmatprep.subr.mxu0 0.0
        %3155 = vmatpush1.msra.mxu0 %v3107
        %3156 = vmatprep.subr.mxu0 0.0
        %3157 = vmatpush2.msra.mxu0 0.0
        %3158 = vmatprep.subr.mxu0 0.0
        %3159 = vmatpush2.msra.mxu0 0.0
        %3160 = vmatprep.subr.mxu0 0.0
        %3161 = vmatpush2.msra.mxu0 0.0
        %3162 = vmatprep.subr.mxu0 0.0
        %3163 = vmatpush2.msra.mxu0 0.0
        %3164 = vmatprep.subr.mxu0 0.0
        %3165 = vmatpush2.msra.mxu0 0.0
        %3166 = vmatprep.subr.mxu0 0.0
        %3167 = vmatpush2.msra.mxu0 0.0
        %3168 = vmatprep.subr.mxu0 0.0
        %3169 = vmatpush2.msra.mxu0 0.0
        %3170 = vmatprep.subr.mxu0 0.0
        %3171 = vmatpush2.msra.mxu0 0.0
        %3172 = vmatprep.subr.mxu0 0.0
        %3173 = vmatpush2.msra.mxu0 0.0
        %3174 = vmatprep.subr.mxu0 0.0
        %3175 = vmatpush2.msra.mxu0 0.0
        %3176 = vmatprep.subr.mxu0 0.0
        %3177 = vmatpush2.msra.mxu0 0.0
        %3178 = vmatprep.subr.mxu0 0.0
        %3179 = vmatpush2.msra.mxu0 0.0
        %3180 = vmatprep.subr.mxu0 0.0
        %3181 = vmatpush2.msra.mxu0 0.0
        %3182 = vmatprep.subr.mxu0 0.0
        %3183 = vmatpush2.msra.mxu0 0.0
        %3184 = vmatprep.subr.mxu0 0.0
        %3185 = vmatpush2.msra.mxu0 0.0
        %3186 = vmatprep.subr.mxu0 0.0
        %3187 = vmatpush2.msra.mxu0 0.0
        %3188 = vmatprep.mubr.f32.mxu0 0.0
        %3189 = vmatmul.mubr.f32.gmra.mxu0 %v3122
        %v3190 = vpop.f32.mrf.mxu0
        %v3191 = vadd.f32 %v3119, %v3190
        %v3192 = vpop.f32.mrf.mxu0
        %3193 = vdwg.mxu0
        %v3194 = vadd.f32 %v3191, %v3021
        %v3195 = vld [vmem:[%s547 + $0xb] sm:$0x1]
        %v3196 = vld [vmem:[%s547 + $0xe] sm:$0x1]
        %v3197 = vsel %vm566, %v3194, 0.0
        %3198 = vadd.xlane.f32.xlu0 %v3197
        %v3199 = vpop.xlane.xlu0 %3198
        %v3200 = vmul.f32 %v3199, %v1767
        %v3201 = vsub.f32 %v3194, %v3200
        %v3202 = vmul.f32 %v3201, %v3201
        %v3203 = vsel %vm566, %v3202, 0.0
        %3204 = vadd.xlane.f32.xlu0 %v3203
        %v3205 = vpop.xlane.xlu0 %3204
        %v3206 = vmul.f32 %v3205, %v1767
        %v3207 = vadd.f32 %v3206, 1e-05
        %v3208 = vrsqrt.pop %v3207
        %v3209 = vmul.f32 %v3201, %v3208
        %v3210 = vlaneseq
        %v3211 = vshrl.u32 %v3210, 7
        %v3212 = vsub.s32 0, %v3211
        %v3213 = vrot.slane %v3195, %v3212
        %v3214 = vmul.f32 %v3209, %v3213
        %v3215 = vlaneseq
        %v3216 = vshrl.u32 %v3215, 7
        %v3217 = vsub.s32 0, %v3216
        %v3218 = vrot.slane %v3196, %v3217
        %v3219 = vadd.f32 %v3214, %v3218
        %3220 = vst.msk [vmem:[#allocation2] sm:$0xff] %vm566, %v3219
        %p3221 = scmp.eq.s32.totalorder %s37, 1
        // Predicated region
        $region77: #{tpu_custom_call.1} parent=55 // pred_check
          %p3222 = pneg %p3221
        $region78: #{tpu_custom_call.1} parent=55 // pred_check_branch
          %3224 = sbr.rel (%p3222) target = $region80
        $region79: #{tpu_custom_call.1} parent=55 // pred_region
          %3225 = vst.msk [vmem:[%s527] sm:$0xff] %vm566, %v3219
        $region80: #{tpu_custom_call.1} parent=55 // pred_fallthru
          _
        %s3226 = sand.u32 %s281, 1
        %s3227 = scalar_lea.sflag [#allocation5], %s3226
        %s3228 = sand.u32 %s281, 1
        %s3229 = smul.addr %s3228, 8
        %s3230 = scalar_lea.vmem [#allocation11], %s3229
        // Predicated region
        $region81: #{tpu_custom_call.1} parent=55 // pred_check
          %p3231 = pneg %p291
        $region82: #{tpu_custom_call.1} parent=55 // pred_check_branch
          %3233 = sbr.rel (%p3231) target = $region84
        $region83: #{tpu_custom_call.1} parent=55 // pred_region
          %s3235 = ssub.s32 128, 128
          %3236 = vsyncadd %s3227, %s3235
          %s3237 = smul.addr %s36, 128
          %s3238 = scalar_lea.hbm %s9, %s3237
          %s3240 = sshll.u32 %s3230, 4
          %s3241 = int_to_ptr.vmem [resolvable:$true] %s3240
          %3243 = dma.vmem_to_hbm [thread:$0]  %s3241, 128, %s3238, %s3227
        $region84: #{tpu_custom_call.1} parent=55 // pred_fallthru
          _
      $region56: #{tpu_custom_call.1} parent=5 // pred_fallthru
        _
      %p3244 = scmp.le.s32.totalorder 2, %s27
      // Predicated region
      $region85: #{tpu_custom_call.1} parent=5 // pred_check
        %p3245 = pneg %p3244
      $region86: #{tpu_custom_call.1} parent=5 // pred_check_branch
        %3247 = sbr.rel (%p3245) target = $region88
      $region87: #{tpu_custom_call.1} parent=5 // pred_region
        %s3248 = ssub.s32 %s27, 2
        // Predicated region
        $region89: #{tpu_custom_call.1} parent=87 // pred_check
          %p3249 = pneg %p297
        $region90: #{tpu_custom_call.1} parent=87 // pred_check_branch
          %3251 = sbr.rel (%p3249) target = $region92
        $region91: #{tpu_custom_call.1} parent=87 // pred_region
          %s3252 = sand.u32 %s282, 1
          %s3253 = scalar_lea.sflag [#allocation5], %s3252
          %s3254 = sand.u32 %s282, 1
          %s3255 = smul.addr %s3254, 8
          %s3256 = scalar_lea.vmem [#allocation11], %s3255
          %3257 = dma.done %s3253, 128
        $region92: #{tpu_custom_call.1} parent=87 // pred_fallthru
          _
      $region88: #{tpu_custom_call.1} parent=5 // pred_fallthru
        _
    $region6: #{tpu_custom_call.1} parent=1 // loop_footer
      %s31 = sadd.s32 1, %s27
    $region7: #{tpu_custom_call.1} parent=1 // loop_footer_branch
      %26 = sbr.rel target = $region3
    $region8: #{tpu_custom_call.1} parent=1 // loop_exit
      _
    %3258 = vsyncpa [#allocation4], 1
    %s3259 = scalar_lea.sflag [#allocation4], 1
    %3260 = vsyncpa %s3259, 1
    %3261 = vsyncpa [#allocation7], 1
    %s3262 = scalar_lea.sflag [#allocation7], 1
    %3263 = vsyncpa %s3262, 1
    %3264 = vsyncpa [#allocation10], 1
    %s3265 = scalar_lea.sflag [#allocation10], 1
    %3266 = vsyncpa %s3265, 1
    %3267 = vsyncpa [#allocation5], 1
    %s3268 = scalar_lea.sflag [#allocation5], 1
    %3269 = vsyncpa %s3268, 1

</llo_original>
